<compile_context>
chip_gen: v5e
topology: v5e:2x2
jax: 0.10.0
libtpu: 0.0.40
codegen_flags: <defaults>
</compile_context>

<pallas_src>
import functools

import jax
import jax.numpy as jnp
from jax.experimental import pallas as pl
from jax.experimental.pallas import tpu as pltpu


# ----------------------------- hyperparameters ------------------------------
class hp:
    hidden_dim = 32
    temporal_rate = 8
    n_features = 16


IMG_SHAPE = (1, hp.temporal_rate, hp.n_features)          # (C, T, F)
IMG_PROD = 1 * hp.temporal_rate * hp.n_features            # 128

_DIMS = [(hp.hidden_dim, 128), (128, 256), (256, 512), (512, 1024),
         (1024, IMG_PROD)]
_BN_LAYERS = (1, 2, 3)      # layers followed by BatchNorm1d
_BN_EPS = 0.8               # nn.BatchNorm1d(out_feat, 0.8) -> eps=0.8


# --------------------------------- kernel -----------------------------------
def _generator_fused_kernel(z_ref,
                            w0, b0,
                            w1, b1, g1, be1,
                            w2, b2, g2, be2,
                            w3, b3, g3, be3,
                            w4, b4,
                            o_ref, *, eps):
    """Fused 5-layer MLP generator forward, all activations resident in VMEM."""

    def linear(x_f32, w_ref, b_ref):
        # MXU operands in bf16 (weight storage dtype), f32 accumulation.
        y = jnp.dot(x_f32.astype(w_ref.dtype), w_ref[...],
                    preferred_element_type=jnp.float32)
        return y + b_ref[...]

    def lrelu(y):
        # LeakyReLU(0.2): max(y, 0.2*y) is exact for positive slope < 1.
        return jnp.maximum(y, 0.2 * y)

    def bn(y, g_ref, be_ref):
        # BatchNorm1d training-mode: batch stats over axis 0, biased variance.
        mean = jnp.mean(y, axis=0, keepdims=True)
        var = jnp.mean(jnp.square(y - mean), axis=0, keepdims=True)
        yhat = (y - mean) * jax.lax.rsqrt(var + eps)
        return yhat * g_ref[...] + be_ref[...]

    h = lrelu(linear(z_ref[...], w0, b0))                     # block(hidden, 128)
    h = lrelu(bn(linear(h, w1, b1), g1, be1))                 # block(128, 256)
    h = lrelu(bn(linear(h, w2, b2), g2, be2))                 # block(256, 512)
    h = lrelu(bn(linear(h, w3, b3), g3, be3))                 # block(512, 1024)
    y = jnp.tanh(linear(h, w4, b4))                           # Linear(1024,128)+Tanh
    o_ref[...] = y.astype(o_ref.dtype)


# ------------------------------ parameter init ------------------------------
def _init_linear(key, in_feat, out_feat):
    """PyTorch nn.Linear default init: U(-1/sqrt(in), 1/sqrt(in))."""
    kw, kb = jax.random.split(key)
    bound = 1.0 / jnp.sqrt(jnp.float32(in_feat))
    # Stored pre-transposed as (in, out) so the kernel does x @ W.
    # Weights in bf16 (MXU operand dtype, half the HBM traffic); bias in f32.
    w = jax.random.uniform(kw, (in_feat, out_feat), jnp.float32, -bound, bound)
    b = jax.random.uniform(kb, (1, out_feat), jnp.float32, -bound, bound)
    return w.astype(jnp.bfloat16), b


def init_generator_params(key):
    ks = jax.random.split(key, len(_DIMS))
    params = {}
    for i, (din, dout) in enumerate(_DIMS):
        w, b = _init_linear(ks[i], din, dout)
        params[f"w{i}"] = w
        params[f"b{i}"] = b
    # BatchNorm1d affine params (gamma=1, beta=0) for blocks 1..3, kept in f32.
    for i in _BN_LAYERS:
        dout = _DIMS[i][1]
        params[f"gamma{i}"] = jnp.ones((1, dout), jnp.float32)
        params[f"beta{i}"] = jnp.zeros((1, dout), jnp.float32)
    return params


# -------------------------------- forward -----------------------------------
def generator_forward(params, z):
    B = z.shape[0]

    # Advisory cost hint for the XLA scheduler.
    total_kn = sum(din * dout for din, dout in _DIMS)
    flops = 2 * B * total_kn
    bytes_accessed = (
        total_kn * 2                                      # bf16 weights
        + sum(dout for _, dout in _DIMS) * 4              # f32 biases
        + sum(_DIMS[i][1] for i in _BN_LAYERS) * 2 * 4    # gamma/beta
        + (z.size + B * IMG_PROD) * 4                     # z in, img out (f32)
    )
    transcendentals = B * IMG_PROD + sum(_DIMS[i][1] for i in _BN_LAYERS)

    args = [
        z,
        params["w0"], params["b0"],
        params["w1"], params["b1"], params["gamma1"], params["beta1"],
        params["w2"], params["b2"], params["gamma2"], params["beta2"],
        params["w3"], params["b3"], params["gamma3"], params["beta3"],
        params["w4"], params["b4"],
    ]

    vmem_spec = pl.BlockSpec(memory_space=pltpu.MemorySpace.VMEM)
    img = pl.pallas_call(
        functools.partial(_generator_fused_kernel, eps=_BN_EPS),
        out_shape=jax.ShapeDtypeStruct((B, IMG_PROD), jnp.float32),
        in_specs=[vmem_spec] * len(args),
        out_specs=vmem_spec,
        cost_estimate=pl.CostEstimate(
            flops=flops,
            transcendentals=transcendentals,
            bytes_accessed=bytes_accessed,
        ),
    )(*args)

    # img.view(B, 1, temporal_rate, n_features)
    return img.reshape(B, *IMG_SHAPE)


# --------------------------------- main --------------------------------------
if __name__ == "__main__":
    key = jax.random.PRNGKey(0)
    kp, kz = jax.random.split(key)

    params = init_generator_params(kp)
    batch = 2   # TODO(synk): real throughput requires batching many z per call;
                # at B=2 the MXU is <1% utilized and the run is DMA/launch bound.
    z = jax.random.normal(kz, (batch, hp.hidden_dim), dtype=jnp.float32)

    img = jax.jit(generator_forward)(params, z)
    img = jax.block_until_ready(img)

    assert img.shape == (batch, 1, hp.temporal_rate, hp.n_features), img.shape
    assert img.dtype == jnp.float32
    assert bool(jnp.all(jnp.isfinite(img)))
    assert bool(jnp.all(jnp.abs(img) <= 1.0))  # tanh range

    print("KERNEL_OK")
</pallas_src>

<mosaic_0001>
module attributes {stable_mosaic.version = 11 : i64} {
  func.func @_generator_fused_kernel(%arg0: memref<2x32xf32, #tpu.memory_space<vmem>>, %arg1: memref<32x128xbf16, #tpu.memory_space<vmem>>, %arg2: memref<1x128xf32, #tpu.memory_space<vmem>>, %arg3: memref<128x256xbf16, #tpu.memory_space<vmem>>, %arg4: memref<1x256xf32, #tpu.memory_space<vmem>>, %arg5: memref<1x256xf32, #tpu.memory_space<vmem>>, %arg6: memref<1x256xf32, #tpu.memory_space<vmem>>, %arg7: memref<256x512xbf16, #tpu.memory_space<vmem>>, %arg8: memref<1x512xf32, #tpu.memory_space<vmem>>, %arg9: memref<1x512xf32, #tpu.memory_space<vmem>>, %arg10: memref<1x512xf32, #tpu.memory_space<vmem>>, %arg11: memref<512x1024xbf16, #tpu.memory_space<vmem>>, %arg12: memref<1x1024xf32, #tpu.memory_space<vmem>>, %arg13: memref<1x1024xf32, #tpu.memory_space<vmem>>, %arg14: memref<1x1024xf32, #tpu.memory_space<vmem>>, %arg15: memref<1024x128xbf16, #tpu.memory_space<vmem>>, %arg16: memref<1x128xf32, #tpu.memory_space<vmem>>, %arg17: memref<2x128xf32, #tpu.memory_space<vmem>>) attributes {dimension_semantics = [], scalar_prefetch = 0 : i64, scratch_operands = 0 : i64, tpu.core_type = #tpu.core_type<tc>} {
    %c0 = arith.constant 0 : index
    %c0_0 = arith.constant 0 : index
    %0 = vector.load %arg0[%c0, %c0_0] : memref<2x32xf32, #tpu.memory_space<vmem>>, vector<2x32xf32>
    %1 = arith.truncf %0 : vector<2x32xf32> to vector<2x32xbf16>
    %c0_1 = arith.constant 0 : index
    %c0_2 = arith.constant 0 : index
    %2 = vector.load %arg1[%c0_1, %c0_2] : memref<32x128xbf16, #tpu.memory_space<vmem>>, vector<32x128xbf16>
    %cst = arith.constant dense<0.000000e+00> : vector<2x128xf32>
    %3 = tpu.matmul %1, %2, %cst {dimension_numbers = #tpu.dot_dimension_numbers<[1], [0], [0], [1], [0, 0, 1, 1], [], []>} : vector<2x32xbf16>, vector<32x128xbf16>, vector<2x128xf32> -> vector<2x128xf32>
    %c0_3 = arith.constant 0 : index
    %c0_4 = arith.constant 0 : index
    %4 = vector.load %arg2[%c0_3, %c0_4] : memref<1x128xf32, #tpu.memory_space<vmem>>, vector<1x128xf32>
    %5 = vector.broadcast %4 : vector<1x128xf32> to vector<2x128xf32>
    %6 = arith.addf %3, %5 : vector<2x128xf32>
    %cst_5 = arith.constant 2.000000e-01 : f32
    %7 = vector.broadcast %cst_5 : f32 to vector<2x128xf32>
    %8 = arith.mulf %7, %6 : vector<2x128xf32>
    %9 = arith.maximumf %6, %8 : vector<2x128xf32>
    %10 = arith.truncf %9 : vector<2x128xf32> to vector<2x128xbf16>
    %c0_6 = arith.constant 0 : index
    %c0_7 = arith.constant 0 : index
    %11 = vector.load %arg3[%c0_6, %c0_7] : memref<128x256xbf16, #tpu.memory_space<vmem>>, vector<128x256xbf16>
    %cst_8 = arith.constant dense<0.000000e+00> : vector<2x256xf32>
    %12 = tpu.matmul %10, %11, %cst_8 {dimension_numbers = #tpu.dot_dimension_numbers<[1], [0], [0], [1], [0, 0, 1, 1], [], []>} : vector<2x128xbf16>, vector<128x256xbf16>, vector<2x256xf32> -> vector<2x256xf32>
    %c0_9 = arith.constant 0 : index
    %c0_10 = arith.constant 0 : index
    %13 = vector.load %arg4[%c0_9, %c0_10] : memref<1x256xf32, #tpu.memory_space<vmem>>, vector<1x256xf32>
    %14 = vector.broadcast %13 : vector<1x256xf32> to vector<2x256xf32>
    %15 = arith.addf %12, %14 : vector<2x256xf32>
    %cst_11 = arith.constant dense<0.000000e+00> : vector<256xf32>
    %16 = vector.multi_reduction <add>, %15, %cst_11 [0] : vector<2x256xf32> to vector<256xf32>
    %17 = vector.shape_cast %16 : vector<256xf32> to vector<1x256xf32>
    %cst_12 = arith.constant 2.000000e+00 : f32
    %18 = vector.broadcast %cst_12 : f32 to vector<1x256xf32>
    %19 = arith.divf %17, %18 : vector<1x256xf32>
    %20 = vector.broadcast %19 : vector<1x256xf32> to vector<2x256xf32>
    %21 = arith.subf %15, %20 : vector<2x256xf32>
    %22 = arith.mulf %21, %21 : vector<2x256xf32>
    %cst_13 = arith.constant dense<0.000000e+00> : vector<256xf32>
    %23 = vector.multi_reduction <add>, %22, %cst_13 [0] : vector<2x256xf32> to vector<256xf32>
    %24 = vector.shape_cast %23 : vector<256xf32> to vector<1x256xf32>
    %cst_14 = arith.constant 2.000000e+00 : f32
    %25 = vector.broadcast %cst_14 : f32 to vector<1x256xf32>
    %26 = arith.divf %24, %25 : vector<1x256xf32>
    %27 = vector.broadcast %19 : vector<1x256xf32> to vector<2x256xf32>
    %28 = arith.subf %15, %27 : vector<2x256xf32>
    %cst_15 = arith.constant 8.000000e-01 : f32
    %29 = vector.broadcast %cst_15 : f32 to vector<1x256xf32>
    %30 = arith.addf %26, %29 : vector<1x256xf32>
    %31 = math.rsqrt %30 : vector<1x256xf32>
    %32 = vector.broadcast %31 : vector<1x256xf32> to vector<2x256xf32>
    %33 = arith.mulf %28, %32 : vector<2x256xf32>
    %c0_16 = arith.constant 0 : index
    %c0_17 = arith.constant 0 : index
    %34 = vector.load %arg5[%c0_16, %c0_17] : memref<1x256xf32, #tpu.memory_space<vmem>>, vector<1x256xf32>
    %35 = vector.broadcast %34 : vector<1x256xf32> to vector<2x256xf32>
    %36 = arith.mulf %33, %35 : vector<2x256xf32>
    %c0_18 = arith.constant 0 : index
    %c0_19 = arith.constant 0 : index
    %37 = vector.load %arg6[%c0_18, %c0_19] : memref<1x256xf32, #tpu.memory_space<vmem>>, vector<1x256xf32>
    %38 = vector.broadcast %37 : vector<1x256xf32> to vector<2x256xf32>
    %39 = arith.addf %36, %38 : vector<2x256xf32>
    %cst_20 = arith.constant 2.000000e-01 : f32
    %40 = vector.broadcast %cst_20 : f32 to vector<2x256xf32>
    %41 = arith.mulf %40, %39 : vector<2x256xf32>
    %42 = arith.maximumf %39, %41 : vector<2x256xf32>
    %43 = arith.truncf %42 : vector<2x256xf32> to vector<2x256xbf16>
    %c0_21 = arith.constant 0 : index
    %c0_22 = arith.constant 0 : index
    %44 = vector.load %arg7[%c0_21, %c0_22] : memref<256x512xbf16, #tpu.memory_space<vmem>>, vector<256x512xbf16>
    %cst_23 = arith.constant dense<0.000000e+00> : vector<2x512xf32>
    %45 = tpu.matmul %43, %44, %cst_23 {dimension_numbers = #tpu.dot_dimension_numbers<[1], [0], [0], [1], [0, 0, 1, 1], [], []>} : vector<2x256xbf16>, vector<256x512xbf16>, vector<2x512xf32> -> vector<2x512xf32>
    %c0_24 = arith.constant 0 : index
    %c0_25 = arith.constant 0 : index
    %46 = vector.load %arg8[%c0_24, %c0_25] : memref<1x512xf32, #tpu.memory_space<vmem>>, vector<1x512xf32>
    %47 = vector.broadcast %46 : vector<1x512xf32> to vector<2x512xf32>
    %48 = arith.addf %45, %47 : vector<2x512xf32>
    %cst_26 = arith.constant dense<0.000000e+00> : vector<512xf32>
    %49 = vector.multi_reduction <add>, %48, %cst_26 [0] : vector<2x512xf32> to vector<512xf32>
    %50 = vector.shape_cast %49 : vector<512xf32> to vector<1x512xf32>
    %cst_27 = arith.constant 2.000000e+00 : f32
    %51 = vector.broadcast %cst_27 : f32 to vector<1x512xf32>
    %52 = arith.divf %50, %51 : vector<1x512xf32>
    %53 = vector.broadcast %52 : vector<1x512xf32> to vector<2x512xf32>
    %54 = arith.subf %48, %53 : vector<2x512xf32>
    %55 = arith.mulf %54, %54 : vector<2x512xf32>
    %cst_28 = arith.constant dense<0.000000e+00> : vector<512xf32>
    %56 = vector.multi_reduction <add>, %55, %cst_28 [0] : vector<2x512xf32> to vector<512xf32>
    %57 = vector.shape_cast %56 : vector<512xf32> to vector<1x512xf32>
    %cst_29 = arith.constant 2.000000e+00 : f32
    %58 = vector.broadcast %cst_29 : f32 to vector<1x512xf32>
    %59 = arith.divf %57, %58 : vector<1x512xf32>
    %60 = vector.broadcast %52 : vector<1x512xf32> to vector<2x512xf32>
    %61 = arith.subf %48, %60 : vector<2x512xf32>
    %cst_30 = arith.constant 8.000000e-01 : f32
    %62 = vector.broadcast %cst_30 : f32 to vector<1x512xf32>
    %63 = arith.addf %59, %62 : vector<1x512xf32>
    %64 = math.rsqrt %63 : vector<1x512xf32>
    %65 = vector.broadcast %64 : vector<1x512xf32> to vector<2x512xf32>
    %66 = arith.mulf %61, %65 : vector<2x512xf32>
    %c0_31 = arith.constant 0 : index
    %c0_32 = arith.constant 0 : index
    %67 = vector.load %arg9[%c0_31, %c0_32] : memref<1x512xf32, #tpu.memory_space<vmem>>, vector<1x512xf32>
    %68 = vector.broadcast %67 : vector<1x512xf32> to vector<2x512xf32>
    %69 = arith.mulf %66, %68 : vector<2x512xf32>
    %c0_33 = arith.constant 0 : index
    %c0_34 = arith.constant 0 : index
    %70 = vector.load %arg10[%c0_33, %c0_34] : memref<1x512xf32, #tpu.memory_space<vmem>>, vector<1x512xf32>
    %71 = vector.broadcast %70 : vector<1x512xf32> to vector<2x512xf32>
    %72 = arith.addf %69, %71 : vector<2x512xf32>
    %cst_35 = arith.constant 2.000000e-01 : f32
    %73 = vector.broadcast %cst_35 : f32 to vector<2x512xf32>
    %74 = arith.mulf %73, %72 : vector<2x512xf32>
    %75 = arith.maximumf %72, %74 : vector<2x512xf32>
    %76 = arith.truncf %75 : vector<2x512xf32> to vector<2x512xbf16>
    %c0_36 = arith.constant 0 : index
    %c0_37 = arith.constant 0 : index
    %77 = vector.load %arg11[%c0_36, %c0_37] : memref<512x1024xbf16, #tpu.memory_space<vmem>>, vector<512x1024xbf16>
    %cst_38 = arith.constant dense<0.000000e+00> : vector<2x1024xf32>
    %78 = tpu.matmul %76, %77, %cst_38 {dimension_numbers = #tpu.dot_dimension_numbers<[1], [0], [0], [1], [0, 0, 1, 1], [], []>} : vector<2x512xbf16>, vector<512x1024xbf16>, vector<2x1024xf32> -> vector<2x1024xf32>
    %c0_39 = arith.constant 0 : index
    %c0_40 = arith.constant 0 : index
    %79 = vector.load %arg12[%c0_39, %c0_40] : memref<1x1024xf32, #tpu.memory_space<vmem>>, vector<1x1024xf32>
    %80 = vector.broadcast %79 : vector<1x1024xf32> to vector<2x1024xf32>
    %81 = arith.addf %78, %80 : vector<2x1024xf32>
    %cst_41 = arith.constant dense<0.000000e+00> : vector<1024xf32>
    %82 = vector.multi_reduction <add>, %81, %cst_41 [0] : vector<2x1024xf32> to vector<1024xf32>
    %83 = vector.shape_cast %82 : vector<1024xf32> to vector<1x1024xf32>
    %cst_42 = arith.constant 2.000000e+00 : f32
    %84 = vector.broadcast %cst_42 : f32 to vector<1x1024xf32>
    %85 = arith.divf %83, %84 : vector<1x1024xf32>
    %86 = vector.broadcast %85 : vector<1x1024xf32> to vector<2x1024xf32>
    %87 = arith.subf %81, %86 : vector<2x1024xf32>
    %88 = arith.mulf %87, %87 : vector<2x1024xf32>
    %cst_43 = arith.constant dense<0.000000e+00> : vector<1024xf32>
    %89 = vector.multi_reduction <add>, %88, %cst_43 [0] : vector<2x1024xf32> to vector<1024xf32>
    %90 = vector.shape_cast %89 : vector<1024xf32> to vector<1x1024xf32>
    %cst_44 = arith.constant 2.000000e+00 : f32
    %91 = vector.broadcast %cst_44 : f32 to vector<1x1024xf32>
    %92 = arith.divf %90, %91 : vector<1x1024xf32>
    %93 = vector.broadcast %85 : vector<1x1024xf32> to vector<2x1024xf32>
    %94 = arith.subf %81, %93 : vector<2x1024xf32>
    %cst_45 = arith.constant 8.000000e-01 : f32
    %95 = vector.broadcast %cst_45 : f32 to vector<1x1024xf32>
    %96 = arith.addf %92, %95 : vector<1x1024xf32>
    %97 = math.rsqrt %96 : vector<1x1024xf32>
    %98 = vector.broadcast %97 : vector<1x1024xf32> to vector<2x1024xf32>
    %99 = arith.mulf %94, %98 : vector<2x1024xf32>
    %c0_46 = arith.constant 0 : index
    %c0_47 = arith.constant 0 : index
    %100 = vector.load %arg13[%c0_46, %c0_47] : memref<1x1024xf32, #tpu.memory_space<vmem>>, vector<1x1024xf32>
    %101 = vector.broadcast %100 : vector<1x1024xf32> to vector<2x1024xf32>
    %102 = arith.mulf %99, %101 : vector<2x1024xf32>
    %c0_48 = arith.constant 0 : index
    %c0_49 = arith.constant 0 : index
    %103 = vector.load %arg14[%c0_48, %c0_49] : memref<1x1024xf32, #tpu.memory_space<vmem>>, vector<1x1024xf32>
    %104 = vector.broadcast %103 : vector<1x1024xf32> to vector<2x1024xf32>
    %105 = arith.addf %102, %104 : vector<2x1024xf32>
    %cst_50 = arith.constant 2.000000e-01 : f32
    %106 = vector.broadcast %cst_50 : f32 to vector<2x1024xf32>
    %107 = arith.mulf %106, %105 : vector<2x1024xf32>
    %108 = arith.maximumf %105, %107 : vector<2x1024xf32>
    %109 = arith.truncf %108 : vector<2x1024xf32> to vector<2x1024xbf16>
    %c0_51 = arith.constant 0 : index
    %c0_52 = arith.constant 0 : index
    %110 = vector.load %arg15[%c0_51, %c0_52] : memref<1024x128xbf16, #tpu.memory_space<vmem>>, vector<1024x128xbf16>
    %cst_53 = arith.constant dense<0.000000e+00> : vector<2x128xf32>
    %111 = tpu.matmul %109, %110, %cst_53 {dimension_numbers = #tpu.dot_dimension_numbers<[1], [0], [0], [1], [0, 0, 1, 1], [], []>} : vector<2x1024xbf16>, vector<1024x128xbf16>, vector<2x128xf32> -> vector<2x128xf32>
    %c0_54 = arith.constant 0 : index
    %c0_55 = arith.constant 0 : index
    %112 = vector.load %arg16[%c0_54, %c0_55] : memref<1x128xf32, #tpu.memory_space<vmem>>, vector<1x128xf32>
    %113 = vector.broadcast %112 : vector<1x128xf32> to vector<2x128xf32>
    %114 = arith.addf %111, %113 : vector<2x128xf32>
    %115 = math.tanh %114 : vector<2x128xf32>
    %c0_56 = arith.constant 0 : index
    %c0_57 = arith.constant 0 : index
    %116 = vector.load %arg17[%c0_56, %c0_57] : memref<2x128xf32, #tpu.memory_space<vmem>>, vector<2x128xf32>
    tpu.vector_store %arg17[%c0_56, %c0_57], %115 {strides = array<i32>} : memref<2x128xf32, #tpu.memory_space<vmem>>, vector<2x128xf32>,
    return
  }
}

</mosaic_0001>

<llo_original>
// kernel: generator_forward.1
$region0: #{generator_forward.1}
  #allocation0 [shape = 'u32[]', space=smem, size = 0x4, offset = 0x4, fixed_abs, tag = 'smem constant byte address 0x4 - core index']
  #allocation1 [shape = 'u32[72,128]{1,0:T(1,128)}', space=vmem, size = 0x9000, scoped, tag = 'internal scratch']
  %s0 = inlined_call_operand.vmem [shape: f32[2,32], index: 0, kind: input, shape index: {}]
  %s1 = inlined_call_operand.hbm [shape: bf16[32,128], index: 1, kind: input, shape index: {}]
  %s2 = inlined_call_operand.hbm [shape: f32[1,128], index: 2, kind: input, shape index: {}]
  %s3 = inlined_call_operand.hbm [shape: bf16[128,256], index: 3, kind: input, shape index: {}]
  %s4 = inlined_call_operand.hbm [shape: f32[1,256], index: 4, kind: input, shape index: {}]
  %s5 = inlined_call_operand.hbm [shape: f32[1,256], index: 5, kind: input, shape index: {}]
  %s6 = inlined_call_operand.hbm [shape: f32[1,256], index: 6, kind: input, shape index: {}]
  %s7 = inlined_call_operand.hbm [shape: bf16[256,512], index: 7, kind: input, shape index: {}]
  %s8 = inlined_call_operand.hbm [shape: f32[1,512], index: 8, kind: input, shape index: {}]
  %s9 = inlined_call_operand.hbm [shape: f32[1,512], index: 9, kind: input, shape index: {}]
  %s10 = inlined_call_operand.hbm [shape: f32[1,512], index: 10, kind: input, shape index: {}]
  %s11 = inlined_call_operand.hbm [shape: bf16[512,1024], index: 11, kind: input, shape index: {}]
  %s12 = inlined_call_operand.hbm [shape: f32[1,1024], index: 12, kind: input, shape index: {}]
  %s13 = inlined_call_operand.vmem [shape: f32[1,1024], index: 13, kind: input, shape index: {}]
  %s14 = inlined_call_operand.hbm [shape: f32[1,1024], index: 14, kind: input, shape index: {}]
  %s15 = inlined_call_operand.hbm [shape: bf16[1024,128], index: 15, kind: input, shape index: {}]
  %s16 = inlined_call_operand.hbm [shape: f32[1,128], index: 16, kind: input, shape index: {}]
  %s17 = inlined_call_operand.vmem [shape: f32[2,128], index: 17, kind: output, shape index: {}]
  %s18 = sld [smem:[#allocation0]]
  $region138: #{generator_forward.1} parent=0
    _
  %s20 = ssub.s32 1, %s18
  %s21 = scalar_select 0, %s20, %s18
  $region1: #{generator_forward.1} parent=0
    #allocation2 [shape = 'u8[8192]{0}', space=vmem, size = 0x2000, scoped, tag = 'input window, operand 1, single buffered']
    #allocation3 [shape = 's32[1]{0}', space=sflag, size = 0x4, scoped, tag = 'scoped memory for generator_forward.1']
    #allocation4 [shape = 'u8[512]{0}', space=vmem, size = 0x400, scoped, tag = 'input window, operand 2, single buffered']
    #allocation5 [shape = 's32[1]{0}', space=sflag, size = 0x4, scoped, tag = 'scoped memory for generator_forward.1']
    #allocation6 [shape = 'u8[65536]{0}', space=vmem, size = 0x10000, scoped, tag = 'input window, operand 3, single buffered']
    #allocation7 [shape = 'u8[1024]{0}', space=vmem, size = 0x400, scoped, tag = 'input window, operand 4, single buffered']
    #allocation8 [shape = 's32[1]{0}', space=sflag, size = 0x4, scoped, tag = 'scoped memory for generator_forward.1']
    #allocation9 [shape = 'u8[1024]{0}', space=vmem, size = 0x400, scoped, tag = 'input window, operand 5, single buffered']
    #allocation10 [shape = 'u8[1024]{0}', space=vmem, size = 0x400, scoped, tag = 'input window, operand 6, single buffered']
    #allocation11 [shape = 's32[1]{0}', space=sflag, size = 0x4, scoped, tag = 'scoped memory for generator_forward.1']
    #allocation12 [shape = 'u8[262144]{0}', space=vmem, size = 0x40000, scoped, tag = 'input window, operand 7, single buffered']
    #allocation13 [shape = 'u8[2048]{0}', space=vmem, size = 0x800, scoped, tag = 'input window, operand 8, single buffered']
    #allocation14 [shape = 's32[1]{0}', space=sflag, size = 0x4, scoped, tag = 'scoped memory for generator_forward.1']
    #allocation15 [shape = 'u8[2048]{0}', space=vmem, size = 0x800, scoped, tag = 'input window, operand 9, single buffered']
    #allocation16 [shape = 'u8[2048]{0}', space=vmem, size = 0x800, scoped, tag = 'input window, operand 10, single buffered']
    #allocation17 [shape = 's32[1]{0}', space=sflag, size = 0x4, scoped, tag = 'scoped memory for generator_forward.1']
    #allocation18 [shape = 'u8[1048576]{0}', space=vmem, size = 0x100000, scoped, tag = 'input window, operand 11, single buffered']
    #allocation19 [shape = 'u8[4096]{0}', space=vmem, size = 0x1000, scoped, tag = 'input window, operand 12, single buffered']
    #allocation20 [shape = 's32[1]{0}', space=sflag, size = 0x4, scoped, tag = 'scoped memory for generator_forward.1']
    #allocation21 [shape = 'u8[4096]{0}', space=vmem, size = 0x1000, scoped, tag = 'input window, operand 14, single buffered']
    #allocation22 [shape = 'u8[262144]{0}', space=vmem, size = 0x40000, scoped, tag = 'input window, operand 15, single buffered']
    #allocation23 [shape = 's32[1]{0}', space=sflag, size = 0x4, scoped, tag = 'scoped memory for generator_forward.1']
    #allocation24 [shape = 'u8[512]{0}', space=vmem, size = 0x400, scoped, tag = 'input window, operand 16, single buffered']
    %22 = vsyncpa [#allocation3], 0
    %23 = vsyncpa [#allocation5], 0
    %24 = vsyncpa [#allocation8], 0
    %25 = vsyncpa [#allocation11], 0
    %26 = vsyncpa [#allocation14], 0
    %27 = vsyncpa [#allocation17], 0
    %28 = vsyncpa [#allocation20], 0
    %29 = vsyncpa [#allocation23], 0
    // Predicated region
    $region2: #{generator_forward.1} parent=1 // pred_check
      _
    $region3: #{generator_forward.1} parent=1 // pred_check_branch
      %31 = sbr.rel (0) target = $region5
    $region4: #{generator_forward.1} parent=1 // pred_region
      _
    $region5: #{generator_forward.1} parent=1 // pred_fallthru
      _
    // Predicated region
    $region6: #{generator_forward.1} parent=1 // pred_check
      _
    $region7: #{generator_forward.1} parent=1 // pred_check_branch
      %33 = sbr.rel (0) target = $region9
    $region8: #{generator_forward.1} parent=1 // pred_region
      %35 = vsyncadd [#allocation3], 0
      %s36 = sshll.u32 %s1, 4
      %s37 = int_to_ptr.hbm [resolvable:$true] %s36
      %s38 = sshll.u32 [#allocation2], 4
      %s39 = int_to_ptr.vmem [resolvable:$true] %s38
      %44 = dma.hbm_to_vmem [thread:$0]  %s37, 256, %s39, [#allocation3], 64, 64, 4
    $region9: #{generator_forward.1} parent=1 // pred_fallthru
      _
    // Predicated region
    $region10: #{generator_forward.1} parent=1 // pred_check
      _
    $region11: #{generator_forward.1} parent=1 // pred_check_branch
      %46 = sbr.rel (0) target = $region13
    $region12: #{generator_forward.1} parent=1 // pred_region
      %48 = vsyncadd [#allocation5], 0
      %s50 = sshll.u32 %s2, 4
      %s51 = int_to_ptr.hbm [resolvable:$true] %s50
      %s52 = sshll.u32 [#allocation4], 4
      %s53 = int_to_ptr.vmem [resolvable:$true] %s52
      %55 = dma.hbm_to_vmem [thread:$0]  %s51, 16, %s53, [#allocation5]
    $region13: #{generator_forward.1} parent=1 // pred_fallthru
      _
    // Predicated region
    $region14: #{generator_forward.1} parent=1 // pred_check
      _
    $region15: #{generator_forward.1} parent=1 // pred_check_branch
      %57 = sbr.rel (0) target = $region17
    $region16: #{generator_forward.1} parent=1 // pred_region
      %59 = vsyncadd [#allocation5], 0
      %s60 = sshll.u32 %s3, 4
      %s61 = int_to_ptr.hbm [resolvable:$true] %s60
      %s62 = sshll.u32 [#allocation6], 4
      %s63 = int_to_ptr.vmem [resolvable:$true] %s62
      %68 = dma.hbm_to_vmem [thread:$0]  %s61, 2048, %s63, [#allocation5], 128, 128, 8
    $region17: #{generator_forward.1} parent=1 // pred_fallthru
      _
    // Predicated region
    $region18: #{generator_forward.1} parent=1 // pred_check
      _
    $region19: #{generator_forward.1} parent=1 // pred_check_branch
      %70 = sbr.rel (0) target = $region21
    $region20: #{generator_forward.1} parent=1 // pred_region
      %72 = vsyncadd [#allocation8], 0
      %s74 = sshll.u32 %s4, 4
      %s75 = int_to_ptr.hbm [resolvable:$true] %s74
      %s76 = sshll.u32 [#allocation7], 4
      %s77 = int_to_ptr.vmem [resolvable:$true] %s76
      %79 = dma.hbm_to_vmem [thread:$0]  %s75, 32, %s77, [#allocation8]
    $region21: #{generator_forward.1} parent=1 // pred_fallthru
      _
    // Predicated region
    $region22: #{generator_forward.1} parent=1 // pred_check
      _
    $region23: #{generator_forward.1} parent=1 // pred_check_branch
      %81 = sbr.rel (0) target = $region25
    $region24: #{generator_forward.1} parent=1 // pred_region
      %83 = vsyncadd [#allocation8], 0
      %s85 = sshll.u32 %s5, 4
      %s86 = int_to_ptr.hbm [resolvable:$true] %s85
      %s87 = sshll.u32 [#allocation9], 4
      %s88 = int_to_ptr.vmem [resolvable:$true] %s87
      %90 = dma.hbm_to_vmem [thread:$0]  %s86, 32, %s88, [#allocation8]
    $region25: #{generator_forward.1} parent=1 // pred_fallthru
      _
    // Predicated region
    $region26: #{generator_forward.1} parent=1 // pred_check
      _
    $region27: #{generator_forward.1} parent=1 // pred_check_branch
      %92 = sbr.rel (0) target = $region29
    $region28: #{generator_forward.1} parent=1 // pred_region
      %94 = vsyncadd [#allocation11], 0
      %s96 = sshll.u32 %s6, 4
      %s97 = int_to_ptr.hbm [resolvable:$true] %s96
      %s98 = sshll.u32 [#allocation10], 4
      %s99 = int_to_ptr.vmem [resolvable:$true] %s98
      %101 = dma.hbm_to_vmem [thread:$0]  %s97, 32, %s99, [#allocation11]
    $region29: #{generator_forward.1} parent=1 // pred_fallthru
      _
    // Predicated region
    $region30: #{generator_forward.1} parent=1 // pred_check
      _
    $region31: #{generator_forward.1} parent=1 // pred_check_branch
      %103 = sbr.rel (0) target = $region33
    $region32: #{generator_forward.1} parent=1 // pred_region
      %105 = vsyncadd [#allocation11], 0
      %s106 = sshll.u32 %s7, 4
      %s107 = int_to_ptr.hbm [resolvable:$true] %s106
      %s108 = sshll.u32 [#allocation12], 4
      %s109 = int_to_ptr.vmem [resolvable:$true] %s108
      %114 = dma.hbm_to_vmem [thread:$0]  %s107, 8192, %s109, [#allocation11], 256, 256, 16
    $region33: #{generator_forward.1} parent=1 // pred_fallthru
      _
    // Predicated region
    $region34: #{generator_forward.1} parent=1 // pred_check
      _
    $region35: #{generator_forward.1} parent=1 // pred_check_branch
      %116 = sbr.rel (0) target = $region37
    $region36: #{generator_forward.1} parent=1 // pred_region
      %118 = vsyncadd [#allocation14], 0
      %s120 = sshll.u32 %s8, 4
      %s121 = int_to_ptr.hbm [resolvable:$true] %s120
      %s122 = sshll.u32 [#allocation13], 4
      %s123 = int_to_ptr.vmem [resolvable:$true] %s122
      %125 = dma.hbm_to_vmem [thread:$0]  %s121, 64, %s123, [#allocation14]
    $region37: #{generator_forward.1} parent=1 // pred_fallthru
      _
    // Predicated region
    $region38: #{generator_forward.1} parent=1 // pred_check
      _
    $region39: #{generator_forward.1} parent=1 // pred_check_branch
      %127 = sbr.rel (0) target = $region41
    $region40: #{generator_forward.1} parent=1 // pred_region
      %129 = vsyncadd [#allocation14], 0
      %s131 = sshll.u32 %s9, 4
      %s132 = int_to_ptr.hbm [resolvable:$true] %s131
      %s133 = sshll.u32 [#allocation15], 4
      %s134 = int_to_ptr.vmem [resolvable:$true] %s133
      %136 = dma.hbm_to_vmem [thread:$0]  %s132, 64, %s134, [#allocation14]
    $region41: #{generator_forward.1} parent=1 // pred_fallthru
      _
    // Predicated region
    $region42: #{generator_forward.1} parent=1 // pred_check
      _
    $region43: #{generator_forward.1} parent=1 // pred_check_branch
      %138 = sbr.rel (0) target = $region45
    $region44: #{generator_forward.1} parent=1 // pred_region
      %140 = vsyncadd [#allocation17], 0
      %s142 = sshll.u32 %s10, 4
      %s143 = int_to_ptr.hbm [resolvable:$true] %s142
      %s144 = sshll.u32 [#allocation16], 4
      %s145 = int_to_ptr.vmem [resolvable:$true] %s144
      %147 = dma.hbm_to_vmem [thread:$0]  %s143, 64, %s145, [#allocation17]
    $region45: #{generator_forward.1} parent=1 // pred_fallthru
      _
    // Predicated region
    $region46: #{generator_forward.1} parent=1 // pred_check
      _
    $region47: #{generator_forward.1} parent=1 // pred_check_branch
      %149 = sbr.rel (0) target = $region49
    $region48: #{generator_forward.1} parent=1 // pred_region
      %151 = vsyncadd [#allocation17], 0
      %s152 = sshll.u32 %s11, 4
      %s153 = int_to_ptr.hbm [resolvable:$true] %s152
      %s154 = sshll.u32 [#allocation18], 4
      %s155 = int_to_ptr.vmem [resolvable:$true] %s154
      %160 = dma.hbm_to_vmem [thread:$0]  %s153, 32768, %s155, [#allocation17], 512, 512, 32
    $region49: #{generator_forward.1} parent=1 // pred_fallthru
      _
    // Predicated region
    $region50: #{generator_forward.1} parent=1 // pred_check
      _
    $region51: #{generator_forward.1} parent=1 // pred_check_branch
      %162 = sbr.rel (0) target = $region53
    $region52: #{generator_forward.1} parent=1 // pred_region
      %164 = vsyncadd [#allocation20], 0
      %s166 = sshll.u32 %s12, 4
      %s167 = int_to_ptr.hbm [resolvable:$true] %s166
      %s168 = sshll.u32 [#allocation19], 4
      %s169 = int_to_ptr.vmem [resolvable:$true] %s168
      %171 = dma.hbm_to_vmem [thread:$0]  %s167, 128, %s169, [#allocation20]
    $region53: #{generator_forward.1} parent=1 // pred_fallthru
      _
    // Predicated region
    $region54: #{generator_forward.1} parent=1 // pred_check
      _
    $region55: #{generator_forward.1} parent=1 // pred_check_branch
      %173 = sbr.rel (0) target = $region57
    $region56: #{generator_forward.1} parent=1 // pred_region
      _
    $region57: #{generator_forward.1} parent=1 // pred_fallthru
      _
    // Predicated region
    $region58: #{generator_forward.1} parent=1 // pred_check
      _
    $region59: #{generator_forward.1} parent=1 // pred_check_branch
      %175 = sbr.rel (0) target = $region61
    $region60: #{generator_forward.1} parent=1 // pred_region
      %177 = vsyncadd [#allocation20], 0
      %s179 = sshll.u32 %s14, 4
      %s180 = int_to_ptr.hbm [resolvable:$true] %s179
      %s181 = sshll.u32 [#allocation21], 4
      %s182 = int_to_ptr.vmem [resolvable:$true] %s181
      %184 = dma.hbm_to_vmem [thread:$0]  %s180, 128, %s182, [#allocation20]
    $region61: #{generator_forward.1} parent=1 // pred_fallthru
      _
    // Predicated region
    $region62: #{generator_forward.1} parent=1 // pred_check
      _
    $region63: #{generator_forward.1} parent=1 // pred_check_branch
      %186 = sbr.rel (0) target = $region65
    $region64: #{generator_forward.1} parent=1 // pred_region
      %188 = vsyncadd [#allocation23], 0
      %s189 = sshll.u32 %s15, 4
      %s190 = int_to_ptr.hbm [resolvable:$true] %s189
      %s191 = sshll.u32 [#allocation22], 4
      %s192 = int_to_ptr.vmem [resolvable:$true] %s191
      %197 = dma.hbm_to_vmem [thread:$0]  %s190, 8192, %s192, [#allocation23], 64, 64, 4
    $region65: #{generator_forward.1} parent=1 // pred_fallthru
      _
    // Predicated region
    $region66: #{generator_forward.1} parent=1 // pred_check
      _
    $region67: #{generator_forward.1} parent=1 // pred_check_branch
      %199 = sbr.rel (0) target = $region69
    $region68: #{generator_forward.1} parent=1 // pred_region
      %201 = vsyncadd [#allocation23], 0
      %s203 = sshll.u32 %s16, 4
      %s204 = int_to_ptr.hbm [resolvable:$true] %s203
      %s205 = sshll.u32 [#allocation24], 4
      %s206 = int_to_ptr.vmem [resolvable:$true] %s205
      %208 = dma.hbm_to_vmem [thread:$0]  %s204, 16, %s206, [#allocation23]
    $region69: #{generator_forward.1} parent=1 // pred_fallthru
      _
    // Predicated region
    $region70: #{generator_forward.1} parent=1 // pred_check
      _
    $region71: #{generator_forward.1} parent=1 // pred_check_branch
      %210 = sbr.rel (0) target = $region73
    $region72: #{generator_forward.1} parent=1 // pred_region
      %212 = dma.done [#allocation3], 256
    $region73: #{generator_forward.1} parent=1 // pred_fallthru
      _
    // Predicated region
    $region74: #{generator_forward.1} parent=1 // pred_check
      _
    $region75: #{generator_forward.1} parent=1 // pred_check_branch
      %214 = sbr.rel (0) target = $region77
    $region76: #{generator_forward.1} parent=1 // pred_region
      %216 = dma.done [#allocation5], 16
    $region77: #{generator_forward.1} parent=1 // pred_fallthru
      _
    // Predicated region
    $region78: #{generator_forward.1} parent=1 // pred_check
      _
    $region79: #{generator_forward.1} parent=1 // pred_check_branch
      %218 = sbr.rel (0) target = $region81
    $region80: #{generator_forward.1} parent=1 // pred_region
      %220 = dma.done [#allocation5], 2048
    $region81: #{generator_forward.1} parent=1 // pred_fallthru
      _
    // Predicated region
    $region82: #{generator_forward.1} parent=1 // pred_check
      _
    $region83: #{generator_forward.1} parent=1 // pred_check_branch
      %222 = sbr.rel (0) target = $region85
    $region84: #{generator_forward.1} parent=1 // pred_region
      %224 = dma.done [#allocation8], 32
    $region85: #{generator_forward.1} parent=1 // pred_fallthru
      _
    // Predicated region
    $region86: #{generator_forward.1} parent=1 // pred_check
      _
    $region87: #{generator_forward.1} parent=1 // pred_check_branch
      %226 = sbr.rel (0) target = $region89
    $region88: #{generator_forward.1} parent=1 // pred_region
      %228 = dma.done [#allocation8], 32
    $region89: #{generator_forward.1} parent=1 // pred_fallthru
      _
    // Predicated region
    $region90: #{generator_forward.1} parent=1 // pred_check
      _
    $region91: #{generator_forward.1} parent=1 // pred_check_branch
      %230 = sbr.rel (0) target = $region93
    $region92: #{generator_forward.1} parent=1 // pred_region
      %232 = dma.done [#allocation11], 32
    $region93: #{generator_forward.1} parent=1 // pred_fallthru
      _
    // Predicated region
    $region94: #{generator_forward.1} parent=1 // pred_check
      _
    $region95: #{generator_forward.1} parent=1 // pred_check_branch
      %234 = sbr.rel (0) target = $region97
    $region96: #{generator_forward.1} parent=1 // pred_region
      %236 = dma.done [#allocation11], 8192
    $region97: #{generator_forward.1} parent=1 // pred_fallthru
      _
    // Predicated region
    $region98: #{generator_forward.1} parent=1 // pred_check
      _
    $region99: #{generator_forward.1} parent=1 // pred_check_branch
      %238 = sbr.rel (0) target = $region101
    $region100: #{generator_forward.1} parent=1 // pred_region
      %240 = dma.done [#allocation14], 64
    $region101: #{generator_forward.1} parent=1 // pred_fallthru
      _
    // Predicated region
    $region102: #{generator_forward.1} parent=1 // pred_check
      _
    $region103: #{generator_forward.1} parent=1 // pred_check_branch
      %242 = sbr.rel (0) target = $region105
    $region104: #{generator_forward.1} parent=1 // pred_region
      %244 = dma.done [#allocation14], 64
    $region105: #{generator_forward.1} parent=1 // pred_fallthru
      _
    // Predicated region
    $region106: #{generator_forward.1} parent=1 // pred_check
      _
    $region107: #{generator_forward.1} parent=1 // pred_check_branch
      %246 = sbr.rel (0) target = $region109
    $region108: #{generator_forward.1} parent=1 // pred_region
      %248 = dma.done [#allocation17], 64
    $region109: #{generator_forward.1} parent=1 // pred_fallthru
      _
    // Predicated region
    $region110: #{generator_forward.1} parent=1 // pred_check
      _
    $region111: #{generator_forward.1} parent=1 // pred_check_branch
      %250 = sbr.rel (0) target = $region113
    $region112: #{generator_forward.1} parent=1 // pred_region
      %252 = dma.done [#allocation17], 32768
    $region113: #{generator_forward.1} parent=1 // pred_fallthru
      _
    // Predicated region
    $region114: #{generator_forward.1} parent=1 // pred_check
      _
    $region115: #{generator_forward.1} parent=1 // pred_check_branch
      %254 = sbr.rel (0) target = $region117
    $region116: #{generator_forward.1} parent=1 // pred_region
      %256 = dma.done [#allocation20], 128
    $region117: #{generator_forward.1} parent=1 // pred_fallthru
      _
    // Predicated region
    $region118: #{generator_forward.1} parent=1 // pred_check
      _
    $region119: #{generator_forward.1} parent=1 // pred_check_branch
      %258 = sbr.rel (0) target = $region121
    $region120: #{generator_forward.1} parent=1 // pred_region
      %260 = dma.done [#allocation20], 128
    $region121: #{generator_forward.1} parent=1 // pred_fallthru
      _
    // Predicated region
    $region122: #{generator_forward.1} parent=1 // pred_check
      _
    $region123: #{generator_forward.1} parent=1 // pred_check_branch
      %262 = sbr.rel (0) target = $region125
    $region124: #{generator_forward.1} parent=1 // pred_region
      %264 = dma.done [#allocation23], 8192
    $region125: #{generator_forward.1} parent=1 // pred_fallthru
      _
    // Predicated region
    $region126: #{generator_forward.1} parent=1 // pred_check
      _
    $region127: #{generator_forward.1} parent=1 // pred_check_branch
      %266 = sbr.rel (0) target = $region129
    $region128: #{generator_forward.1} parent=1 // pred_region
      %268 = dma.done [#allocation23], 16
    $region129: #{generator_forward.1} parent=1 // pred_fallthru
      _
    %v270 = vld [vmem:[%s0] sm:$0x3]
    %v271 = vpack.c.bf16 %v270, %v270
    %v272 = vld [vmem:[#allocation2] sm:$0xf]
    %v273 = vld [vmem:[#allocation2 + $0x4] sm:$0xf]
    %v274 = vld [vmem:[#allocation2 + $0x8] sm:$0xf]
    %v275 = vld [vmem:[#allocation2 + $0xc] sm:$0xf]
    %v276 = vld [vmem:[#allocation4] sm:$0x1]
    %v278 = vperm.slane %v276, 0
    %v284 = vunpack.c.l.b16 %v272
    %v285 = vunpack.c.l.b16 %v273
    %v286 = vunpack.c.l.b16 %v274
    %v287 = vunpack.c.l.b16 %v275
    %v288 = vpack.c.b16 %v285, %v284
    %v289 = vpack.c.b16 %v287, %v286
    %vm292 = vcmask 261120
    %v294 = vsel %vm292, %v271, 0
    %296 = vmatpush.bf16.msra.mxu0 0
    %297 = vmatpush.bf16.msra.mxu0 0
    %298 = vmatpush.bf16.msra.mxu0 0
    %299 = vmatpush.bf16.msra.mxu0 0
    %300 = vmatpush.bf16.msra.mxu0 0
    %301 = vmatpush.bf16.msra.mxu0 0
    %302 = vmatpush.bf16.msra.mxu0 %v289
    %303 = vmatpush.bf16.msra.mxu0 %v288
    %304 = vmatmul.bf16.gmra.mxu0 %v294
    %v305 = vpop.f32.mrf.mxu0
    %v306 = vadd.f32 %v278, %v305
    %v307 = vpop.f32.mrf.mxu0
    %308 = vdwg.mxu0
    %v309 = vmul.f32 %v306, 0.2
    %v310 = vmax.f32 %v306, %v309
    %v311 = vpack.c.bf16 %v310, %v310
    %v312 = vld [vmem:[#allocation6] sm:$0xff]
    %v313 = vld [vmem:[#allocation6 + $0x8] sm:$0xff]
    %v314 = vld [vmem:[#allocation6 + $0x10] sm:$0xff]
    %v315 = vld [vmem:[#allocation6 + $0x18] sm:$0xff]
    %v316 = vld [vmem:[#allocation6 + $0x20] sm:$0xff]
    %v317 = vld [vmem:[#allocation6 + $0x28] sm:$0xff]
    %v318 = vld [vmem:[#allocation6 + $0x30] sm:$0xff]
    %v319 = vld [vmem:[#allocation6 + $0x38] sm:$0xff]
    %v320 = vld [vmem:[#allocation6 + $0x40] sm:$0xff]
    %v321 = vld [vmem:[#allocation6 + $0x48] sm:$0xff]
    %v322 = vld [vmem:[#allocation6 + $0x50] sm:$0xff]
    %v323 = vld [vmem:[#allocation6 + $0x58] sm:$0xff]
    %v324 = vld [vmem:[#allocation6 + $0x60] sm:$0xff]
    %v325 = vld [vmem:[#allocation6 + $0x68] sm:$0xff]
    %v326 = vld [vmem:[#allocation6 + $0x70] sm:$0xff]
    %v327 = vld [vmem:[#allocation6 + $0x78] sm:$0xff]
    %v328 = vld [vmem:[#allocation7] sm:$0x3]
    %v330 = vperm.slane %v328, 0
    %v331 = vperm.slane %v328, 1
    %v350 = vunpack.c.l.b16 %v312
    %v351 = vunpack.c.h.b16 %v312
    %v352 = vunpack.c.l.b16 %v313
    %v353 = vunpack.c.h.b16 %v313
    %v354 = vunpack.c.l.b16 %v314
    %v355 = vunpack.c.h.b16 %v314
    %v356 = vunpack.c.l.b16 %v315
    %v357 = vunpack.c.h.b16 %v315
    %v358 = vunpack.c.l.b16 %v316
    %v359 = vunpack.c.h.b16 %v316
    %v360 = vunpack.c.l.b16 %v317
    %v361 = vunpack.c.h.b16 %v317
    %v362 = vunpack.c.l.b16 %v318
    %v363 = vunpack.c.h.b16 %v318
    %v364 = vunpack.c.l.b16 %v319
    %v365 = vunpack.c.h.b16 %v319
    %v366 = vunpack.c.l.b16 %v320
    %v367 = vunpack.c.h.b16 %v320
    %v368 = vunpack.c.l.b16 %v321
    %v369 = vunpack.c.h.b16 %v321
    %v370 = vunpack.c.l.b16 %v322
    %v371 = vunpack.c.h.b16 %v322
    %v372 = vunpack.c.l.b16 %v323
    %v373 = vunpack.c.h.b16 %v323
    %v374 = vunpack.c.l.b16 %v324
    %v375 = vunpack.c.h.b16 %v324
    %v376 = vunpack.c.l.b16 %v325
    %v377 = vunpack.c.h.b16 %v325
    %v378 = vunpack.c.l.b16 %v326
    %v379 = vunpack.c.h.b16 %v326
    %v380 = vunpack.c.l.b16 %v327
    %v381 = vunpack.c.h.b16 %v327
    %v382 = vpack.c.b16 %v352, %v350
    %v383 = vpack.c.b16 %v353, %v351
    %v384 = vpack.c.b16 %v356, %v354
    %v385 = vpack.c.b16 %v357, %v355
    %v386 = vpack.c.b16 %v360, %v358
    %v387 = vpack.c.b16 %v361, %v359
    %v388 = vpack.c.b16 %v364, %v362
    %v389 = vpack.c.b16 %v365, %v363
    %v390 = vpack.c.b16 %v368, %v366
    %v391 = vpack.c.b16 %v369, %v367
    %v392 = vpack.c.b16 %v372, %v370
    %v393 = vpack.c.b16 %v373, %v371
    %v394 = vpack.c.b16 %v376, %v374
    %v395 = vpack.c.b16 %v377, %v375
    %v396 = vpack.c.b16 %v380, %v378
    %v397 = vpack.c.b16 %v381, %v379
    %414 = vmatpush.bf16.msra.mxu0 %v396
    %415 = vmatpush.bf16.msra.mxu0 %v394
    %416 = vmatpush.bf16.msra.mxu0 %v392
    %417 = vmatpush.bf16.msra.mxu0 %v390
    %418 = vmatpush.bf16.msra.mxu0 %v388
    %419 = vmatpush.bf16.msra.mxu0 %v386
    %420 = vmatpush.bf16.msra.mxu0 %v384
    %421 = vmatpush.bf16.msra.mxu0 %v382
    %422 = vmatmul.bf16.gmra.mxu0 %v311
    %v423 = vpop.f32.mrf.mxu0
    %v424 = vadd.f32 %v330, %v423
    %v425 = vpop.f32.mrf.mxu0
    %426 = vdwg.mxu0
    %427 = vmatpush.bf16.msra.mxu0 %v397
    %428 = vmatpush.bf16.msra.mxu0 %v395
    %429 = vmatpush.bf16.msra.mxu0 %v393
    %430 = vmatpush.bf16.msra.mxu0 %v391
    %431 = vmatpush.bf16.msra.mxu0 %v389
    %432 = vmatpush.bf16.msra.mxu0 %v387
    %433 = vmatpush.bf16.msra.mxu0 %v385
    %434 = vmatpush.bf16.msra.mxu0 %v383
    %435 = vmatmul.bf16.gmra.mxu0 %v311
    %v436 = vpop.f32.mrf.mxu0
    %v437 = vadd.f32 %v331, %v436
    %v438 = vpop.f32.mrf.mxu0
    %439 = vdwg.mxu0
    %vm440 = vcmask 1041408
    %v441 = vsel %vm440, %v424, 0.0
    %v442 = vrot.slane %v441, 4
    %v443 = vadd.f32 %v441, %v442
    %v444 = vrot.slane %v443, 2
    %v445 = vadd.f32 %v443, %v444
    %v446 = vrot.slane %v445, 1
    %v447 = vadd.f32 %v445, %v446
    %v448 = vsel %vm440, %v437, 0.0
    %v449 = vrot.slane %v448, 4
    %v450 = vadd.f32 %v448, %v449
    %v451 = vrot.slane %v450, 2
    %v452 = vadd.f32 %v450, %v451
    %v453 = vrot.slane %v452, 1
    %v454 = vadd.f32 %v452, %v453
    %v455 = vrcp.pop 2.0
    %v456 = vmul.f32 2.0, %v455
    %v457 = vsub.f32 1.0, %v456
    %v458 = vmul.f32 %v455, %v457
    %v459 = vadd.f32 %v455, %v458
    %vm460 = vweird.f32 %v455
    %v461 = vsel %vm460, %v455, %v459
    %v462 = vmul.f32 %v447, %v461
    %v463 = vmul.f32 %v454, %v461
    %v464 = vsub.f32 %v424, %v462
    %v465 = vsub.f32 %v437, %v463
    %v466 = vmul.f32 %v464, %v464
    %v467 = vmul.f32 %v465, %v465
    %v468 = vsel %vm440, %v466, 0.0
    %v469 = vrot.slane %v468, 4
    %v470 = vadd.f32 %v468, %v469
    %v471 = vrot.slane %v470, 2
    %v472 = vadd.f32 %v470, %v471
    %v473 = vrot.slane %v472, 1
    %v474 = vadd.f32 %v472, %v473
    %v475 = vsel %vm440, %v467, 0.0
    %v476 = vrot.slane %v475, 4
    %v477 = vadd.f32 %v475, %v476
    %v478 = vrot.slane %v477, 2
    %v479 = vadd.f32 %v477, %v478
    %v480 = vrot.slane %v479, 1
    %v481 = vadd.f32 %v479, %v480
    %v482 = vmul.f32 %v474, %v461
    %v483 = vmul.f32 %v481, %v461
    %v484 = vadd.f32 %v482, 0.8
    %v485 = vadd.f32 %v483, 0.8
    %v486 = vrsqrt.pop %v484
    %v487 = vmul.f32 %v486, %v484
    %v488 = vmul.f32 %v487, %v486
    %v489 = vmul.f32 0.5, %v488
    %v490 = vsub.f32 1.5, %v489
    %v491 = vmul.f32 %v486, %v490
    %vm492 = vweird.f32 %v484
    %vm493 = vweird.f32 %v486
    %vm494 = vmor %vm492, %vm493
    %v495 = vsel %vm494, %v486, %v491
    %v496 = vrsqrt.pop %v485
    %v497 = vmul.f32 %v496, %v485
    %v498 = vmul.f32 %v497, %v496
    %v499 = vmul.f32 0.5, %v498
    %v500 = vsub.f32 1.5, %v499
    %v501 = vmul.f32 %v496, %v500
    %vm502 = vweird.f32 %v485
    %vm503 = vweird.f32 %v496
    %vm504 = vmor %vm502, %vm503
    %v505 = vsel %vm504, %v496, %v501
    %v506 = vmul.f32 %v464, %v495
    %v507 = vmul.f32 %v465, %v505
    %v508 = vld [vmem:[#allocation9] sm:$0x3]
    %v510 = vperm.slane %v508, 0
    %v511 = vperm.slane %v508, 1
    %v514 = vmul.f32 %v506, %v510
    %v515 = vmul.f32 %v507, %v511
    %v516 = vld [vmem:[#allocation10] sm:$0x3]
    %v518 = vperm.slane %v516, 0
    %v519 = vperm.slane %v516, 1
    %v522 = vadd.f32 %v514, %v518
    %v523 = vadd.f32 %v515, %v519
    %v524 = vmul.f32 %v522, 0.2
    %v525 = vmul.f32 %v523, 0.2
    %v526 = vmax.f32 %v522, %v524
    %v527 = vmax.f32 %v523, %v525
    %v528 = vpack.c.bf16 %v526, %v526
    %v529 = vpack.c.bf16 %v527, %v527
    %v530 = vld [vmem:[#allocation12] sm:$0xff]
    %v531 = vld [vmem:[#allocation12 + $0x8] sm:$0xff]
    %v532 = vld [vmem:[#allocation12 + $0x10] sm:$0xff]
    %v533 = vld [vmem:[#allocation12 + $0x18] sm:$0xff]
    %v534 = vld [vmem:[#allocation12 + $0x20] sm:$0xff]
    %v535 = vld [vmem:[#allocation12 + $0x28] sm:$0xff]
    %v536 = vld [vmem:[#allocation12 + $0x30] sm:$0xff]
    %v537 = vld [vmem:[#allocation12 + $0x38] sm:$0xff]
    %v538 = vld [vmem:[#allocation12 + $0x40] sm:$0xff]
    %v539 = vld [vmem:[#allocation12 + $0x48] sm:$0xff]
    %v540 = vld [vmem:[#allocation12 + $0x50] sm:$0xff]
    %v541 = vld [vmem:[#allocation12 + $0x58] sm:$0xff]
    %v542 = vld [vmem:[#allocation12 + $0x60] sm:$0xff]
    %v543 = vld [vmem:[#allocation12 + $0x68] sm:$0xff]
    %v544 = vld [vmem:[#allocation12 + $0x70] sm:$0xff]
    %v545 = vld [vmem:[#allocation12 + $0x78] sm:$0xff]
    %v546 = vld [vmem:[#allocation12 + $0x80] sm:$0xff]
    %v547 = vld [vmem:[#allocation12 + $0x88] sm:$0xff]
    %v548 = vld [vmem:[#allocation12 + $0x90] sm:$0xff]
    %v549 = vld [vmem:[#allocation12 + $0x98] sm:$0xff]
    %v550 = vld [vmem:[#allocation12 + $0xa0] sm:$0xff]
    %v551 = vld [vmem:[#allocation12 + $0xa8] sm:$0xff]
    %v552 = vld [vmem:[#allocation12 + $0xb0] sm:$0xff]
    %v553 = vld [vmem:[#allocation12 + $0xb8] sm:$0xff]
    %v554 = vld [vmem:[#allocation12 + $0xc0] sm:$0xff]
    %v555 = vld [vmem:[#allocation12 + $0xc8] sm:$0xff]
    %v556 = vld [vmem:[#allocation12 + $0xd0] sm:$0xff]
    %v557 = vld [vmem:[#allocation12 + $0xd8] sm:$0xff]
    %v558 = vld [vmem:[#allocation12 + $0xe0] sm:$0xff]
    %v559 = vld [vmem:[#allocation12 + $0xe8] sm:$0xff]
    %v560 = vld [vmem:[#allocation12 + $0xf0] sm:$0xff]
    %v561 = vld [vmem:[#allocation12 + $0xf8] sm:$0xff]
    %v562 = vld [vmem:[#allocation12 + $0x100] sm:$0xff]
    %v563 = vld [vmem:[#allocation12 + $0x108] sm:$0xff]
    %v564 = vld [vmem:[#allocation12 + $0x110] sm:$0xff]
    %v565 = vld [vmem:[#allocation12 + $0x118] sm:$0xff]
    %v566 = vld [vmem:[#allocation12 + $0x120] sm:$0xff]
    %v567 = vld [vmem:[#allocation12 + $0x128] sm:$0xff]
    %v568 = vld [vmem:[#allocation12 + $0x130] sm:$0xff]
    %v569 = vld [vmem:[#allocation12 + $0x138] sm:$0xff]
    %v570 = vld [vmem:[#allocation12 + $0x140] sm:$0xff]
    %v571 = vld [vmem:[#allocation12 + $0x148] sm:$0xff]
    %v572 = vld [vmem:[#allocation12 + $0x150] sm:$0xff]
    %v573 = vld [vmem:[#allocation12 + $0x158] sm:$0xff]
    %v574 = vld [vmem:[#allocation12 + $0x160] sm:$0xff]
    %v575 = vld [vmem:[#allocation12 + $0x168] sm:$0xff]
    %v576 = vld [vmem:[#allocation12 + $0x170] sm:$0xff]
    %v577 = vld [vmem:[#allocation12 + $0x178] sm:$0xff]
    %v578 = vld [vmem:[#allocation12 + $0x180] sm:$0xff]
    %v579 = vld [vmem:[#allocation12 + $0x188] sm:$0xff]
    %v580 = vld [vmem:[#allocation12 + $0x190] sm:$0xff]
    %v581 = vld [vmem:[#allocation12 + $0x198] sm:$0xff]
    %v582 = vld [vmem:[#allocation12 + $0x1a0] sm:$0xff]
    %v583 = vld [vmem:[#allocation12 + $0x1a8] sm:$0xff]
    %v584 = vld [vmem:[#allocation12 + $0x1b0] sm:$0xff]
    %v585 = vld [vmem:[#allocation12 + $0x1b8] sm:$0xff]
    %v586 = vld [vmem:[#allocation12 + $0x1c0] sm:$0xff]
    %v587 = vld [vmem:[#allocation12 + $0x1c8] sm:$0xff]
    %v588 = vld [vmem:[#allocation12 + $0x1d0] sm:$0xff]
    %v589 = vld [vmem:[#allocation12 + $0x1d8] sm:$0xff]
    %v590 = vld [vmem:[#allocation12 + $0x1e0] sm:$0xff]
    %v591 = vld [vmem:[#allocation12 + $0x1e8] sm:$0xff]
    %v592 = vld [vmem:[#allocation12 + $0x1f0] sm:$0xff]
    %v593 = vld [vmem:[#allocation12 + $0x1f8] sm:$0xff]
    %v594 = vld [vmem:[#allocation13] sm:$0xf]
    %v596 = vperm.slane %v594, 0
    %v597 = vperm.slane %v594, 1
    %v598 = vperm.slane %v594, 2
    %v599 = vperm.slane %v594, 3
    %v668 = vunpack.c.l.b16 %v530
    %v669 = vunpack.c.h.b16 %v530
    %v670 = vunpack.c.l.b16 %v531
    %v671 = vunpack.c.h.b16 %v531
    %v672 = vunpack.c.l.b16 %v532
    %v673 = vunpack.c.h.b16 %v532
    %v674 = vunpack.c.l.b16 %v533
    %v675 = vunpack.c.h.b16 %v533
    %v676 = vunpack.c.l.b16 %v534
    %v677 = vunpack.c.h.b16 %v534
    %v678 = vunpack.c.l.b16 %v535
    %v679 = vunpack.c.h.b16 %v535
    %v680 = vunpack.c.l.b16 %v536
    %v681 = vunpack.c.h.b16 %v536
    %v682 = vunpack.c.l.b16 %v537
    %v683 = vunpack.c.h.b16 %v537
    %v684 = vunpack.c.l.b16 %v538
    %v685 = vunpack.c.h.b16 %v538
    %v686 = vunpack.c.l.b16 %v539
    %v687 = vunpack.c.h.b16 %v539
    %v688 = vunpack.c.l.b16 %v540
    %v689 = vunpack.c.h.b16 %v540
    %v690 = vunpack.c.l.b16 %v541
    %v691 = vunpack.c.h.b16 %v541
    %v692 = vunpack.c.l.b16 %v542
    %v693 = vunpack.c.h.b16 %v542
    %v694 = vunpack.c.l.b16 %v543
    %v695 = vunpack.c.h.b16 %v543
    %v696 = vunpack.c.l.b16 %v544
    %v697 = vunpack.c.h.b16 %v544
    %v698 = vunpack.c.l.b16 %v545
    %v699 = vunpack.c.h.b16 %v545
    %v700 = vunpack.c.l.b16 %v546
    %v701 = vunpack.c.h.b16 %v546
    %v702 = vunpack.c.l.b16 %v547
    %v703 = vunpack.c.h.b16 %v547
    %v704 = vunpack.c.l.b16 %v548
    %v705 = vunpack.c.h.b16 %v548
    %v706 = vunpack.c.l.b16 %v549
    %v707 = vunpack.c.h.b16 %v549
    %v708 = vunpack.c.l.b16 %v550
    %v709 = vunpack.c.h.b16 %v550
    %v710 = vunpack.c.l.b16 %v551
    %v711 = vunpack.c.h.b16 %v551
    %v712 = vunpack.c.l.b16 %v552
    %v713 = vunpack.c.h.b16 %v552
    %v714 = vunpack.c.l.b16 %v553
    %v715 = vunpack.c.h.b16 %v553
    %v716 = vunpack.c.l.b16 %v554
    %v717 = vunpack.c.h.b16 %v554
    %v718 = vunpack.c.l.b16 %v555
    %v719 = vunpack.c.h.b16 %v555
    %v720 = vunpack.c.l.b16 %v556
    %v721 = vunpack.c.h.b16 %v556
    %v722 = vunpack.c.l.b16 %v557
    %v723 = vunpack.c.h.b16 %v557
    %v724 = vunpack.c.l.b16 %v558
    %v725 = vunpack.c.h.b16 %v558
    %v726 = vunpack.c.l.b16 %v559
    %v727 = vunpack.c.h.b16 %v559
    %v728 = vunpack.c.l.b16 %v560
    %v729 = vunpack.c.h.b16 %v560
    %v730 = vunpack.c.l.b16 %v561
    %v731 = vunpack.c.h.b16 %v561
    %v732 = vunpack.c.l.b16 %v562
    %v733 = vunpack.c.h.b16 %v562
    %v734 = vunpack.c.l.b16 %v563
    %v735 = vunpack.c.h.b16 %v563
    %v736 = vunpack.c.l.b16 %v564
    %v737 = vunpack.c.h.b16 %v564
    %v738 = vunpack.c.l.b16 %v565
    %v739 = vunpack.c.h.b16 %v565
    %v740 = vunpack.c.l.b16 %v566
    %v741 = vunpack.c.h.b16 %v566
    %v742 = vunpack.c.l.b16 %v567
    %v743 = vunpack.c.h.b16 %v567
    %v744 = vunpack.c.l.b16 %v568
    %v745 = vunpack.c.h.b16 %v568
    %v746 = vunpack.c.l.b16 %v569
    %v747 = vunpack.c.h.b16 %v569
    %v748 = vunpack.c.l.b16 %v570
    %v749 = vunpack.c.h.b16 %v570
    %v750 = vunpack.c.l.b16 %v571
    %v751 = vunpack.c.h.b16 %v571
    %v752 = vunpack.c.l.b16 %v572
    %v753 = vunpack.c.h.b16 %v572
    %v754 = vunpack.c.l.b16 %v573
    %v755 = vunpack.c.h.b16 %v573
    %v756 = vunpack.c.l.b16 %v574
    %v757 = vunpack.c.h.b16 %v574
    %v758 = vunpack.c.l.b16 %v575
    %v759 = vunpack.c.h.b16 %v575
    %v760 = vunpack.c.l.b16 %v576
    %v761 = vunpack.c.h.b16 %v576
    %v762 = vunpack.c.l.b16 %v577
    %v763 = vunpack.c.h.b16 %v577
    %v764 = vunpack.c.l.b16 %v578
    %v765 = vunpack.c.h.b16 %v578
    %v766 = vunpack.c.l.b16 %v579
    %v767 = vunpack.c.h.b16 %v579
    %v768 = vunpack.c.l.b16 %v580
    %v769 = vunpack.c.h.b16 %v580
    %v770 = vunpack.c.l.b16 %v581
    %v771 = vunpack.c.h.b16 %v581
    %v772 = vunpack.c.l.b16 %v582
    %v773 = vunpack.c.h.b16 %v582
    %v774 = vunpack.c.l.b16 %v583
    %v775 = vunpack.c.h.b16 %v583
    %v776 = vunpack.c.l.b16 %v584
    %v777 = vunpack.c.h.b16 %v584
    %v778 = vunpack.c.l.b16 %v585
    %v779 = vunpack.c.h.b16 %v585
    %v780 = vunpack.c.l.b16 %v586
    %v781 = vunpack.c.h.b16 %v586
    %v782 = vunpack.c.l.b16 %v587
    %v783 = vunpack.c.h.b16 %v587
    %v784 = vunpack.c.l.b16 %v588
    %v785 = vunpack.c.h.b16 %v588
    %v786 = vunpack.c.l.b16 %v589
    %v787 = vunpack.c.h.b16 %v589
    %v788 = vunpack.c.l.b16 %v590
    %v789 = vunpack.c.h.b16 %v590
    %v790 = vunpack.c.l.b16 %v591
    %v791 = vunpack.c.h.b16 %v591
    %v792 = vunpack.c.l.b16 %v592
    %v793 = vunpack.c.h.b16 %v592
    %v794 = vunpack.c.l.b16 %v593
    %v795 = vunpack.c.h.b16 %v593
    %v796 = vpack.c.b16 %v672, %v668
    %v797 = vpack.c.b16 %v673, %v669
    %v798 = vpack.c.b16 %v674, %v670
    %v799 = vpack.c.b16 %v675, %v671
    %v800 = vpack.c.b16 %v680, %v676
    %v801 = vpack.c.b16 %v681, %v677
    %v802 = vpack.c.b16 %v682, %v678
    %v803 = vpack.c.b16 %v683, %v679
    %v804 = vpack.c.b16 %v688, %v684
    %v805 = vpack.c.b16 %v689, %v685
    %v806 = vpack.c.b16 %v690, %v686
    %v807 = vpack.c.b16 %v691, %v687
    %v808 = vpack.c.b16 %v696, %v692
    %v809 = vpack.c.b16 %v697, %v693
    %v810 = vpack.c.b16 %v698, %v694
    %v811 = vpack.c.b16 %v699, %v695
    %v812 = vpack.c.b16 %v704, %v700
    %v813 = vpack.c.b16 %v705, %v701
    %v814 = vpack.c.b16 %v706, %v702
    %v815 = vpack.c.b16 %v707, %v703
    %v816 = vpack.c.b16 %v712, %v708
    %v817 = vpack.c.b16 %v713, %v709
    %v818 = vpack.c.b16 %v714, %v710
    %v819 = vpack.c.b16 %v715, %v711
    %v820 = vpack.c.b16 %v720, %v716
    %v821 = vpack.c.b16 %v721, %v717
    %v822 = vpack.c.b16 %v722, %v718
    %v823 = vpack.c.b16 %v723, %v719
    %v824 = vpack.c.b16 %v728, %v724
    %v825 = vpack.c.b16 %v729, %v725
    %v826 = vpack.c.b16 %v730, %v726
    %v827 = vpack.c.b16 %v731, %v727
    %v828 = vpack.c.b16 %v736, %v732
    %v829 = vpack.c.b16 %v737, %v733
    %v830 = vpack.c.b16 %v738, %v734
    %v831 = vpack.c.b16 %v739, %v735
    %v832 = vpack.c.b16 %v744, %v740
    %v833 = vpack.c.b16 %v745, %v741
    %v834 = vpack.c.b16 %v746, %v742
    %v835 = vpack.c.b16 %v747, %v743
    %v836 = vpack.c.b16 %v752, %v748
    %v837 = vpack.c.b16 %v753, %v749
    %v838 = vpack.c.b16 %v754, %v750
    %v839 = vpack.c.b16 %v755, %v751
    %v840 = vpack.c.b16 %v760, %v756
    %v841 = vpack.c.b16 %v761, %v757
    %v842 = vpack.c.b16 %v762, %v758
    %v843 = vpack.c.b16 %v763, %v759
    %v844 = vpack.c.b16 %v768, %v764
    %v845 = vpack.c.b16 %v769, %v765
    %v846 = vpack.c.b16 %v770, %v766
    %v847 = vpack.c.b16 %v771, %v767
    %v848 = vpack.c.b16 %v776, %v772
    %v849 = vpack.c.b16 %v777, %v773
    %v850 = vpack.c.b16 %v778, %v774
    %v851 = vpack.c.b16 %v779, %v775
    %v852 = vpack.c.b16 %v784, %v780
    %v853 = vpack.c.b16 %v785, %v781
    %v854 = vpack.c.b16 %v786, %v782
    %v855 = vpack.c.b16 %v787, %v783
    %v856 = vpack.c.b16 %v792, %v788
    %v857 = vpack.c.b16 %v793, %v789
    %v858 = vpack.c.b16 %v794, %v790
    %v859 = vpack.c.b16 %v795, %v791
    %924 = vmatpush.bf16.msra.mxu0 %v824
    %925 = vmatpush.bf16.msra.mxu0 %v820
    %926 = vmatpush.bf16.msra.mxu0 %v816
    %927 = vmatpush.bf16.msra.mxu0 %v812
    %928 = vmatpush.bf16.msra.mxu0 %v808
    %929 = vmatpush.bf16.msra.mxu0 %v804
    %930 = vmatpush.bf16.msra.mxu0 %v800
    %931 = vmatpush.bf16.msra.mxu0 %v796
    %932 = vmatmul.bf16.gmra.mxu0 %v528
    %v933 = vpop.f32.mrf.mxu0
    %v934 = vadd.f32 %v596, %v933
    %v935 = vpop.f32.mrf.mxu0
    %936 = vdwg.mxu0
    %937 = vmatpush.bf16.msra.mxu0 %v856
    %938 = vmatpush.bf16.msra.mxu0 %v852
    %939 = vmatpush.bf16.msra.mxu0 %v848
    %940 = vmatpush.bf16.msra.mxu0 %v844
    %941 = vmatpush.bf16.msra.mxu0 %v840
    %942 = vmatpush.bf16.msra.mxu0 %v836
    %943 = vmatpush.bf16.msra.mxu0 %v832
    %944 = vmatpush.bf16.msra.mxu0 %v828
    %945 = vmatmul.bf16.gmra.mxu0 %v529
    %v946 = vpop.f32.mrf.mxu0
    %v947 = vadd.f32 %v934, %v946
    %v948 = vpop.f32.mrf.mxu0
    %949 = vdwg.mxu0
    %950 = vmatpush.bf16.msra.mxu0 %v825
    %951 = vmatpush.bf16.msra.mxu0 %v821
    %952 = vmatpush.bf16.msra.mxu0 %v817
    %953 = vmatpush.bf16.msra.mxu0 %v813
    %954 = vmatpush.bf16.msra.mxu0 %v809
    %955 = vmatpush.bf16.msra.mxu0 %v805
    %956 = vmatpush.bf16.msra.mxu0 %v801
    %957 = vmatpush.bf16.msra.mxu0 %v797
    %958 = vmatmul.bf16.gmra.mxu0 %v528
    %v959 = vpop.f32.mrf.mxu0
    %v960 = vadd.f32 %v597, %v959
    %v961 = vpop.f32.mrf.mxu0
    %962 = vdwg.mxu0
    %963 = vmatpush.bf16.msra.mxu0 %v857
    %964 = vmatpush.bf16.msra.mxu0 %v853
    %965 = vmatpush.bf16.msra.mxu0 %v849
    %966 = vmatpush.bf16.msra.mxu0 %v845
    %967 = vmatpush.bf16.msra.mxu0 %v841
    %968 = vmatpush.bf16.msra.mxu0 %v837
    %969 = vmatpush.bf16.msra.mxu0 %v833
    %970 = vmatpush.bf16.msra.mxu0 %v829
    %971 = vmatmul.bf16.gmra.mxu0 %v529
    %v972 = vpop.f32.mrf.mxu0
    %v973 = vadd.f32 %v960, %v972
    %v974 = vpop.f32.mrf.mxu0
    %975 = vdwg.mxu0
    %976 = vmatpush.bf16.msra.mxu0 %v826
    %977 = vmatpush.bf16.msra.mxu0 %v822
    %978 = vmatpush.bf16.msra.mxu0 %v818
    %979 = vmatpush.bf16.msra.mxu0 %v814
    %980 = vmatpush.bf16.msra.mxu0 %v810
    %981 = vmatpush.bf16.msra.mxu0 %v806
    %982 = vmatpush.bf16.msra.mxu0 %v802
    %983 = vmatpush.bf16.msra.mxu0 %v798
    %984 = vmatmul.bf16.gmra.mxu0 %v528
    %v985 = vpop.f32.mrf.mxu0
    %v986 = vadd.f32 %v598, %v985
    %v987 = vpop.f32.mrf.mxu0
    %988 = vdwg.mxu0
    %989 = vmatpush.bf16.msra.mxu0 %v858
    %990 = vmatpush.bf16.msra.mxu0 %v854
    %991 = vmatpush.bf16.msra.mxu0 %v850
    %992 = vmatpush.bf16.msra.mxu0 %v846
    %993 = vmatpush.bf16.msra.mxu0 %v842
    %994 = vmatpush.bf16.msra.mxu0 %v838
    %995 = vmatpush.bf16.msra.mxu0 %v834
    %996 = vmatpush.bf16.msra.mxu0 %v830
    %997 = vmatmul.bf16.gmra.mxu0 %v529
    %v998 = vpop.f32.mrf.mxu0
    %v999 = vadd.f32 %v986, %v998
    %v1000 = vpop.f32.mrf.mxu0
    %1001 = vdwg.mxu0
    %1002 = vmatpush.bf16.msra.mxu0 %v827
    %1003 = vmatpush.bf16.msra.mxu0 %v823
    %1004 = vmatpush.bf16.msra.mxu0 %v819
    %1005 = vmatpush.bf16.msra.mxu0 %v815
    %1006 = vmatpush.bf16.msra.mxu0 %v811
    %1007 = vmatpush.bf16.msra.mxu0 %v807
    %1008 = vmatpush.bf16.msra.mxu0 %v803
    %1009 = vmatpush.bf16.msra.mxu0 %v799
    %1010 = vmatmul.bf16.gmra.mxu0 %v528
    %v1011 = vpop.f32.mrf.mxu0
    %v1012 = vadd.f32 %v599, %v1011
    %v1013 = vpop.f32.mrf.mxu0
    %1014 = vdwg.mxu0
    %1015 = vmatpush.bf16.msra.mxu0 %v859
    %1016 = vmatpush.bf16.msra.mxu0 %v855
    %1017 = vmatpush.bf16.msra.mxu0 %v851
    %1018 = vmatpush.bf16.msra.mxu0 %v847
    %1019 = vmatpush.bf16.msra.mxu0 %v843
    %1020 = vmatpush.bf16.msra.mxu0 %v839
    %1021 = vmatpush.bf16.msra.mxu0 %v835
    %1022 = vmatpush.bf16.msra.mxu0 %v831
    %1023 = vmatmul.bf16.gmra.mxu0 %v529
    %v1024 = vpop.f32.mrf.mxu0
    %v1025 = vadd.f32 %v1012, %v1024
    %v1026 = vpop.f32.mrf.mxu0
    %1027 = vdwg.mxu0
    %v1028 = vsel %vm440, %v947, 0.0
    %v1029 = vrot.slane %v1028, 4
    %v1030 = vadd.f32 %v1028, %v1029
    %v1031 = vrot.slane %v1030, 2
    %v1032 = vadd.f32 %v1030, %v1031
    %v1033 = vrot.slane %v1032, 1
    %v1034 = vadd.f32 %v1032, %v1033
    %v1035 = vsel %vm440, %v973, 0.0
    %v1036 = vrot.slane %v1035, 4
    %v1037 = vadd.f32 %v1035, %v1036
    %v1038 = vrot.slane %v1037, 2
    %v1039 = vadd.f32 %v1037, %v1038
    %v1040 = vrot.slane %v1039, 1
    %v1041 = vadd.f32 %v1039, %v1040
    %v1042 = vsel %vm440, %v999, 0.0
    %v1043 = vrot.slane %v1042, 4
    %v1044 = vadd.f32 %v1042, %v1043
    %v1045 = vrot.slane %v1044, 2
    %v1046 = vadd.f32 %v1044, %v1045
    %v1047 = vrot.slane %v1046, 1
    %v1048 = vadd.f32 %v1046, %v1047
    %v1049 = vsel %vm440, %v1025, 0.0
    %v1050 = vrot.slane %v1049, 4
    %v1051 = vadd.f32 %v1049, %v1050
    %v1052 = vrot.slane %v1051, 2
    %v1053 = vadd.f32 %v1051, %v1052
    %v1054 = vrot.slane %v1053, 1
    %v1055 = vadd.f32 %v1053, %v1054
    %v1056 = vmul.f32 %v1034, %v461
    %v1057 = vmul.f32 %v1041, %v461
    %v1058 = vmul.f32 %v1048, %v461
    %v1059 = vmul.f32 %v1055, %v461
    %v1060 = vsub.f32 %v947, %v1056
    %v1061 = vsub.f32 %v973, %v1057
    %v1062 = vsub.f32 %v999, %v1058
    %v1063 = vsub.f32 %v1025, %v1059
    %v1064 = vmul.f32 %v1060, %v1060
    %v1065 = vmul.f32 %v1061, %v1061
    %v1066 = vmul.f32 %v1062, %v1062
    %v1067 = vmul.f32 %v1063, %v1063
    %v1068 = vsel %vm440, %v1064, 0.0
    %v1069 = vrot.slane %v1068, 4
    %v1070 = vadd.f32 %v1068, %v1069
    %v1071 = vrot.slane %v1070, 2
    %v1072 = vadd.f32 %v1070, %v1071
    %v1073 = vrot.slane %v1072, 1
    %v1074 = vadd.f32 %v1072, %v1073
    %v1075 = vsel %vm440, %v1065, 0.0
    %v1076 = vrot.slane %v1075, 4
    %v1077 = vadd.f32 %v1075, %v1076
    %v1078 = vrot.slane %v1077, 2
    %v1079 = vadd.f32 %v1077, %v1078
    %v1080 = vrot.slane %v1079, 1
    %v1081 = vadd.f32 %v1079, %v1080
    %v1082 = vsel %vm440, %v1066, 0.0
    %v1083 = vrot.slane %v1082, 4
    %v1084 = vadd.f32 %v1082, %v1083
    %v1085 = vrot.slane %v1084, 2
    %v1086 = vadd.f32 %v1084, %v1085
    %v1087 = vrot.slane %v1086, 1
    %v1088 = vadd.f32 %v1086, %v1087
    %v1089 = vsel %vm440, %v1067, 0.0
    %v1090 = vrot.slane %v1089, 4
    %v1091 = vadd.f32 %v1089, %v1090
    %v1092 = vrot.slane %v1091, 2
    %v1093 = vadd.f32 %v1091, %v1092
    %v1094 = vrot.slane %v1093, 1
    %v1095 = vadd.f32 %v1093, %v1094
    %v1096 = vmul.f32 %v1074, %v461
    %v1097 = vmul.f32 %v1081, %v461
    %v1098 = vmul.f32 %v1088, %v461
    %v1099 = vmul.f32 %v1095, %v461
    %v1100 = vadd.f32 %v1096, 0.8
    %v1101 = vadd.f32 %v1097, 0.8
    %v1102 = vadd.f32 %v1098, 0.8
    %v1103 = vadd.f32 %v1099, 0.8
    %v1104 = vrsqrt.pop %v1100
    %v1105 = vmul.f32 %v1104, %v1100
    %v1106 = vmul.f32 %v1105, %v1104
    %v1107 = vmul.f32 0.5, %v1106
    %v1108 = vsub.f32 1.5, %v1107
    %v1109 = vmul.f32 %v1104, %v1108
    %vm1110 = vweird.f32 %v1100
    %vm1111 = vweird.f32 %v1104
    %vm1112 = vmor %vm1110, %vm1111
    %v1113 = vsel %vm1112, %v1104, %v1109
    %v1114 = vrsqrt.pop %v1101
    %v1115 = vmul.f32 %v1114, %v1101
    %v1116 = vmul.f32 %v1115, %v1114
    %v1117 = vmul.f32 0.5, %v1116
    %v1118 = vsub.f32 1.5, %v1117
    %v1119 = vmul.f32 %v1114, %v1118
    %vm1120 = vweird.f32 %v1101
    %vm1121 = vweird.f32 %v1114
    %vm1122 = vmor %vm1120, %vm1121
    %v1123 = vsel %vm1122, %v1114, %v1119
    %v1124 = vrsqrt.pop %v1102
    %v1125 = vmul.f32 %v1124, %v1102
    %v1126 = vmul.f32 %v1125, %v1124
    %v1127 = vmul.f32 0.5, %v1126
    %v1128 = vsub.f32 1.5, %v1127
    %v1129 = vmul.f32 %v1124, %v1128
    %vm1130 = vweird.f32 %v1102
    %vm1131 = vweird.f32 %v1124
    %vm1132 = vmor %vm1130, %vm1131
    %v1133 = vsel %vm1132, %v1124, %v1129
    %v1134 = vrsqrt.pop %v1103
    %v1135 = vmul.f32 %v1134, %v1103
    %v1136 = vmul.f32 %v1135, %v1134
    %v1137 = vmul.f32 0.5, %v1136
    %v1138 = vsub.f32 1.5, %v1137
    %v1139 = vmul.f32 %v1134, %v1138
    %vm1140 = vweird.f32 %v1103
    %vm1141 = vweird.f32 %v1134
    %vm1142 = vmor %vm1140, %vm1141
    %v1143 = vsel %vm1142, %v1134, %v1139
    %v1144 = vmul.f32 %v1060, %v1113
    %v1145 = vmul.f32 %v1061, %v1123
    %v1146 = vmul.f32 %v1062, %v1133
    %v1147 = vmul.f32 %v1063, %v1143
    %v1148 = vld [vmem:[#allocation15] sm:$0xf]
    %v1150 = vperm.slane %v1148, 0
    %v1151 = vperm.slane %v1148, 1
    %v1152 = vperm.slane %v1148, 2
    %v1153 = vperm.slane %v1148, 3
    %v1158 = vmul.f32 %v1144, %v1150
    %v1159 = vmul.f32 %v1145, %v1151
    %v1160 = vmul.f32 %v1146, %v1152
    %v1161 = vmul.f32 %v1147, %v1153
    %v1162 = vld [vmem:[#allocation16] sm:$0xf]
    %v1164 = vperm.slane %v1162, 0
    %v1165 = vperm.slane %v1162, 1
    %v1166 = vperm.slane %v1162, 2
    %v1167 = vperm.slane %v1162, 3
    %v1172 = vadd.f32 %v1158, %v1164
    %v1173 = vadd.f32 %v1159, %v1165
    %v1174 = vadd.f32 %v1160, %v1166
    %v1175 = vadd.f32 %v1161, %v1167
    %v1176 = vmul.f32 %v1172, 0.2
    %v1177 = vmul.f32 %v1173, 0.2
    %v1178 = vmul.f32 %v1174, 0.2
    %v1179 = vmul.f32 %v1175, 0.2
    %v1180 = vmax.f32 %v1172, %v1176
    %v1181 = vmax.f32 %v1173, %v1177
    %v1182 = vmax.f32 %v1174, %v1178
    %v1183 = vmax.f32 %v1175, %v1179
    %v1184 = vpack.c.bf16 %v1180, %v1180
    %v1185 = vpack.c.bf16 %v1181, %v1181
    %v1186 = vpack.c.bf16 %v1182, %v1182
    %v1187 = vpack.c.bf16 %v1183, %v1183
    %v1188 = vld [vmem:[#allocation18] sm:$0xff]
    %v1189 = vld [vmem:[#allocation18 + $0x8] sm:$0xff]
    %v1190 = vld [vmem:[#allocation18 + $0x10] sm:$0xff]
    %v1191 = vld [vmem:[#allocation18 + $0x18] sm:$0xff]
    %v1192 = vld [vmem:[#allocation18 + $0x20] sm:$0xff]
    %v1193 = vld [vmem:[#allocation18 + $0x28] sm:$0xff]
    %v1194 = vld [vmem:[#allocation18 + $0x30] sm:$0xff]
    %v1195 = vld [vmem:[#allocation18 + $0x38] sm:$0xff]
    %v1196 = vld [vmem:[#allocation18 + $0x40] sm:$0xff]
    %v1197 = vld [vmem:[#allocation18 + $0x48] sm:$0xff]
    %v1198 = vld [vmem:[#allocation18 + $0x50] sm:$0xff]
    %v1199 = vld [vmem:[#allocation18 + $0x58] sm:$0xff]
    %v1200 = vld [vmem:[#allocation18 + $0x60] sm:$0xff]
    %v1201 = vld [vmem:[#allocation18 + $0x68] sm:$0xff]
    %v1202 = vld [vmem:[#allocation18 + $0x70] sm:$0xff]
    %v1203 = vld [vmem:[#allocation18 + $0x78] sm:$0xff]
    %v1204 = vld [vmem:[#allocation18 + $0x80] sm:$0xff]
    %v1205 = vld [vmem:[#allocation18 + $0x88] sm:$0xff]
    %v1206 = vld [vmem:[#allocation18 + $0x90] sm:$0xff]
    %v1207 = vld [vmem:[#allocation18 + $0x98] sm:$0xff]
    %v1208 = vld [vmem:[#allocation18 + $0xa0] sm:$0xff]
    %v1209 = vld [vmem:[#allocation18 + $0xa8] sm:$0xff]
    %v1210 = vld [vmem:[#allocation18 + $0xb0] sm:$0xff]
    %v1211 = vld [vmem:[#allocation18 + $0xb8] sm:$0xff]
    %v1212 = vld [vmem:[#allocation18 + $0xc0] sm:$0xff]
    %v1213 = vld [vmem:[#allocation18 + $0xc8] sm:$0xff]
    %v1214 = vld [vmem:[#allocation18 + $0xd0] sm:$0xff]
    %v1215 = vld [vmem:[#allocation18 + $0xd8] sm:$0xff]
    %v1216 = vld [vmem:[#allocation18 + $0xe0] sm:$0xff]
    %v1217 = vld [vmem:[#allocation18 + $0xe8] sm:$0xff]
    %v1218 = vld [vmem:[#allocation18 + $0xf0] sm:$0xff]
    %v1219 = vld [vmem:[#allocation18 + $0xf8] sm:$0xff]
    %v1220 = vld [vmem:[#allocation18 + $0x100] sm:$0xff]
    %v1221 = vld [vmem:[#allocation18 + $0x108] sm:$0xff]
    %v1222 = vld [vmem:[#allocation18 + $0x110] sm:$0xff]
    %v1223 = vld [vmem:[#allocation18 + $0x118] sm:$0xff]
    %v1224 = vld [vmem:[#allocation18 + $0x120] sm:$0xff]
    %v1225 = vld [vmem:[#allocation18 + $0x128] sm:$0xff]
    %v1226 = vld [vmem:[#allocation18 + $0x130] sm:$0xff]
    %v1227 = vld [vmem:[#allocation18 + $0x138] sm:$0xff]
    %v1228 = vld [vmem:[#allocation18 + $0x140] sm:$0xff]
    %v1229 = vld [vmem:[#allocation18 + $0x148] sm:$0xff]
    %v1230 = vld [vmem:[#allocation18 + $0x150] sm:$0xff]
    %v1231 = vld [vmem:[#allocation18 + $0x158] sm:$0xff]
    %v1232 = vld [vmem:[#allocation18 + $0x160] sm:$0xff]
    %v1233 = vld [vmem:[#allocation18 + $0x168] sm:$0xff]
    %v1234 = vld [vmem:[#allocation18 + $0x170] sm:$0xff]
    %v1235 = vld [vmem:[#allocation18 + $0x178] sm:$0xff]
    %v1236 = vld [vmem:[#allocation18 + $0x180] sm:$0xff]
    %v1237 = vld [vmem:[#allocation18 + $0x188] sm:$0xff]
    %v1238 = vld [vmem:[#allocation18 + $0x190] sm:$0xff]
    %v1239 = vld [vmem:[#allocation18 + $0x198] sm:$0xff]
    %v1240 = vld [vmem:[#allocation18 + $0x1a0] sm:$0xff]
    %v1241 = vld [vmem:[#allocation18 + $0x1a8] sm:$0xff]
    %v1242 = vld [vmem:[#allocation18 + $0x1b0] sm:$0xff]
    %v1243 = vld [vmem:[#allocation18 + $0x1b8] sm:$0xff]
    %v1244 = vld [vmem:[#allocation18 + $0x1c0] sm:$0xff]
    %v1245 = vld [vmem:[#allocation18 + $0x1c8] sm:$0xff]
    %v1246 = vld [vmem:[#allocation18 + $0x1d0] sm:$0xff]
    %v1247 = vld [vmem:[#allocation18 + $0x1d8] sm:$0xff]
    %v1248 = vld [vmem:[#allocation18 + $0x1e0] sm:$0xff]
    %v1249 = vld [vmem:[#allocation18 + $0x1e8] sm:$0xff]
    %v1250 = vld [vmem:[#allocation18 + $0x1f0] sm:$0xff]
    %v1251 = vld [vmem:[#allocation18 + $0x1f8] sm:$0xff]
    %v1252 = vld [vmem:[#allocation18 + $0x200] sm:$0xff]
    %v1253 = vld [vmem:[#allocation18 + $0x208] sm:$0xff]
    %v1254 = vld [vmem:[#allocation18 + $0x210] sm:$0xff]
    %v1255 = vld [vmem:[#allocation18 + $0x218] sm:$0xff]
    %v1256 = vld [vmem:[#allocation18 + $0x220] sm:$0xff]
    %v1257 = vld [vmem:[#allocation18 + $0x228] sm:$0xff]
    %v1258 = vld [vmem:[#allocation18 + $0x230] sm:$0xff]
    %v1259 = vld [vmem:[#allocation18 + $0x238] sm:$0xff]
    %v1260 = vld [vmem:[#allocation18 + $0x240] sm:$0xff]
    %v1261 = vld [vmem:[#allocation18 + $0x248] sm:$0xff]
    %v1262 = vld [vmem:[#allocation18 + $0x250] sm:$0xff]
    %v1263 = vld [vmem:[#allocation18 + $0x258] sm:$0xff]
    %v1264 = vld [vmem:[#allocation18 + $0x260] sm:$0xff]
    %v1265 = vld [vmem:[#allocation18 + $0x268] sm:$0xff]
    %v1266 = vld [vmem:[#allocation18 + $0x270] sm:$0xff]
    %v1267 = vld [vmem:[#allocation18 + $0x278] sm:$0xff]
    %v1268 = vld [vmem:[#allocation18 + $0x280] sm:$0xff]
    %v1269 = vld [vmem:[#allocation18 + $0x288] sm:$0xff]
    %v1270 = vld [vmem:[#allocation18 + $0x290] sm:$0xff]
    %v1271 = vld [vmem:[#allocation18 + $0x298] sm:$0xff]
    %v1272 = vld [vmem:[#allocation18 + $0x2a0] sm:$0xff]
    %v1273 = vld [vmem:[#allocation18 + $0x2a8] sm:$0xff]
    %v1274 = vld [vmem:[#allocation18 + $0x2b0] sm:$0xff]
    %v1275 = vld [vmem:[#allocation18 + $0x2b8] sm:$0xff]
    %v1276 = vld [vmem:[#allocation18 + $0x2c0] sm:$0xff]
    %v1277 = vld [vmem:[#allocation18 + $0x2c8] sm:$0xff]
    %v1278 = vld [vmem:[#allocation18 + $0x2d0] sm:$0xff]
    %v1279 = vld [vmem:[#allocation18 + $0x2d8] sm:$0xff]
    %v1280 = vld [vmem:[#allocation18 + $0x2e0] sm:$0xff]
    %v1281 = vld [vmem:[#allocation18 + $0x2e8] sm:$0xff]
    %v1282 = vld [vmem:[#allocation18 + $0x2f0] sm:$0xff]
    %v1283 = vld [vmem:[#allocation18 + $0x2f8] sm:$0xff]
    %v1284 = vld [vmem:[#allocation18 + $0x300] sm:$0xff]
    %v1285 = vld [vmem:[#allocation18 + $0x308] sm:$0xff]
    %v1286 = vld [vmem:[#allocation18 + $0x310] sm:$0xff]
    %v1287 = vld [vmem:[#allocation18 + $0x318] sm:$0xff]
    %v1288 = vld [vmem:[#allocation18 + $0x320] sm:$0xff]
    %v1289 = vld [vmem:[#allocation18 + $0x328] sm:$0xff]
    %v1290 = vld [vmem:[#allocation18 + $0x330] sm:$0xff]
    %v1291 = vld [vmem:[#allocation18 + $0x338] sm:$0xff]
    %v1292 = vld [vmem:[#allocation18 + $0x340] sm:$0xff]
    %v1293 = vld [vmem:[#allocation18 + $0x348] sm:$0xff]
    %v1294 = vld [vmem:[#allocation18 + $0x350] sm:$0xff]
    %v1295 = vld [vmem:[#allocation18 + $0x358] sm:$0xff]
    %v1296 = vld [vmem:[#allocation18 + $0x360] sm:$0xff]
    %v1297 = vld [vmem:[#allocation18 + $0x368] sm:$0xff]
    %v1298 = vld [vmem:[#allocation18 + $0x370] sm:$0xff]
    %v1299 = vld [vmem:[#allocation18 + $0x378] sm:$0xff]
    %v1300 = vld [vmem:[#allocation18 + $0x380] sm:$0xff]
    %v1301 = vld [vmem:[#allocation18 + $0x388] sm:$0xff]
    %v1302 = vld [vmem:[#allocation18 + $0x390] sm:$0xff]
    %v1303 = vld [vmem:[#allocation18 + $0x398] sm:$0xff]
    %v1304 = vld [vmem:[#allocation18 + $0x3a0] sm:$0xff]
    %v1305 = vld [vmem:[#allocation18 + $0x3a8] sm:$0xff]
    %v1306 = vld [vmem:[#allocation18 + $0x3b0] sm:$0xff]
    %v1307 = vld [vmem:[#allocation18 + $0x3b8] sm:$0xff]
    %v1308 = vld [vmem:[#allocation18 + $0x3c0] sm:$0xff]
    %v1309 = vld [vmem:[#allocation18 + $0x3c8] sm:$0xff]
    %v1310 = vld [vmem:[#allocation18 + $0x3d0] sm:$0xff]
    %v1311 = vld [vmem:[#allocation18 + $0x3d8] sm:$0xff]
    %v1312 = vld [vmem:[#allocation18 + $0x3e0] sm:$0xff]
    %v1313 = vld [vmem:[#allocation18 + $0x3e8] sm:$0xff]
    %v1314 = vld [vmem:[#allocation18 + $0x3f0] sm:$0xff]
    %v1315 = vld [vmem:[#allocation18 + $0x3f8] sm:$0xff]
    %v1316 = vld [vmem:[#allocation18 + $0x400] sm:$0xff]
    %v1317 = vld [vmem:[#allocation18 + $0x408] sm:$0xff]
    %v1318 = vld [vmem:[#allocation18 + $0x410] sm:$0xff]
    %v1319 = vld [vmem:[#allocation18 + $0x418] sm:$0xff]
    %v1320 = vld [vmem:[#allocation18 + $0x420] sm:$0xff]
    %v1321 = vld [vmem:[#allocation18 + $0x428] sm:$0xff]
    %v1322 = vld [vmem:[#allocation18 + $0x430] sm:$0xff]
    %v1323 = vld [vmem:[#allocation18 + $0x438] sm:$0xff]
    %v1324 = vld [vmem:[#allocation18 + $0x440] sm:$0xff]
    %v1325 = vld [vmem:[#allocation18 + $0x448] sm:$0xff]
    %v1326 = vld [vmem:[#allocation18 + $0x450] sm:$0xff]
    %v1327 = vld [vmem:[#allocation18 + $0x458] sm:$0xff]
    %v1328 = vld [vmem:[#allocation18 + $0x460] sm:$0xff]
    %v1329 = vld [vmem:[#allocation18 + $0x468] sm:$0xff]
    %v1330 = vld [vmem:[#allocation18 + $0x470] sm:$0xff]
    %v1331 = vld [vmem:[#allocation18 + $0x478] sm:$0xff]
    %v1332 = vld [vmem:[#allocation18 + $0x480] sm:$0xff]
    %v1333 = vld [vmem:[#allocation18 + $0x488] sm:$0xff]
    %v1334 = vld [vmem:[#allocation18 + $0x490] sm:$0xff]
    %v1335 = vld [vmem:[#allocation18 + $0x498] sm:$0xff]
    %v1336 = vld [vmem:[#allocation18 + $0x4a0] sm:$0xff]
    %v1337 = vld [vmem:[#allocation18 + $0x4a8] sm:$0xff]
    %v1338 = vld [vmem:[#allocation18 + $0x4b0] sm:$0xff]
    %v1339 = vld [vmem:[#allocation18 + $0x4b8] sm:$0xff]
    %v1340 = vld [vmem:[#allocation18 + $0x4c0] sm:$0xff]
    %v1341 = vld [vmem:[#allocation18 + $0x4c8] sm:$0xff]
    %v1342 = vld [vmem:[#allocation18 + $0x4d0] sm:$0xff]
    %v1343 = vld [vmem:[#allocation18 + $0x4d8] sm:$0xff]
    %v1344 = vld [vmem:[#allocation18 + $0x4e0] sm:$0xff]
    %v1345 = vld [vmem:[#allocation18 + $0x4e8] sm:$0xff]
    %v1346 = vld [vmem:[#allocation18 + $0x4f0] sm:$0xff]
    %v1347 = vld [vmem:[#allocation18 + $0x4f8] sm:$0xff]
    %v1348 = vld [vmem:[#allocation18 + $0x500] sm:$0xff]
    %v1349 = vld [vmem:[#allocation18 + $0x508] sm:$0xff]
    %v1350 = vld [vmem:[#allocation18 + $0x510] sm:$0xff]
    %v1351 = vld [vmem:[#allocation18 + $0x518] sm:$0xff]
    %v1352 = vld [vmem:[#allocation18 + $0x520] sm:$0xff]
    %v1353 = vld [vmem:[#allocation18 + $0x528] sm:$0xff]
    %v1354 = vld [vmem:[#allocation18 + $0x530] sm:$0xff]
    %v1355 = vld [vmem:[#allocation18 + $0x538] sm:$0xff]
    %v1356 = vld [vmem:[#allocation18 + $0x540] sm:$0xff]
    %v1357 = vld [vmem:[#allocation18 + $0x548] sm:$0xff]
    %v1358 = vld [vmem:[#allocation18 + $0x550] sm:$0xff]
    %v1359 = vld [vmem:[#allocation18 + $0x558] sm:$0xff]
    %v1360 = vld [vmem:[#allocation18 + $0x560] sm:$0xff]
    %v1361 = vld [vmem:[#allocation18 + $0x568] sm:$0xff]
    %v1362 = vld [vmem:[#allocation18 + $0x570] sm:$0xff]
    %v1363 = vld [vmem:[#allocation18 + $0x578] sm:$0xff]
    %v1364 = vld [vmem:[#allocation18 + $0x580] sm:$0xff]
    %v1365 = vld [vmem:[#allocation18 + $0x588] sm:$0xff]
    %v1366 = vld [vmem:[#allocation18 + $0x590] sm:$0xff]
    %v1367 = vld [vmem:[#allocation18 + $0x598] sm:$0xff]
    %v1368 = vld [vmem:[#allocation18 + $0x5a0] sm:$0xff]
    %v1369 = vld [vmem:[#allocation18 + $0x5a8] sm:$0xff]
    %v1370 = vld [vmem:[#allocation18 + $0x5b0] sm:$0xff]
    %v1371 = vld [vmem:[#allocation18 + $0x5b8] sm:$0xff]
    %v1372 = vld [vmem:[#allocation18 + $0x5c0] sm:$0xff]
    %v1373 = vld [vmem:[#allocation18 + $0x5c8] sm:$0xff]
    %v1374 = vld [vmem:[#allocation18 + $0x5d0] sm:$0xff]
    %v1375 = vld [vmem:[#allocation18 + $0x5d8] sm:$0xff]
    %v1376 = vld [vmem:[#allocation18 + $0x5e0] sm:$0xff]
    %v1377 = vld [vmem:[#allocation18 + $0x5e8] sm:$0xff]
    %v1378 = vld [vmem:[#allocation18 + $0x5f0] sm:$0xff]
    %v1379 = vld [vmem:[#allocation18 + $0x5f8] sm:$0xff]
    %v1380 = vld [vmem:[#allocation18 + $0x600] sm:$0xff]
    %v1381 = vld [vmem:[#allocation18 + $0x608] sm:$0xff]
    %v1382 = vld [vmem:[#allocation18 + $0x610] sm:$0xff]
    %v1383 = vld [vmem:[#allocation18 + $0x618] sm:$0xff]
    %v1384 = vld [vmem:[#allocation18 + $0x620] sm:$0xff]
    %v1385 = vld [vmem:[#allocation18 + $0x628] sm:$0xff]
    %v1386 = vld [vmem:[#allocation18 + $0x630] sm:$0xff]
    %v1387 = vld [vmem:[#allocation18 + $0x638] sm:$0xff]
    %v1388 = vld [vmem:[#allocation18 + $0x640] sm:$0xff]
    %v1389 = vld [vmem:[#allocation18 + $0x648] sm:$0xff]
    %v1390 = vld [vmem:[#allocation18 + $0x650] sm:$0xff]
    %v1391 = vld [vmem:[#allocation18 + $0x658] sm:$0xff]
    %v1392 = vld [vmem:[#allocation18 + $0x660] sm:$0xff]
    %v1393 = vld [vmem:[#allocation18 + $0x668] sm:$0xff]
    %v1394 = vld [vmem:[#allocation18 + $0x670] sm:$0xff]
    %v1395 = vld [vmem:[#allocation18 + $0x678] sm:$0xff]
    %v1396 = vld [vmem:[#allocation18 + $0x680] sm:$0xff]
    %v1397 = vld [vmem:[#allocation18 + $0x688] sm:$0xff]
    %v1398 = vld [vmem:[#allocation18 + $0x690] sm:$0xff]
    %v1399 = vld [vmem:[#allocation18 + $0x698] sm:$0xff]
    %v1400 = vld [vmem:[#allocation18 + $0x6a0] sm:$0xff]
    %v1401 = vld [vmem:[#allocation18 + $0x6a8] sm:$0xff]
    %v1402 = vld [vmem:[#allocation18 + $0x6b0] sm:$0xff]
    %v1403 = vld [vmem:[#allocation18 + $0x6b8] sm:$0xff]
    %v1404 = vld [vmem:[#allocation18 + $0x6c0] sm:$0xff]
    %v1405 = vld [vmem:[#allocation18 + $0x6c8] sm:$0xff]
    %v1406 = vld [vmem:[#allocation18 + $0x6d0] sm:$0xff]
    %v1407 = vld [vmem:[#allocation18 + $0x6d8] sm:$0xff]
    %v1408 = vld [vmem:[#allocation18 + $0x6e0] sm:$0xff]
    %v1409 = vld [vmem:[#allocation18 + $0x6e8] sm:$0xff]
    %v1410 = vld [vmem:[#allocation18 + $0x6f0] sm:$0xff]
    %v1411 = vld [vmem:[#allocation18 + $0x6f8] sm:$0xff]
    %v1412 = vld [vmem:[#allocation18 + $0x700] sm:$0xff]
    %v1413 = vld [vmem:[#allocation18 + $0x708] sm:$0xff]
    %v1414 = vld [vmem:[#allocation18 + $0x710] sm:$0xff]
    %v1415 = vld [vmem:[#allocation18 + $0x718] sm:$0xff]
    %v1416 = vld [vmem:[#allocation18 + $0x720] sm:$0xff]
    %v1417 = vld [vmem:[#allocation18 + $0x728] sm:$0xff]
    %v1418 = vld [vmem:[#allocation18 + $0x730] sm:$0xff]
    %v1419 = vld [vmem:[#allocation18 + $0x738] sm:$0xff]
    %v1420 = vld [vmem:[#allocation18 + $0x740] sm:$0xff]
    %v1421 = vld [vmem:[#allocation18 + $0x748] sm:$0xff]
    %v1422 = vld [vmem:[#allocation18 + $0x750] sm:$0xff]
    %v1423 = vld [vmem:[#allocation18 + $0x758] sm:$0xff]
    %v1424 = vld [vmem:[#allocation18 + $0x760] sm:$0xff]
    %v1425 = vld [vmem:[#allocation18 + $0x768] sm:$0xff]
    %v1426 = vld [vmem:[#allocation18 + $0x770] sm:$0xff]
    %v1427 = vld [vmem:[#allocation18 + $0x778] sm:$0xff]
    %v1428 = vld [vmem:[#allocation18 + $0x780] sm:$0xff]
    %v1429 = vld [vmem:[#allocation18 + $0x788] sm:$0xff]
    %v1430 = vld [vmem:[#allocation18 + $0x790] sm:$0xff]
    %v1431 = vld [vmem:[#allocation18 + $0x798] sm:$0xff]
    %v1432 = vld [vmem:[#allocation18 + $0x7a0] sm:$0xff]
    %v1433 = vld [vmem:[#allocation18 + $0x7a8] sm:$0xff]
    %v1434 = vld [vmem:[#allocation18 + $0x7b0] sm:$0xff]
    %v1435 = vld [vmem:[#allocation18 + $0x7b8] sm:$0xff]
    %v1436 = vld [vmem:[#allocation18 + $0x7c0] sm:$0xff]
    %v1437 = vld [vmem:[#allocation18 + $0x7c8] sm:$0xff]
    %v1438 = vld [vmem:[#allocation18 + $0x7d0] sm:$0xff]
    %v1439 = vld [vmem:[#allocation18 + $0x7d8] sm:$0xff]
    %v1440 = vld [vmem:[#allocation18 + $0x7e0] sm:$0xff]
    %v1441 = vld [vmem:[#allocation18 + $0x7e8] sm:$0xff]
    %v1442 = vld [vmem:[#allocation18 + $0x7f0] sm:$0xff]
    %v1443 = vld [vmem:[#allocation18 + $0x7f8] sm:$0xff]
    %v1444 = vld [vmem:[#allocation19] sm:$0xff]
    %v1446 = vperm.slane %v1444, 0
    %v1447 = vperm.slane %v1444, 1
    %v1448 = vperm.slane %v1444, 2
    %v1449 = vperm.slane %v1444, 3
    %v1450 = vperm.slane %v1444, 4
    %v1451 = vperm.slane %v1444, 5
    %v1452 = vperm.slane %v1444, 6
    %v1453 = vperm.slane %v1444, 7
    %v1718 = vunpack.c.l.b16 %v1188
    %v1719 = vunpack.c.h.b16 %v1188
    %v1720 = vunpack.c.l.b16 %v1189
    %v1721 = vunpack.c.h.b16 %v1189
    %v1722 = vunpack.c.l.b16 %v1190
    %v1723 = vunpack.c.h.b16 %v1190
    %v1724 = vunpack.c.l.b16 %v1191
    %v1725 = vunpack.c.h.b16 %v1191
    %v1726 = vunpack.c.l.b16 %v1192
    %v1727 = vunpack.c.h.b16 %v1192
    %v1728 = vunpack.c.l.b16 %v1193
    %v1729 = vunpack.c.h.b16 %v1193
    %v1730 = vunpack.c.l.b16 %v1194
    %v1731 = vunpack.c.h.b16 %v1194
    %v1732 = vunpack.c.l.b16 %v1195
    %v1733 = vunpack.c.h.b16 %v1195
    %v1734 = vunpack.c.l.b16 %v1196
    %v1735 = vunpack.c.h.b16 %v1196
    %v1736 = vunpack.c.l.b16 %v1197
    %v1737 = vunpack.c.h.b16 %v1197
    %v1738 = vunpack.c.l.b16 %v1198
    %v1739 = vunpack.c.h.b16 %v1198
    %v1740 = vunpack.c.l.b16 %v1199
    %v1741 = vunpack.c.h.b16 %v1199
    %v1742 = vunpack.c.l.b16 %v1200
    %v1743 = vunpack.c.h.b16 %v1200
    %v1744 = vunpack.c.l.b16 %v1201
    %v1745 = vunpack.c.h.b16 %v1201
    %v1746 = vunpack.c.l.b16 %v1202
    %v1747 = vunpack.c.h.b16 %v1202
    %v1748 = vunpack.c.l.b16 %v1203
    %v1749 = vunpack.c.h.b16 %v1203
    %v1750 = vunpack.c.l.b16 %v1204
    %v1751 = vunpack.c.h.b16 %v1204
    %v1752 = vunpack.c.l.b16 %v1205
    %v1753 = vunpack.c.h.b16 %v1205
    %v1754 = vunpack.c.l.b16 %v1206
    %v1755 = vunpack.c.h.b16 %v1206
    %v1756 = vunpack.c.l.b16 %v1207
    %v1757 = vunpack.c.h.b16 %v1207
    %v1758 = vunpack.c.l.b16 %v1208
    %v1759 = vunpack.c.h.b16 %v1208
    %v1760 = vunpack.c.l.b16 %v1209
    %v1761 = vunpack.c.h.b16 %v1209
    %v1762 = vunpack.c.l.b16 %v1210
    %v1763 = vunpack.c.h.b16 %v1210
    %v1764 = vunpack.c.l.b16 %v1211
    %v1765 = vunpack.c.h.b16 %v1211
    %v1766 = vunpack.c.l.b16 %v1212
    %v1767 = vunpack.c.h.b16 %v1212
    %v1768 = vunpack.c.l.b16 %v1213
    %v1769 = vunpack.c.h.b16 %v1213
    %v1770 = vunpack.c.l.b16 %v1214
    %v1771 = vunpack.c.h.b16 %v1214
    %v1772 = vunpack.c.l.b16 %v1215
    %v1773 = vunpack.c.h.b16 %v1215
    %v1774 = vunpack.c.l.b16 %v1216
    %v1775 = vunpack.c.h.b16 %v1216
    %v1776 = vunpack.c.l.b16 %v1217
    %v1777 = vunpack.c.h.b16 %v1217
    %v1778 = vunpack.c.l.b16 %v1218
    %v1779 = vunpack.c.h.b16 %v1218
    %v1780 = vunpack.c.l.b16 %v1219
    %v1781 = vunpack.c.h.b16 %v1219
    %v1782 = vunpack.c.l.b16 %v1220
    %v1783 = vunpack.c.h.b16 %v1220
    %v1784 = vunpack.c.l.b16 %v1221
    %v1785 = vunpack.c.h.b16 %v1221
    %v1786 = vunpack.c.l.b16 %v1222
    %v1787 = vunpack.c.h.b16 %v1222
    %v1788 = vunpack.c.l.b16 %v1223
    %v1789 = vunpack.c.h.b16 %v1223
    %v1790 = vunpack.c.l.b16 %v1224
    %v1791 = vunpack.c.h.b16 %v1224
    %v1792 = vunpack.c.l.b16 %v1225
    %v1793 = vunpack.c.h.b16 %v1225
    %v1794 = vunpack.c.l.b16 %v1226
    %v1795 = vunpack.c.h.b16 %v1226
    %v1796 = vunpack.c.l.b16 %v1227
    %v1797 = vunpack.c.h.b16 %v1227
    %v1798 = vunpack.c.l.b16 %v1228
    %v1799 = vunpack.c.h.b16 %v1228
    %v1800 = vunpack.c.l.b16 %v1229
    %v1801 = vunpack.c.h.b16 %v1229
    %v1802 = vunpack.c.l.b16 %v1230
    %v1803 = vunpack.c.h.b16 %v1230
    %v1804 = vunpack.c.l.b16 %v1231
    %v1805 = vunpack.c.h.b16 %v1231
    %v1806 = vunpack.c.l.b16 %v1232
    %v1807 = vunpack.c.h.b16 %v1232
    %v1808 = vunpack.c.l.b16 %v1233
    %v1809 = vunpack.c.h.b16 %v1233
    %v1810 = vunpack.c.l.b16 %v1234
    %v1811 = vunpack.c.h.b16 %v1234
    %v1812 = vunpack.c.l.b16 %v1235
    %v1813 = vunpack.c.h.b16 %v1235
    %v1814 = vunpack.c.l.b16 %v1236
    %v1815 = vunpack.c.h.b16 %v1236
    %v1816 = vunpack.c.l.b16 %v1237
    %v1817 = vunpack.c.h.b16 %v1237
    %v1818 = vunpack.c.l.b16 %v1238
    %v1819 = vunpack.c.h.b16 %v1238
    %v1820 = vunpack.c.l.b16 %v1239
    %v1821 = vunpack.c.h.b16 %v1239
    %v1822 = vunpack.c.l.b16 %v1240
    %v1823 = vunpack.c.h.b16 %v1240
    %v1824 = vunpack.c.l.b16 %v1241
    %v1825 = vunpack.c.h.b16 %v1241
    %v1826 = vunpack.c.l.b16 %v1242
    %v1827 = vunpack.c.h.b16 %v1242
    %v1828 = vunpack.c.l.b16 %v1243
    %v1829 = vunpack.c.h.b16 %v1243
    %v1830 = vunpack.c.l.b16 %v1244
    %v1831 = vunpack.c.h.b16 %v1244
    %v1832 = vunpack.c.l.b16 %v1245
    %v1833 = vunpack.c.h.b16 %v1245
    %v1834 = vunpack.c.l.b16 %v1246
    %v1835 = vunpack.c.h.b16 %v1246
    %v1836 = vunpack.c.l.b16 %v1247
    %v1837 = vunpack.c.h.b16 %v1247
    %v1838 = vunpack.c.l.b16 %v1248
    %v1839 = vunpack.c.h.b16 %v1248
    %v1840 = vunpack.c.l.b16 %v1249
    %v1841 = vunpack.c.h.b16 %v1249
    %v1842 = vunpack.c.l.b16 %v1250
    %v1843 = vunpack.c.h.b16 %v1250
    %v1844 = vunpack.c.l.b16 %v1251
    %v1845 = vunpack.c.h.b16 %v1251
    %v1846 = vunpack.c.l.b16 %v1252
    %v1847 = vunpack.c.h.b16 %v1252
    %v1848 = vunpack.c.l.b16 %v1253
    %v1849 = vunpack.c.h.b16 %v1253
    %v1850 = vunpack.c.l.b16 %v1254
    %v1851 = vunpack.c.h.b16 %v1254
    %v1852 = vunpack.c.l.b16 %v1255
    %v1853 = vunpack.c.h.b16 %v1255
    %v1854 = vunpack.c.l.b16 %v1256
    %v1855 = vunpack.c.h.b16 %v1256
    %v1856 = vunpack.c.l.b16 %v1257
    %v1857 = vunpack.c.h.b16 %v1257
    %v1858 = vunpack.c.l.b16 %v1258
    %v1859 = vunpack.c.h.b16 %v1258
    %v1860 = vunpack.c.l.b16 %v1259
    %v1861 = vunpack.c.h.b16 %v1259
    %v1862 = vunpack.c.l.b16 %v1260
    %v1863 = vunpack.c.h.b16 %v1260
    %v1864 = vunpack.c.l.b16 %v1261
    %v1865 = vunpack.c.h.b16 %v1261
    %v1866 = vunpack.c.l.b16 %v1262
    %v1867 = vunpack.c.h.b16 %v1262
    %v1868 = vunpack.c.l.b16 %v1263
    %v1869 = vunpack.c.h.b16 %v1263
    %v1870 = vunpack.c.l.b16 %v1264
    %v1871 = vunpack.c.h.b16 %v1264
    %v1872 = vunpack.c.l.b16 %v1265
    %v1873 = vunpack.c.h.b16 %v1265
    %v1874 = vunpack.c.l.b16 %v1266
    %v1875 = vunpack.c.h.b16 %v1266
    %v1876 = vunpack.c.l.b16 %v1267
    %v1877 = vunpack.c.h.b16 %v1267
    %v1878 = vunpack.c.l.b16 %v1268
    %v1879 = vunpack.c.h.b16 %v1268
    %v1880 = vunpack.c.l.b16 %v1269
    %v1881 = vunpack.c.h.b16 %v1269
    %v1882 = vunpack.c.l.b16 %v1270
    %v1883 = vunpack.c.h.b16 %v1270
    %v1884 = vunpack.c.l.b16 %v1271
    %v1885 = vunpack.c.h.b16 %v1271
    %v1886 = vunpack.c.l.b16 %v1272
    %v1887 = vunpack.c.h.b16 %v1272
    %v1888 = vunpack.c.l.b16 %v1273
    %v1889 = vunpack.c.h.b16 %v1273
    %v1890 = vunpack.c.l.b16 %v1274
    %v1891 = vunpack.c.h.b16 %v1274
    %v1892 = vunpack.c.l.b16 %v1275
    %v1893 = vunpack.c.h.b16 %v1275
    %v1894 = vunpack.c.l.b16 %v1276
    %v1895 = vunpack.c.h.b16 %v1276
    %v1896 = vunpack.c.l.b16 %v1277
    %v1897 = vunpack.c.h.b16 %v1277
    %v1898 = vunpack.c.l.b16 %v1278
    %v1899 = vunpack.c.h.b16 %v1278
    %v1900 = vunpack.c.l.b16 %v1279
    %v1901 = vunpack.c.h.b16 %v1279
    %v1902 = vunpack.c.l.b16 %v1280
    %v1903 = vunpack.c.h.b16 %v1280
    %v1904 = vunpack.c.l.b16 %v1281
    %v1905 = vunpack.c.h.b16 %v1281
    %v1906 = vunpack.c.l.b16 %v1282
    %v1907 = vunpack.c.h.b16 %v1282
    %v1908 = vunpack.c.l.b16 %v1283
    %v1909 = vunpack.c.h.b16 %v1283
    %v1910 = vunpack.c.l.b16 %v1284
    %v1911 = vunpack.c.h.b16 %v1284
    %v1912 = vunpack.c.l.b16 %v1285
    %v1913 = vunpack.c.h.b16 %v1285
    %v1914 = vunpack.c.l.b16 %v1286
    %v1915 = vunpack.c.h.b16 %v1286
    %v1916 = vunpack.c.l.b16 %v1287
    %v1917 = vunpack.c.h.b16 %v1287
    %v1918 = vunpack.c.l.b16 %v1288
    %v1919 = vunpack.c.h.b16 %v1288
    %v1920 = vunpack.c.l.b16 %v1289
    %v1921 = vunpack.c.h.b16 %v1289
    %v1922 = vunpack.c.l.b16 %v1290
    %v1923 = vunpack.c.h.b16 %v1290
    %v1924 = vunpack.c.l.b16 %v1291
    %v1925 = vunpack.c.h.b16 %v1291
    %v1926 = vunpack.c.l.b16 %v1292
    %v1927 = vunpack.c.h.b16 %v1292
    %v1928 = vunpack.c.l.b16 %v1293
    %v1929 = vunpack.c.h.b16 %v1293
    %v1930 = vunpack.c.l.b16 %v1294
    %v1931 = vunpack.c.h.b16 %v1294
    %v1932 = vunpack.c.l.b16 %v1295
    %v1933 = vunpack.c.h.b16 %v1295
    %v1934 = vunpack.c.l.b16 %v1296
    %v1935 = vunpack.c.h.b16 %v1296
    %v1936 = vunpack.c.l.b16 %v1297
    %v1937 = vunpack.c.h.b16 %v1297
    %v1938 = vunpack.c.l.b16 %v1298
    %v1939 = vunpack.c.h.b16 %v1298
    %v1940 = vunpack.c.l.b16 %v1299
    %v1941 = vunpack.c.h.b16 %v1299
    %v1942 = vunpack.c.l.b16 %v1300
    %v1943 = vunpack.c.h.b16 %v1300
    %v1944 = vunpack.c.l.b16 %v1301
    %v1945 = vunpack.c.h.b16 %v1301
    %v1946 = vunpack.c.l.b16 %v1302
    %v1947 = vunpack.c.h.b16 %v1302
    %v1948 = vunpack.c.l.b16 %v1303
    %v1949 = vunpack.c.h.b16 %v1303
    %v1950 = vunpack.c.l.b16 %v1304
    %v1951 = vunpack.c.h.b16 %v1304
    %v1952 = vunpack.c.l.b16 %v1305
    %v1953 = vunpack.c.h.b16 %v1305
    %v1954 = vunpack.c.l.b16 %v1306
    %v1955 = vunpack.c.h.b16 %v1306
    %v1956 = vunpack.c.l.b16 %v1307
    %v1957 = vunpack.c.h.b16 %v1307
    %v1958 = vunpack.c.l.b16 %v1308
    %v1959 = vunpack.c.h.b16 %v1308
    %v1960 = vunpack.c.l.b16 %v1309
    %v1961 = vunpack.c.h.b16 %v1309
    %v1962 = vunpack.c.l.b16 %v1310
    %v1963 = vunpack.c.h.b16 %v1310
    %v1964 = vunpack.c.l.b16 %v1311
    %v1965 = vunpack.c.h.b16 %v1311
    %v1966 = vunpack.c.l.b16 %v1312
    %v1967 = vunpack.c.h.b16 %v1312
    %v1968 = vunpack.c.l.b16 %v1313
    %v1969 = vunpack.c.h.b16 %v1313
    %v1970 = vunpack.c.l.b16 %v1314
    %v1971 = vunpack.c.h.b16 %v1314
    %v1972 = vunpack.c.l.b16 %v1315
    %v1973 = vunpack.c.h.b16 %v1315
    %v1974 = vunpack.c.l.b16 %v1316
    %v1975 = vunpack.c.h.b16 %v1316
    %v1976 = vunpack.c.l.b16 %v1317
    %v1977 = vunpack.c.h.b16 %v1317
    %v1978 = vunpack.c.l.b16 %v1318
    %v1979 = vunpack.c.h.b16 %v1318
    %v1980 = vunpack.c.l.b16 %v1319
    %v1981 = vunpack.c.h.b16 %v1319
    %v1982 = vunpack.c.l.b16 %v1320
    %v1983 = vunpack.c.h.b16 %v1320
    %v1984 = vunpack.c.l.b16 %v1321
    %v1985 = vunpack.c.h.b16 %v1321
    %v1986 = vunpack.c.l.b16 %v1322
    %v1987 = vunpack.c.h.b16 %v1322
    %v1988 = vunpack.c.l.b16 %v1323
    %v1989 = vunpack.c.h.b16 %v1323
    %v1990 = vunpack.c.l.b16 %v1324
    %v1991 = vunpack.c.h.b16 %v1324
    %v1992 = vunpack.c.l.b16 %v1325
    %v1993 = vunpack.c.h.b16 %v1325
    %v1994 = vunpack.c.l.b16 %v1326
    %v1995 = vunpack.c.h.b16 %v1326
    %v1996 = vunpack.c.l.b16 %v1327
    %v1997 = vunpack.c.h.b16 %v1327
    %v1998 = vunpack.c.l.b16 %v1328
    %v1999 = vunpack.c.h.b16 %v1328
    %v2000 = vunpack.c.l.b16 %v1329
    %v2001 = vunpack.c.h.b16 %v1329
    %v2002 = vunpack.c.l.b16 %v1330
    %v2003 = vunpack.c.h.b16 %v1330
    %v2004 = vunpack.c.l.b16 %v1331
    %v2005 = vunpack.c.h.b16 %v1331
    %v2006 = vunpack.c.l.b16 %v1332
    %v2007 = vunpack.c.h.b16 %v1332
    %v2008 = vunpack.c.l.b16 %v1333
    %v2009 = vunpack.c.h.b16 %v1333
    %v2010 = vunpack.c.l.b16 %v1334
    %v2011 = vunpack.c.h.b16 %v1334
    %v2012 = vunpack.c.l.b16 %v1335
    %v2013 = vunpack.c.h.b16 %v1335
    %v2014 = vunpack.c.l.b16 %v1336
    %v2015 = vunpack.c.h.b16 %v1336
    %v2016 = vunpack.c.l.b16 %v1337
    %v2017 = vunpack.c.h.b16 %v1337
    %v2018 = vunpack.c.l.b16 %v1338
    %v2019 = vunpack.c.h.b16 %v1338
    %v2020 = vunpack.c.l.b16 %v1339
    %v2021 = vunpack.c.h.b16 %v1339
    %v2022 = vunpack.c.l.b16 %v1340
    %v2023 = vunpack.c.h.b16 %v1340
    %v2024 = vunpack.c.l.b16 %v1341
    %v2025 = vunpack.c.h.b16 %v1341
    %v2026 = vunpack.c.l.b16 %v1342
    %v2027 = vunpack.c.h.b16 %v1342
    %v2028 = vunpack.c.l.b16 %v1343
    %v2029 = vunpack.c.h.b16 %v1343
    %v2030 = vunpack.c.l.b16 %v1344
    %v2031 = vunpack.c.h.b16 %v1344
    %v2032 = vunpack.c.l.b16 %v1345
    %v2033 = vunpack.c.h.b16 %v1345
    %v2034 = vunpack.c.l.b16 %v1346
    %v2035 = vunpack.c.h.b16 %v1346
    %v2036 = vunpack.c.l.b16 %v1347
    %v2037 = vunpack.c.h.b16 %v1347
    %v2038 = vunpack.c.l.b16 %v1348
    %v2039 = vunpack.c.h.b16 %v1348
    %v2040 = vunpack.c.l.b16 %v1349
    %v2041 = vunpack.c.h.b16 %v1349
    %v2042 = vunpack.c.l.b16 %v1350
    %v2043 = vunpack.c.h.b16 %v1350
    %v2044 = vunpack.c.l.b16 %v1351
    %v2045 = vunpack.c.h.b16 %v1351
    %v2046 = vunpack.c.l.b16 %v1352
    %v2047 = vunpack.c.h.b16 %v1352
    %v2048 = vunpack.c.l.b16 %v1353
    %v2049 = vunpack.c.h.b16 %v1353
    %v2050 = vunpack.c.l.b16 %v1354
    %v2051 = vunpack.c.h.b16 %v1354
    %v2052 = vunpack.c.l.b16 %v1355
    %v2053 = vunpack.c.h.b16 %v1355
    %v2054 = vunpack.c.l.b16 %v1356
    %v2055 = vunpack.c.h.b16 %v1356
    %v2056 = vunpack.c.l.b16 %v1357
    %v2057 = vunpack.c.h.b16 %v1357
    %v2058 = vunpack.c.l.b16 %v1358
    %v2059 = vunpack.c.h.b16 %v1358
    %v2060 = vunpack.c.l.b16 %v1359
    %v2061 = vunpack.c.h.b16 %v1359
    %v2062 = vunpack.c.l.b16 %v1360
    %v2063 = vunpack.c.h.b16 %v1360
    %v2064 = vunpack.c.l.b16 %v1361
    %v2065 = vunpack.c.h.b16 %v1361
    %v2066 = vunpack.c.l.b16 %v1362
    %v2067 = vunpack.c.h.b16 %v1362
    %v2068 = vunpack.c.l.b16 %v1363
    %v2069 = vunpack.c.h.b16 %v1363
    %v2070 = vunpack.c.l.b16 %v1364
    %v2071 = vunpack.c.h.b16 %v1364
    %v2072 = vunpack.c.l.b16 %v1365
    %v2073 = vunpack.c.h.b16 %v1365
    %v2074 = vunpack.c.l.b16 %v1366
    %v2075 = vunpack.c.h.b16 %v1366
    %v2076 = vunpack.c.l.b16 %v1367
    %v2077 = vunpack.c.h.b16 %v1367
    %v2078 = vunpack.c.l.b16 %v1368
    %v2079 = vunpack.c.h.b16 %v1368
    %v2080 = vunpack.c.l.b16 %v1369
    %v2081 = vunpack.c.h.b16 %v1369
    %v2082 = vunpack.c.l.b16 %v1370
    %v2083 = vunpack.c.h.b16 %v1370
    %v2084 = vunpack.c.l.b16 %v1371
    %v2085 = vunpack.c.h.b16 %v1371
    %v2086 = vunpack.c.l.b16 %v1372
    %v2087 = vunpack.c.h.b16 %v1372
    %v2088 = vunpack.c.l.b16 %v1373
    %v2089 = vunpack.c.h.b16 %v1373
    %v2090 = vunpack.c.l.b16 %v1374
    %v2091 = vunpack.c.h.b16 %v1374
    %v2092 = vunpack.c.l.b16 %v1375
    %v2093 = vunpack.c.h.b16 %v1375
    %v2094 = vunpack.c.l.b16 %v1376
    %v2095 = vunpack.c.h.b16 %v1376
    %v2096 = vunpack.c.l.b16 %v1377
    %v2097 = vunpack.c.h.b16 %v1377
    %v2098 = vunpack.c.l.b16 %v1378
    %v2099 = vunpack.c.h.b16 %v1378
    %v2100 = vunpack.c.l.b16 %v1379
    %v2101 = vunpack.c.h.b16 %v1379
    %v2102 = vunpack.c.l.b16 %v1380
    %v2103 = vunpack.c.h.b16 %v1380
    %v2104 = vunpack.c.l.b16 %v1381
    %v2105 = vunpack.c.h.b16 %v1381
    %v2106 = vunpack.c.l.b16 %v1382
    %v2107 = vunpack.c.h.b16 %v1382
    %v2108 = vunpack.c.l.b16 %v1383
    %v2109 = vunpack.c.h.b16 %v1383
    %v2110 = vunpack.c.l.b16 %v1384
    %v2111 = vunpack.c.h.b16 %v1384
    %v2112 = vunpack.c.l.b16 %v1385
    %v2113 = vunpack.c.h.b16 %v1385
    %v2114 = vunpack.c.l.b16 %v1386
    %v2115 = vunpack.c.h.b16 %v1386
    %v2116 = vunpack.c.l.b16 %v1387
    %v2117 = vunpack.c.h.b16 %v1387
    %v2118 = vunpack.c.l.b16 %v1388
    %v2119 = vunpack.c.h.b16 %v1388
    %v2120 = vunpack.c.l.b16 %v1389
    %v2121 = vunpack.c.h.b16 %v1389
    %v2122 = vunpack.c.l.b16 %v1390
    %v2123 = vunpack.c.h.b16 %v1390
    %v2124 = vunpack.c.l.b16 %v1391
    %v2125 = vunpack.c.h.b16 %v1391
    %v2126 = vunpack.c.l.b16 %v1392
    %v2127 = vunpack.c.h.b16 %v1392
    %v2128 = vunpack.c.l.b16 %v1393
    %v2129 = vunpack.c.h.b16 %v1393
    %v2130 = vunpack.c.l.b16 %v1394
    %v2131 = vunpack.c.h.b16 %v1394
    %v2132 = vunpack.c.l.b16 %v1395
    %v2133 = vunpack.c.h.b16 %v1395
    %v2134 = vunpack.c.l.b16 %v1396
    %v2135 = vunpack.c.h.b16 %v1396
    %v2136 = vunpack.c.l.b16 %v1397
    %v2137 = vunpack.c.h.b16 %v1397
    %v2138 = vunpack.c.l.b16 %v1398
    %v2139 = vunpack.c.h.b16 %v1398
    %v2140 = vunpack.c.l.b16 %v1399
    %v2141 = vunpack.c.h.b16 %v1399
    %v2142 = vunpack.c.l.b16 %v1400
    %v2143 = vunpack.c.h.b16 %v1400
    %v2144 = vunpack.c.l.b16 %v1401
    %v2145 = vunpack.c.h.b16 %v1401
    %v2146 = vunpack.c.l.b16 %v1402
    %v2147 = vunpack.c.h.b16 %v1402
    %v2148 = vunpack.c.l.b16 %v1403
    %v2149 = vunpack.c.h.b16 %v1403
    %v2150 = vunpack.c.l.b16 %v1404
    %v2151 = vunpack.c.h.b16 %v1404
    %v2152 = vunpack.c.l.b16 %v1405
    %v2153 = vunpack.c.h.b16 %v1405
    %v2154 = vunpack.c.l.b16 %v1406
    %v2155 = vunpack.c.h.b16 %v1406
    %v2156 = vunpack.c.l.b16 %v1407
    %v2157 = vunpack.c.h.b16 %v1407
    %v2158 = vunpack.c.l.b16 %v1408
    %v2159 = vunpack.c.h.b16 %v1408
    %v2160 = vunpack.c.l.b16 %v1409
    %v2161 = vunpack.c.h.b16 %v1409
    %v2162 = vunpack.c.l.b16 %v1410
    %v2163 = vunpack.c.h.b16 %v1410
    %v2164 = vunpack.c.l.b16 %v1411
    %v2165 = vunpack.c.h.b16 %v1411
    %v2166 = vunpack.c.l.b16 %v1412
    %v2167 = vunpack.c.h.b16 %v1412
    %v2168 = vunpack.c.l.b16 %v1413
    %v2169 = vunpack.c.h.b16 %v1413
    %v2170 = vunpack.c.l.b16 %v1414
    %v2171 = vunpack.c.h.b16 %v1414
    %v2172 = vunpack.c.l.b16 %v1415
    %v2173 = vunpack.c.h.b16 %v1415
    %v2174 = vunpack.c.l.b16 %v1416
    %v2175 = vunpack.c.h.b16 %v1416
    %v2176 = vunpack.c.l.b16 %v1417
    %v2177 = vunpack.c.h.b16 %v1417
    %v2178 = vunpack.c.l.b16 %v1418
    %v2179 = vunpack.c.h.b16 %v1418
    %v2180 = vunpack.c.l.b16 %v1419
    %v2181 = vunpack.c.h.b16 %v1419
    %v2182 = vunpack.c.l.b16 %v1420
    %v2183 = vunpack.c.h.b16 %v1420
    %v2184 = vunpack.c.l.b16 %v1421
    %v2185 = vunpack.c.h.b16 %v1421
    %v2186 = vunpack.c.l.b16 %v1422
    %v2187 = vunpack.c.h.b16 %v1422
    %v2188 = vunpack.c.l.b16 %v1423
    %v2189 = vunpack.c.h.b16 %v1423
    %v2190 = vunpack.c.l.b16 %v1424
    %v2191 = vunpack.c.h.b16 %v1424
    %v2192 = vunpack.c.l.b16 %v1425
    %v2193 = vunpack.c.h.b16 %v1425
    %v2194 = vunpack.c.l.b16 %v1426
    %v2195 = vunpack.c.h.b16 %v1426
    %v2196 = vunpack.c.l.b16 %v1427
    %v2197 = vunpack.c.h.b16 %v1427
    %v2198 = vunpack.c.l.b16 %v1428
    %v2199 = vunpack.c.h.b16 %v1428
    %v2200 = vunpack.c.l.b16 %v1429
    %v2201 = vunpack.c.h.b16 %v1429
    %v2202 = vunpack.c.l.b16 %v1430
    %v2203 = vunpack.c.h.b16 %v1430
    %v2204 = vunpack.c.l.b16 %v1431
    %v2205 = vunpack.c.h.b16 %v1431
    %v2206 = vunpack.c.l.b16 %v1432
    %v2207 = vunpack.c.h.b16 %v1432
    %v2208 = vunpack.c.l.b16 %v1433
    %v2209 = vunpack.c.h.b16 %v1433
    %v2210 = vunpack.c.l.b16 %v1434
    %v2211 = vunpack.c.h.b16 %v1434
    %v2212 = vunpack.c.l.b16 %v1435
    %v2213 = vunpack.c.h.b16 %v1435
    %v2214 = vunpack.c.l.b16 %v1436
    %v2215 = vunpack.c.h.b16 %v1436
    %v2216 = vunpack.c.l.b16 %v1437
    %v2217 = vunpack.c.h.b16 %v1437
    %v2218 = vunpack.c.l.b16 %v1438
    %v2219 = vunpack.c.h.b16 %v1438
    %v2220 = vunpack.c.l.b16 %v1439
    %v2221 = vunpack.c.h.b16 %v1439
    %v2222 = vunpack.c.l.b16 %v1440
    %v2223 = vunpack.c.h.b16 %v1440
    %v2224 = vunpack.c.l.b16 %v1441
    %v2225 = vunpack.c.h.b16 %v1441
    %v2226 = vunpack.c.l.b16 %v1442
    %v2227 = vunpack.c.h.b16 %v1442
    %v2228 = vunpack.c.l.b16 %v1443
    %v2229 = vunpack.c.h.b16 %v1443
    %v2230 = vpack.c.b16 %v1726, %v1718
    %v2231 = vpack.c.b16 %v1727, %v1719
    %v2232 = vpack.c.b16 %v1728, %v1720
    %v2233 = vpack.c.b16 %v1729, %v1721
    %v2234 = vpack.c.b16 %v1730, %v1722
    %v2235 = vpack.c.b16 %v1731, %v1723
    %v2236 = vpack.c.b16 %v1732, %v1724
    %v2237 = vpack.c.b16 %v1733, %v1725
    %v2238 = vpack.c.b16 %v1742, %v1734
    %v2239 = vpack.c.b16 %v1743, %v1735
    %v2240 = vpack.c.b16 %v1744, %v1736
    %v2241 = vpack.c.b16 %v1745, %v1737
    %v2242 = vpack.c.b16 %v1746, %v1738
    %v2243 = vpack.c.b16 %v1747, %v1739
    %v2244 = vpack.c.b16 %v1748, %v1740
    %v2245 = vpack.c.b16 %v1749, %v1741
    %v2246 = vpack.c.b16 %v1758, %v1750
    %v2247 = vpack.c.b16 %v1759, %v1751
    %v2248 = vpack.c.b16 %v1760, %v1752
    %v2249 = vpack.c.b16 %v1761, %v1753
    %v2250 = vpack.c.b16 %v1762, %v1754
    %v2251 = vpack.c.b16 %v1763, %v1755
    %v2252 = vpack.c.b16 %v1764, %v1756
    %v2253 = vpack.c.b16 %v1765, %v1757
    %v2254 = vpack.c.b16 %v1774, %v1766
    %v2255 = vpack.c.b16 %v1775, %v1767
    %v2256 = vpack.c.b16 %v1776, %v1768
    %v2257 = vpack.c.b16 %v1777, %v1769
    %v2258 = vpack.c.b16 %v1778, %v1770
    %v2259 = vpack.c.b16 %v1779, %v1771
    %v2260 = vpack.c.b16 %v1780, %v1772
    %v2261 = vpack.c.b16 %v1781, %v1773
    %v2262 = vpack.c.b16 %v1790, %v1782
    %v2263 = vpack.c.b16 %v1791, %v1783
    %v2264 = vpack.c.b16 %v1792, %v1784
    %v2265 = vpack.c.b16 %v1793, %v1785
    %v2266 = vpack.c.b16 %v1794, %v1786
    %v2267 = vpack.c.b16 %v1795, %v1787
    %v2268 = vpack.c.b16 %v1796, %v1788
    %v2269 = vpack.c.b16 %v1797, %v1789
    %v2270 = vpack.c.b16 %v1806, %v1798
    %v2271 = vpack.c.b16 %v1807, %v1799
    %v2272 = vpack.c.b16 %v1808, %v1800
    %v2273 = vpack.c.b16 %v1809, %v1801
    %v2274 = vpack.c.b16 %v1810, %v1802
    %v2275 = vpack.c.b16 %v1811, %v1803
    %v2276 = vpack.c.b16 %v1812, %v1804
    %v2277 = vpack.c.b16 %v1813, %v1805
    %v2278 = vpack.c.b16 %v1822, %v1814
    %v2279 = vpack.c.b16 %v1823, %v1815
    %v2280 = vpack.c.b16 %v1824, %v1816
    %v2281 = vpack.c.b16 %v1825, %v1817
    %v2282 = vpack.c.b16 %v1826, %v1818
    %v2283 = vpack.c.b16 %v1827, %v1819
    %v2284 = vpack.c.b16 %v1828, %v1820
    %v2285 = vpack.c.b16 %v1829, %v1821
    %v2286 = vpack.c.b16 %v1838, %v1830
    %v2287 = vpack.c.b16 %v1839, %v1831
    %v2288 = vpack.c.b16 %v1840, %v1832
    %v2289 = vpack.c.b16 %v1841, %v1833
    %v2290 = vpack.c.b16 %v1842, %v1834
    %v2291 = vpack.c.b16 %v1843, %v1835
    %v2292 = vpack.c.b16 %v1844, %v1836
    %v2293 = vpack.c.b16 %v1845, %v1837
    %v2294 = vpack.c.b16 %v1854, %v1846
    %v2295 = vpack.c.b16 %v1855, %v1847
    %v2296 = vpack.c.b16 %v1856, %v1848
    %v2297 = vpack.c.b16 %v1857, %v1849
    %v2298 = vpack.c.b16 %v1858, %v1850
    %v2299 = vpack.c.b16 %v1859, %v1851
    %v2300 = vpack.c.b16 %v1860, %v1852
    %v2301 = vpack.c.b16 %v1861, %v1853
    %v2302 = vpack.c.b16 %v1870, %v1862
    %v2303 = vpack.c.b16 %v1871, %v1863
    %v2304 = vpack.c.b16 %v1872, %v1864
    %v2305 = vpack.c.b16 %v1873, %v1865
    %v2306 = vpack.c.b16 %v1874, %v1866
    %v2307 = vpack.c.b16 %v1875, %v1867
    %v2308 = vpack.c.b16 %v1876, %v1868
    %v2309 = vpack.c.b16 %v1877, %v1869
    %v2310 = vpack.c.b16 %v1886, %v1878
    %v2311 = vpack.c.b16 %v1887, %v1879
    %v2312 = vpack.c.b16 %v1888, %v1880
    %v2313 = vpack.c.b16 %v1889, %v1881
    %v2314 = vpack.c.b16 %v1890, %v1882
    %v2315 = vpack.c.b16 %v1891, %v1883
    %v2316 = vpack.c.b16 %v1892, %v1884
    %v2317 = vpack.c.b16 %v1893, %v1885
    %v2318 = vpack.c.b16 %v1902, %v1894
    %v2319 = vpack.c.b16 %v1903, %v1895
    %v2320 = vpack.c.b16 %v1904, %v1896
    %v2321 = vpack.c.b16 %v1905, %v1897
    %v2322 = vpack.c.b16 %v1906, %v1898
    %v2323 = vpack.c.b16 %v1907, %v1899
    %v2324 = vpack.c.b16 %v1908, %v1900
    %v2325 = vpack.c.b16 %v1909, %v1901
    %v2326 = vpack.c.b16 %v1918, %v1910
    %v2327 = vpack.c.b16 %v1919, %v1911
    %v2328 = vpack.c.b16 %v1920, %v1912
    %v2329 = vpack.c.b16 %v1921, %v1913
    %v2330 = vpack.c.b16 %v1922, %v1914
    %v2331 = vpack.c.b16 %v1923, %v1915
    %v2332 = vpack.c.b16 %v1924, %v1916
    %v2333 = vpack.c.b16 %v1925, %v1917
    %v2334 = vpack.c.b16 %v1934, %v1926
    %v2335 = vpack.c.b16 %v1935, %v1927
    %v2336 = vpack.c.b16 %v1936, %v1928
    %v2337 = vpack.c.b16 %v1937, %v1929
    %v2338 = vpack.c.b16 %v1938, %v1930
    %v2339 = vpack.c.b16 %v1939, %v1931
    %v2340 = vpack.c.b16 %v1940, %v1932
    %v2341 = vpack.c.b16 %v1941, %v1933
    %v2342 = vpack.c.b16 %v1950, %v1942
    %v2343 = vpack.c.b16 %v1951, %v1943
    %v2344 = vpack.c.b16 %v1952, %v1944
    %v2345 = vpack.c.b16 %v1953, %v1945
    %v2346 = vpack.c.b16 %v1954, %v1946
    %v2347 = vpack.c.b16 %v1955, %v1947
    %v2348 = vpack.c.b16 %v1956, %v1948
    %v2349 = vpack.c.b16 %v1957, %v1949
    %v2350 = vpack.c.b16 %v1966, %v1958
    %v2351 = vpack.c.b16 %v1967, %v1959
    %v2352 = vpack.c.b16 %v1968, %v1960
    %v2353 = vpack.c.b16 %v1969, %v1961
    %v2354 = vpack.c.b16 %v1970, %v1962
    %v2355 = vpack.c.b16 %v1971, %v1963
    %v2356 = vpack.c.b16 %v1972, %v1964
    %v2357 = vpack.c.b16 %v1973, %v1965
    %v2358 = vpack.c.b16 %v1982, %v1974
    %v2359 = vpack.c.b16 %v1983, %v1975
    %v2360 = vpack.c.b16 %v1984, %v1976
    %v2361 = vpack.c.b16 %v1985, %v1977
    %v2362 = vpack.c.b16 %v1986, %v1978
    %v2363 = vpack.c.b16 %v1987, %v1979
    %v2364 = vpack.c.b16 %v1988, %v1980
    %v2365 = vpack.c.b16 %v1989, %v1981
    %v2366 = vpack.c.b16 %v1998, %v1990
    %v2367 = vpack.c.b16 %v1999, %v1991
    %v2368 = vpack.c.b16 %v2000, %v1992
    %v2369 = vpack.c.b16 %v2001, %v1993
    %v2370 = vpack.c.b16 %v2002, %v1994
    %v2371 = vpack.c.b16 %v2003, %v1995
    %v2372 = vpack.c.b16 %v2004, %v1996
    %v2373 = vpack.c.b16 %v2005, %v1997
    %v2374 = vpack.c.b16 %v2014, %v2006
    %v2375 = vpack.c.b16 %v2015, %v2007
    %v2376 = vpack.c.b16 %v2016, %v2008
    %v2377 = vpack.c.b16 %v2017, %v2009
    %v2378 = vpack.c.b16 %v2018, %v2010
    %v2379 = vpack.c.b16 %v2019, %v2011
    %v2380 = vpack.c.b16 %v2020, %v2012
    %v2381 = vpack.c.b16 %v2021, %v2013
    %v2382 = vpack.c.b16 %v2030, %v2022
    %v2383 = vpack.c.b16 %v2031, %v2023
    %v2384 = vpack.c.b16 %v2032, %v2024
    %v2385 = vpack.c.b16 %v2033, %v2025
    %v2386 = vpack.c.b16 %v2034, %v2026
    %v2387 = vpack.c.b16 %v2035, %v2027
    %v2388 = vpack.c.b16 %v2036, %v2028
    %v2389 = vpack.c.b16 %v2037, %v2029
    %v2390 = vpack.c.b16 %v2046, %v2038
    %v2391 = vpack.c.b16 %v2047, %v2039
    %v2392 = vpack.c.b16 %v2048, %v2040
    %v2393 = vpack.c.b16 %v2049, %v2041
    %v2394 = vpack.c.b16 %v2050, %v2042
    %v2395 = vpack.c.b16 %v2051, %v2043
    %v2396 = vpack.c.b16 %v2052, %v2044
    %v2397 = vpack.c.b16 %v2053, %v2045
    %v2398 = vpack.c.b16 %v2062, %v2054
    %v2399 = vpack.c.b16 %v2063, %v2055
    %v2400 = vpack.c.b16 %v2064, %v2056
    %v2401 = vpack.c.b16 %v2065, %v2057
    %v2402 = vpack.c.b16 %v2066, %v2058
    %v2403 = vpack.c.b16 %v2067, %v2059
    %v2404 = vpack.c.b16 %v2068, %v2060
    %v2405 = vpack.c.b16 %v2069, %v2061
    %v2406 = vpack.c.b16 %v2078, %v2070
    %v2407 = vpack.c.b16 %v2079, %v2071
    %v2408 = vpack.c.b16 %v2080, %v2072
    %v2409 = vpack.c.b16 %v2081, %v2073
    %v2410 = vpack.c.b16 %v2082, %v2074
    %v2411 = vpack.c.b16 %v2083, %v2075
    %v2412 = vpack.c.b16 %v2084, %v2076
    %v2413 = vpack.c.b16 %v2085, %v2077
    %v2414 = vpack.c.b16 %v2094, %v2086
    %v2415 = vpack.c.b16 %v2095, %v2087
    %v2416 = vpack.c.b16 %v2096, %v2088
    %v2417 = vpack.c.b16 %v2097, %v2089
    %v2418 = vpack.c.b16 %v2098, %v2090
    %v2419 = vpack.c.b16 %v2099, %v2091
    %v2420 = vpack.c.b16 %v2100, %v2092
    %v2421 = vpack.c.b16 %v2101, %v2093
    %v2422 = vpack.c.b16 %v2110, %v2102
    %v2423 = vpack.c.b16 %v2111, %v2103
    %v2424 = vpack.c.b16 %v2112, %v2104
    %v2425 = vpack.c.b16 %v2113, %v2105
    %v2426 = vpack.c.b16 %v2114, %v2106
    %v2427 = vpack.c.b16 %v2115, %v2107
    %v2428 = vpack.c.b16 %v2116, %v2108
    %v2429 = vpack.c.b16 %v2117, %v2109
    %v2430 = vpack.c.b16 %v2126, %v2118
    %v2431 = vpack.c.b16 %v2127, %v2119
    %v2432 = vpack.c.b16 %v2128, %v2120
    %v2433 = vpack.c.b16 %v2129, %v2121
    %v2434 = vpack.c.b16 %v2130, %v2122
    %v2435 = vpack.c.b16 %v2131, %v2123
    %v2436 = vpack.c.b16 %v2132, %v2124
    %v2437 = vpack.c.b16 %v2133, %v2125
    %v2438 = vpack.c.b16 %v2142, %v2134
    %v2439 = vpack.c.b16 %v2143, %v2135
    %v2440 = vpack.c.b16 %v2144, %v2136
    %v2441 = vpack.c.b16 %v2145, %v2137
    %v2442 = vpack.c.b16 %v2146, %v2138
    %v2443 = vpack.c.b16 %v2147, %v2139
    %v2444 = vpack.c.b16 %v2148, %v2140
    %v2445 = vpack.c.b16 %v2149, %v2141
    %v2446 = vpack.c.b16 %v2158, %v2150
    %v2447 = vpack.c.b16 %v2159, %v2151
    %v2448 = vpack.c.b16 %v2160, %v2152
    %v2449 = vpack.c.b16 %v2161, %v2153
    %v2450 = vpack.c.b16 %v2162, %v2154
    %v2451 = vpack.c.b16 %v2163, %v2155
    %v2452 = vpack.c.b16 %v2164, %v2156
    %v2453 = vpack.c.b16 %v2165, %v2157
    %v2454 = vpack.c.b16 %v2174, %v2166
    %v2455 = vpack.c.b16 %v2175, %v2167
    %v2456 = vpack.c.b16 %v2176, %v2168
    %v2457 = vpack.c.b16 %v2177, %v2169
    %v2458 = vpack.c.b16 %v2178, %v2170
    %v2459 = vpack.c.b16 %v2179, %v2171
    %v2460 = vpack.c.b16 %v2180, %v2172
    %v2461 = vpack.c.b16 %v2181, %v2173
    %v2462 = vpack.c.b16 %v2190, %v2182
    %v2463 = vpack.c.b16 %v2191, %v2183
    %v2464 = vpack.c.b16 %v2192, %v2184
    %v2465 = vpack.c.b16 %v2193, %v2185
    %v2466 = vpack.c.b16 %v2194, %v2186
    %v2467 = vpack.c.b16 %v2195, %v2187
    %v2468 = vpack.c.b16 %v2196, %v2188
    %v2469 = vpack.c.b16 %v2197, %v2189
    %v2470 = vpack.c.b16 %v2206, %v2198
    %v2471 = vpack.c.b16 %v2207, %v2199
    %v2472 = vpack.c.b16 %v2208, %v2200
    %v2473 = vpack.c.b16 %v2209, %v2201
    %v2474 = vpack.c.b16 %v2210, %v2202
    %v2475 = vpack.c.b16 %v2211, %v2203
    %v2476 = vpack.c.b16 %v2212, %v2204
    %v2477 = vpack.c.b16 %v2213, %v2205
    %v2478 = vpack.c.b16 %v2222, %v2214
    %v2479 = vpack.c.b16 %v2223, %v2215
    %v2480 = vpack.c.b16 %v2224, %v2216
    %v2481 = vpack.c.b16 %v2225, %v2217
    %v2482 = vpack.c.b16 %v2226, %v2218
    %v2483 = vpack.c.b16 %v2227, %v2219
    %v2484 = vpack.c.b16 %v2228, %v2220
    %v2485 = vpack.c.b16 %v2229, %v2221
    %2742 = vmatpush.bf16.msra.mxu0 %v2286
    %2743 = vmatpush.bf16.msra.mxu0 %v2278
    %2744 = vmatpush.bf16.msra.mxu0 %v2270
    %2745 = vmatpush.bf16.msra.mxu0 %v2262
    %2746 = vmatpush.bf16.msra.mxu0 %v2254
    %2747 = vmatpush.bf16.msra.mxu0 %v2246
    %2748 = vmatpush.bf16.msra.mxu0 %v2238
    %2749 = vmatpush.bf16.msra.mxu0 %v2230
    %2750 = vmatmul.bf16.gmra.mxu0 %v1184
    %v2751 = vpop.f32.mrf.mxu0
    %v2752 = vadd.f32 %v1446, %v2751
    %v2753 = vpop.f32.mrf.mxu0
    %2754 = vdwg.mxu0
    %2755 = vmatpush.bf16.msra.mxu0 %v2350
    %2756 = vmatpush.bf16.msra.mxu0 %v2342
    %2757 = vmatpush.bf16.msra.mxu0 %v2334
    %2758 = vmatpush.bf16.msra.mxu0 %v2326
    %2759 = vmatpush.bf16.msra.mxu0 %v2318
    %2760 = vmatpush.bf16.msra.mxu0 %v2310
    %2761 = vmatpush.bf16.msra.mxu0 %v2302
    %2762 = vmatpush.bf16.msra.mxu0 %v2294
    %2763 = vmatmul.bf16.gmra.mxu0 %v1185
    %v2764 = vpop.f32.mrf.mxu0
    %v2765 = vadd.f32 %v2752, %v2764
    %v2766 = vpop.f32.mrf.mxu0
    %2767 = vdwg.mxu0
    %2768 = vmatpush.bf16.msra.mxu0 %v2414
    %2769 = vmatpush.bf16.msra.mxu0 %v2406
    %2770 = vmatpush.bf16.msra.mxu0 %v2398
    %2771 = vmatpush.bf16.msra.mxu0 %v2390
    %2772 = vmatpush.bf16.msra.mxu0 %v2382
    %2773 = vmatpush.bf16.msra.mxu0 %v2374
    %2774 = vmatpush.bf16.msra.mxu0 %v2366
    %2775 = vmatpush.bf16.msra.mxu0 %v2358
    %2776 = vmatmul.bf16.gmra.mxu0 %v1186
    %v2777 = vpop.f32.mrf.mxu0
    %v2778 = vadd.f32 %v2765, %v2777
    %v2779 = vpop.f32.mrf.mxu0
    %2780 = vdwg.mxu0
    %2781 = vmatpush.bf16.msra.mxu0 %v2478
    %2782 = vmatpush.bf16.msra.mxu0 %v2470
    %2783 = vmatpush.bf16.msra.mxu0 %v2462
    %2784 = vmatpush.bf16.msra.mxu0 %v2454
    %2785 = vmatpush.bf16.msra.mxu0 %v2446
    %2786 = vmatpush.bf16.msra.mxu0 %v2438
    %2787 = vmatpush.bf16.msra.mxu0 %v2430
    %2788 = vmatpush.bf16.msra.mxu0 %v2422
    %2789 = vmatmul.bf16.gmra.mxu0 %v1187
    %v2790 = vpop.f32.mrf.mxu0
    %v2791 = vadd.f32 %v2778, %v2790
    %v2792 = vpop.f32.mrf.mxu0
    %2793 = vdwg.mxu0
    %2794 = vmatpush.bf16.msra.mxu0 %v2287
    %2795 = vmatpush.bf16.msra.mxu0 %v2279
    %2796 = vmatpush.bf16.msra.mxu0 %v2271
    %2797 = vmatpush.bf16.msra.mxu0 %v2263
    %2798 = vmatpush.bf16.msra.mxu0 %v2255
    %2799 = vmatpush.bf16.msra.mxu0 %v2247
    %2800 = vmatpush.bf16.msra.mxu0 %v2239
    %2801 = vmatpush.bf16.msra.mxu0 %v2231
    %2802 = vmatmul.bf16.gmra.mxu0 %v1184
    %v2803 = vpop.f32.mrf.mxu0
    %v2804 = vadd.f32 %v1447, %v2803
    %v2805 = vpop.f32.mrf.mxu0
    %2806 = vdwg.mxu0
    %2807 = vmatpush.bf16.msra.mxu0 %v2351
    %2808 = vmatpush.bf16.msra.mxu0 %v2343
    %2809 = vmatpush.bf16.msra.mxu0 %v2335
    %2810 = vmatpush.bf16.msra.mxu0 %v2327
    %2811 = vmatpush.bf16.msra.mxu0 %v2319
    %2812 = vmatpush.bf16.msra.mxu0 %v2311
    %2813 = vmatpush.bf16.msra.mxu0 %v2303
    %2814 = vmatpush.bf16.msra.mxu0 %v2295
    %2815 = vmatmul.bf16.gmra.mxu0 %v1185
    %v2816 = vpop.f32.mrf.mxu0
    %v2817 = vadd.f32 %v2804, %v2816
    %v2818 = vpop.f32.mrf.mxu0
    %2819 = vdwg.mxu0
    %2820 = vmatpush.bf16.msra.mxu0 %v2415
    %2821 = vmatpush.bf16.msra.mxu0 %v2407
    %2822 = vmatpush.bf16.msra.mxu0 %v2399
    %2823 = vmatpush.bf16.msra.mxu0 %v2391
    %2824 = vmatpush.bf16.msra.mxu0 %v2383
    %2825 = vmatpush.bf16.msra.mxu0 %v2375
    %2826 = vmatpush.bf16.msra.mxu0 %v2367
    %2827 = vmatpush.bf16.msra.mxu0 %v2359
    %2828 = vmatmul.bf16.gmra.mxu0 %v1186
    %v2829 = vpop.f32.mrf.mxu0
    %v2830 = vadd.f32 %v2817, %v2829
    %v2831 = vpop.f32.mrf.mxu0
    %2832 = vdwg.mxu0
    %2833 = vmatpush.bf16.msra.mxu0 %v2479
    %2834 = vmatpush.bf16.msra.mxu0 %v2471
    %2835 = vmatpush.bf16.msra.mxu0 %v2463
    %2836 = vmatpush.bf16.msra.mxu0 %v2455
    %2837 = vmatpush.bf16.msra.mxu0 %v2447
    %2838 = vmatpush.bf16.msra.mxu0 %v2439
    %2839 = vmatpush.bf16.msra.mxu0 %v2431
    %2840 = vmatpush.bf16.msra.mxu0 %v2423
    %2841 = vmatmul.bf16.gmra.mxu0 %v1187
    %v2842 = vpop.f32.mrf.mxu0
    %v2843 = vadd.f32 %v2830, %v2842
    %v2844 = vpop.f32.mrf.mxu0
    %2845 = vdwg.mxu0
    %2846 = vmatpush.bf16.msra.mxu0 %v2288
    %2847 = vmatpush.bf16.msra.mxu0 %v2280
    %2848 = vmatpush.bf16.msra.mxu0 %v2272
    %2849 = vmatpush.bf16.msra.mxu0 %v2264
    %2850 = vmatpush.bf16.msra.mxu0 %v2256
    %2851 = vmatpush.bf16.msra.mxu0 %v2248
    %2852 = vmatpush.bf16.msra.mxu0 %v2240
    %2853 = vmatpush.bf16.msra.mxu0 %v2232
    %2854 = vmatmul.bf16.gmra.mxu0 %v1184
    %v2855 = vpop.f32.mrf.mxu0
    %v2856 = vadd.f32 %v1448, %v2855
    %v2857 = vpop.f32.mrf.mxu0
    %2858 = vdwg.mxu0
    %2859 = vmatpush.bf16.msra.mxu0 %v2352
    %2860 = vmatpush.bf16.msra.mxu0 %v2344
    %2861 = vmatpush.bf16.msra.mxu0 %v2336
    %2862 = vmatpush.bf16.msra.mxu0 %v2328
    %2863 = vmatpush.bf16.msra.mxu0 %v2320
    %2864 = vmatpush.bf16.msra.mxu0 %v2312
    %2865 = vmatpush.bf16.msra.mxu0 %v2304
    %2866 = vmatpush.bf16.msra.mxu0 %v2296
    %2867 = vmatmul.bf16.gmra.mxu0 %v1185
    %v2868 = vpop.f32.mrf.mxu0
    %v2869 = vadd.f32 %v2856, %v2868
    %v2870 = vpop.f32.mrf.mxu0
    %2871 = vdwg.mxu0
    %2872 = vmatpush.bf16.msra.mxu0 %v2416
    %2873 = vmatpush.bf16.msra.mxu0 %v2408
    %2874 = vmatpush.bf16.msra.mxu0 %v2400
    %2875 = vmatpush.bf16.msra.mxu0 %v2392
    %2876 = vmatpush.bf16.msra.mxu0 %v2384
    %2877 = vmatpush.bf16.msra.mxu0 %v2376
    %2878 = vmatpush.bf16.msra.mxu0 %v2368
    %2879 = vmatpush.bf16.msra.mxu0 %v2360
    %2880 = vmatmul.bf16.gmra.mxu0 %v1186
    %v2881 = vpop.f32.mrf.mxu0
    %v2882 = vadd.f32 %v2869, %v2881
    %v2883 = vpop.f32.mrf.mxu0
    %2884 = vdwg.mxu0
    %2885 = vmatpush.bf16.msra.mxu0 %v2480
    %2886 = vmatpush.bf16.msra.mxu0 %v2472
    %2887 = vmatpush.bf16.msra.mxu0 %v2464
    %2888 = vmatpush.bf16.msra.mxu0 %v2456
    %2889 = vmatpush.bf16.msra.mxu0 %v2448
    %2890 = vmatpush.bf16.msra.mxu0 %v2440
    %2891 = vmatpush.bf16.msra.mxu0 %v2432
    %2892 = vmatpush.bf16.msra.mxu0 %v2424
    %2893 = vmatmul.bf16.gmra.mxu0 %v1187
    %v2894 = vpop.f32.mrf.mxu0
    %v2895 = vadd.f32 %v2882, %v2894
    %v2896 = vpop.f32.mrf.mxu0
    %2897 = vdwg.mxu0
    %2898 = vmatpush.bf16.msra.mxu0 %v2289
    %2899 = vmatpush.bf16.msra.mxu0 %v2281
    %2900 = vmatpush.bf16.msra.mxu0 %v2273
    %2901 = vmatpush.bf16.msra.mxu0 %v2265
    %2902 = vmatpush.bf16.msra.mxu0 %v2257
    %2903 = vmatpush.bf16.msra.mxu0 %v2249
    %2904 = vmatpush.bf16.msra.mxu0 %v2241
    %2905 = vmatpush.bf16.msra.mxu0 %v2233
    %2906 = vmatmul.bf16.gmra.mxu0 %v1184
    %v2907 = vpop.f32.mrf.mxu0
    %v2908 = vadd.f32 %v1449, %v2907
    %v2909 = vpop.f32.mrf.mxu0
    %2910 = vdwg.mxu0
    %2911 = vmatpush.bf16.msra.mxu0 %v2353
    %2912 = vmatpush.bf16.msra.mxu0 %v2345
    %2913 = vmatpush.bf16.msra.mxu0 %v2337
    %2914 = vmatpush.bf16.msra.mxu0 %v2329
    %2915 = vmatpush.bf16.msra.mxu0 %v2321
    %2916 = vmatpush.bf16.msra.mxu0 %v2313
    %2917 = vmatpush.bf16.msra.mxu0 %v2305
    %2918 = vmatpush.bf16.msra.mxu0 %v2297
    %2919 = vmatmul.bf16.gmra.mxu0 %v1185
    %v2920 = vpop.f32.mrf.mxu0
    %v2921 = vadd.f32 %v2908, %v2920
    %v2922 = vpop.f32.mrf.mxu0
    %2923 = vdwg.mxu0
    %2924 = vmatpush.bf16.msra.mxu0 %v2417
    %2925 = vmatpush.bf16.msra.mxu0 %v2409
    %2926 = vmatpush.bf16.msra.mxu0 %v2401
    %2927 = vmatpush.bf16.msra.mxu0 %v2393
    %2928 = vmatpush.bf16.msra.mxu0 %v2385
    %2929 = vmatpush.bf16.msra.mxu0 %v2377
    %2930 = vmatpush.bf16.msra.mxu0 %v2369
    %2931 = vmatpush.bf16.msra.mxu0 %v2361
    %2932 = vmatmul.bf16.gmra.mxu0 %v1186
    %v2933 = vpop.f32.mrf.mxu0
    %v2934 = vadd.f32 %v2921, %v2933
    %v2935 = vpop.f32.mrf.mxu0
    %2936 = vdwg.mxu0
    %2937 = vmatpush.bf16.msra.mxu0 %v2481
    %2938 = vmatpush.bf16.msra.mxu0 %v2473
    %2939 = vmatpush.bf16.msra.mxu0 %v2465
    %2940 = vmatpush.bf16.msra.mxu0 %v2457
    %2941 = vmatpush.bf16.msra.mxu0 %v2449
    %2942 = vmatpush.bf16.msra.mxu0 %v2441
    %2943 = vmatpush.bf16.msra.mxu0 %v2433
    %2944 = vmatpush.bf16.msra.mxu0 %v2425
    %2945 = vmatmul.bf16.gmra.mxu0 %v1187
    %v2946 = vpop.f32.mrf.mxu0
    %v2947 = vadd.f32 %v2934, %v2946
    %v2948 = vpop.f32.mrf.mxu0
    %2949 = vdwg.mxu0
    %2950 = vmatpush.bf16.msra.mxu0 %v2290
    %2951 = vmatpush.bf16.msra.mxu0 %v2282
    %2952 = vmatpush.bf16.msra.mxu0 %v2274
    %2953 = vmatpush.bf16.msra.mxu0 %v2266
    %2954 = vmatpush.bf16.msra.mxu0 %v2258
    %2955 = vmatpush.bf16.msra.mxu0 %v2250
    %2956 = vmatpush.bf16.msra.mxu0 %v2242
    %2957 = vmatpush.bf16.msra.mxu0 %v2234
    %2958 = vmatmul.bf16.gmra.mxu0 %v1184
    %v2959 = vpop.f32.mrf.mxu0
    %v2960 = vadd.f32 %v1450, %v2959
    %v2961 = vpop.f32.mrf.mxu0
    %2962 = vdwg.mxu0
    %2963 = vmatpush.bf16.msra.mxu0 %v2354
    %2964 = vmatpush.bf16.msra.mxu0 %v2346
    %2965 = vmatpush.bf16.msra.mxu0 %v2338
    %2966 = vmatpush.bf16.msra.mxu0 %v2330
    %2967 = vmatpush.bf16.msra.mxu0 %v2322
    %2968 = vmatpush.bf16.msra.mxu0 %v2314
    %2969 = vmatpush.bf16.msra.mxu0 %v2306
    %2970 = vmatpush.bf16.msra.mxu0 %v2298
    %2971 = vmatmul.bf16.gmra.mxu0 %v1185
    %v2972 = vpop.f32.mrf.mxu0
    %v2973 = vadd.f32 %v2960, %v2972
    %v2974 = vpop.f32.mrf.mxu0
    %2975 = vdwg.mxu0
    %2976 = vmatpush.bf16.msra.mxu0 %v2418
    %2977 = vmatpush.bf16.msra.mxu0 %v2410
    %2978 = vmatpush.bf16.msra.mxu0 %v2402
    %2979 = vmatpush.bf16.msra.mxu0 %v2394
    %2980 = vmatpush.bf16.msra.mxu0 %v2386
    %2981 = vmatpush.bf16.msra.mxu0 %v2378
    %2982 = vmatpush.bf16.msra.mxu0 %v2370
    %2983 = vmatpush.bf16.msra.mxu0 %v2362
    %2984 = vmatmul.bf16.gmra.mxu0 %v1186
    %v2985 = vpop.f32.mrf.mxu0
    %v2986 = vadd.f32 %v2973, %v2985
    %v2987 = vpop.f32.mrf.mxu0
    %2988 = vdwg.mxu0
    %2989 = vmatpush.bf16.msra.mxu0 %v2482
    %2990 = vmatpush.bf16.msra.mxu0 %v2474
    %2991 = vmatpush.bf16.msra.mxu0 %v2466
    %2992 = vmatpush.bf16.msra.mxu0 %v2458
    %2993 = vmatpush.bf16.msra.mxu0 %v2450
    %2994 = vmatpush.bf16.msra.mxu0 %v2442
    %2995 = vmatpush.bf16.msra.mxu0 %v2434
    %2996 = vmatpush.bf16.msra.mxu0 %v2426
    %2997 = vmatmul.bf16.gmra.mxu0 %v1187
    %v2998 = vpop.f32.mrf.mxu0
    %v2999 = vadd.f32 %v2986, %v2998
    %v3000 = vpop.f32.mrf.mxu0
    %3001 = vdwg.mxu0
    %3002 = vmatpush.bf16.msra.mxu0 %v2291
    %3003 = vmatpush.bf16.msra.mxu0 %v2283
    %3004 = vmatpush.bf16.msra.mxu0 %v2275
    %3005 = vmatpush.bf16.msra.mxu0 %v2267
    %3006 = vmatpush.bf16.msra.mxu0 %v2259
    %3007 = vmatpush.bf16.msra.mxu0 %v2251
    %3008 = vmatpush.bf16.msra.mxu0 %v2243
    %3009 = vmatpush.bf16.msra.mxu0 %v2235
    %3010 = vmatmul.bf16.gmra.mxu0 %v1184
    %v3011 = vpop.f32.mrf.mxu0
    %v3012 = vadd.f32 %v1451, %v3011
    %v3013 = vpop.f32.mrf.mxu0
    %3014 = vdwg.mxu0
    %3015 = vmatpush.bf16.msra.mxu0 %v2355
    %3016 = vmatpush.bf16.msra.mxu0 %v2347
    %3017 = vmatpush.bf16.msra.mxu0 %v2339
    %3018 = vmatpush.bf16.msra.mxu0 %v2331
    %3019 = vmatpush.bf16.msra.mxu0 %v2323
    %3020 = vmatpush.bf16.msra.mxu0 %v2315
    %3021 = vmatpush.bf16.msra.mxu0 %v2307
    %3022 = vmatpush.bf16.msra.mxu0 %v2299
    %3023 = vmatmul.bf16.gmra.mxu0 %v1185
    %v3024 = vpop.f32.mrf.mxu0
    %v3025 = vadd.f32 %v3012, %v3024
    %v3026 = vpop.f32.mrf.mxu0
    %3027 = vdwg.mxu0
    %3028 = vmatpush.bf16.msra.mxu0 %v2419
    %3029 = vmatpush.bf16.msra.mxu0 %v2411
    %3030 = vmatpush.bf16.msra.mxu0 %v2403
    %3031 = vmatpush.bf16.msra.mxu0 %v2395
    %3032 = vmatpush.bf16.msra.mxu0 %v2387
    %3033 = vmatpush.bf16.msra.mxu0 %v2379
    %3034 = vmatpush.bf16.msra.mxu0 %v2371
    %3035 = vmatpush.bf16.msra.mxu0 %v2363
    %3036 = vmatmul.bf16.gmra.mxu0 %v1186
    %v3037 = vpop.f32.mrf.mxu0
    %v3038 = vadd.f32 %v3025, %v3037
    %v3039 = vpop.f32.mrf.mxu0
    %3040 = vdwg.mxu0
    %3041 = vmatpush.bf16.msra.mxu0 %v2483
    %3042 = vmatpush.bf16.msra.mxu0 %v2475
    %3043 = vmatpush.bf16.msra.mxu0 %v2467
    %3044 = vmatpush.bf16.msra.mxu0 %v2459
    %3045 = vmatpush.bf16.msra.mxu0 %v2451
    %3046 = vmatpush.bf16.msra.mxu0 %v2443
    %3047 = vmatpush.bf16.msra.mxu0 %v2435
    %3048 = vmatpush.bf16.msra.mxu0 %v2427
    %3049 = vmatmul.bf16.gmra.mxu0 %v1187
    %v3050 = vpop.f32.mrf.mxu0
    %v3051 = vadd.f32 %v3038, %v3050
    %v3052 = vpop.f32.mrf.mxu0
    %3053 = vdwg.mxu0
    %3054 = vmatpush.bf16.msra.mxu0 %v2292
    %3055 = vmatpush.bf16.msra.mxu0 %v2284
    %3056 = vmatpush.bf16.msra.mxu0 %v2276
    %3057 = vmatpush.bf16.msra.mxu0 %v2268
    %3058 = vmatpush.bf16.msra.mxu0 %v2260
    %3059 = vmatpush.bf16.msra.mxu0 %v2252
    %3060 = vmatpush.bf16.msra.mxu0 %v2244
    %3061 = vmatpush.bf16.msra.mxu0 %v2236
    %3062 = vmatmul.bf16.gmra.mxu0 %v1184
    %v3063 = vpop.f32.mrf.mxu0
    %v3064 = vadd.f32 %v1452, %v3063
    %v3065 = vpop.f32.mrf.mxu0
    %3066 = vdwg.mxu0
    %3067 = vmatpush.bf16.msra.mxu0 %v2356
    %3068 = vmatpush.bf16.msra.mxu0 %v2348
    %3069 = vmatpush.bf16.msra.mxu0 %v2340
    %3070 = vmatpush.bf16.msra.mxu0 %v2332
    %3071 = vmatpush.bf16.msra.mxu0 %v2324
    %3072 = vmatpush.bf16.msra.mxu0 %v2316
    %3073 = vmatpush.bf16.msra.mxu0 %v2308
    %3074 = vmatpush.bf16.msra.mxu0 %v2300
    %3075 = vmatmul.bf16.gmra.mxu0 %v1185
    %v3076 = vpop.f32.mrf.mxu0
    %v3077 = vadd.f32 %v3064, %v3076
    %v3078 = vpop.f32.mrf.mxu0
    %3079 = vdwg.mxu0
    %3080 = vmatpush.bf16.msra.mxu0 %v2420
    %3081 = vmatpush.bf16.msra.mxu0 %v2412
    %3082 = vmatpush.bf16.msra.mxu0 %v2404
    %3083 = vmatpush.bf16.msra.mxu0 %v2396
    %3084 = vmatpush.bf16.msra.mxu0 %v2388
    %3085 = vmatpush.bf16.msra.mxu0 %v2380
    %3086 = vmatpush.bf16.msra.mxu0 %v2372
    %3087 = vmatpush.bf16.msra.mxu0 %v2364
    %3088 = vmatmul.bf16.gmra.mxu0 %v1186
    %v3089 = vpop.f32.mrf.mxu0
    %v3090 = vadd.f32 %v3077, %v3089
    %v3091 = vpop.f32.mrf.mxu0
    %3092 = vdwg.mxu0
    %3093 = vmatpush.bf16.msra.mxu0 %v2484
    %3094 = vmatpush.bf16.msra.mxu0 %v2476
    %3095 = vmatpush.bf16.msra.mxu0 %v2468
    %3096 = vmatpush.bf16.msra.mxu0 %v2460
    %3097 = vmatpush.bf16.msra.mxu0 %v2452
    %3098 = vmatpush.bf16.msra.mxu0 %v2444
    %3099 = vmatpush.bf16.msra.mxu0 %v2436
    %3100 = vmatpush.bf16.msra.mxu0 %v2428
    %3101 = vmatmul.bf16.gmra.mxu0 %v1187
    %v3102 = vpop.f32.mrf.mxu0
    %v3103 = vadd.f32 %v3090, %v3102
    %v3104 = vpop.f32.mrf.mxu0
    %3105 = vdwg.mxu0
    %3106 = vmatpush.bf16.msra.mxu0 %v2293
    %3107 = vmatpush.bf16.msra.mxu0 %v2285
    %3108 = vmatpush.bf16.msra.mxu0 %v2277
    %3109 = vmatpush.bf16.msra.mxu0 %v2269
    %3110 = vmatpush.bf16.msra.mxu0 %v2261
    %3111 = vmatpush.bf16.msra.mxu0 %v2253
    %3112 = vmatpush.bf16.msra.mxu0 %v2245
    %3113 = vmatpush.bf16.msra.mxu0 %v2237
    %3114 = vmatmul.bf16.gmra.mxu0 %v1184
    %v3115 = vpop.f32.mrf.mxu0
    %v3116 = vadd.f32 %v1453, %v3115
    %v3117 = vpop.f32.mrf.mxu0
    %3118 = vdwg.mxu0
    %3119 = vmatpush.bf16.msra.mxu0 %v2357
    %3120 = vmatpush.bf16.msra.mxu0 %v2349
    %3121 = vmatpush.bf16.msra.mxu0 %v2341
    %3122 = vmatpush.bf16.msra.mxu0 %v2333
    %3123 = vmatpush.bf16.msra.mxu0 %v2325
    %3124 = vmatpush.bf16.msra.mxu0 %v2317
    %3125 = vmatpush.bf16.msra.mxu0 %v2309
    %3126 = vmatpush.bf16.msra.mxu0 %v2301
    %3127 = vmatmul.bf16.gmra.mxu0 %v1185
    %v3128 = vpop.f32.mrf.mxu0
    %v3129 = vadd.f32 %v3116, %v3128
    %v3130 = vpop.f32.mrf.mxu0
    %3131 = vdwg.mxu0
    %3132 = vmatpush.bf16.msra.mxu0 %v2421
    %3133 = vmatpush.bf16.msra.mxu0 %v2413
    %3134 = vmatpush.bf16.msra.mxu0 %v2405
    %3135 = vmatpush.bf16.msra.mxu0 %v2397
    %3136 = vmatpush.bf16.msra.mxu0 %v2389
    %3137 = vmatpush.bf16.msra.mxu0 %v2381
    %3138 = vmatpush.bf16.msra.mxu0 %v2373
    %3139 = vmatpush.bf16.msra.mxu0 %v2365
    %3140 = vmatmul.bf16.gmra.mxu0 %v1186
    %v3141 = vpop.f32.mrf.mxu0
    %v3142 = vadd.f32 %v3129, %v3141
    %v3143 = vpop.f32.mrf.mxu0
    %3144 = vdwg.mxu0
    %3145 = vmatpush.bf16.msra.mxu0 %v2485
    %3146 = vmatpush.bf16.msra.mxu0 %v2477
    %3147 = vmatpush.bf16.msra.mxu0 %v2469
    %3148 = vmatpush.bf16.msra.mxu0 %v2461
    %3149 = vmatpush.bf16.msra.mxu0 %v2453
    %3150 = vmatpush.bf16.msra.mxu0 %v2445
    %3151 = vmatpush.bf16.msra.mxu0 %v2437
    %3152 = vmatpush.bf16.msra.mxu0 %v2429
    %3153 = vmatmul.bf16.gmra.mxu0 %v1187
    %v3154 = vpop.f32.mrf.mxu0
    %v3155 = vadd.f32 %v3142, %v3154
    %v3156 = vpop.f32.mrf.mxu0
    %3157 = vdwg.mxu0
    %v3158 = vsel %vm440, %v2791, 0.0
    %v3159 = vrot.slane %v3158, 4
    %v3160 = vadd.f32 %v3158, %v3159
    %v3161 = vrot.slane %v3160, 2
    %v3162 = vadd.f32 %v3160, %v3161
    %v3163 = vrot.slane %v3162, 1
    %v3164 = vadd.f32 %v3162, %v3163
    %v3165 = vsel %vm440, %v2843, 0.0
    %v3166 = vrot.slane %v3165, 4
    %v3167 = vadd.f32 %v3165, %v3166
    %v3168 = vrot.slane %v3167, 2
    %v3169 = vadd.f32 %v3167, %v3168
    %v3170 = vrot.slane %v3169, 1
    %v3171 = vadd.f32 %v3169, %v3170
    %v3172 = vsel %vm440, %v2895, 0.0
    %v3173 = vrot.slane %v3172, 4
    %v3174 = vadd.f32 %v3172, %v3173
    %v3175 = vrot.slane %v3174, 2
    %v3176 = vadd.f32 %v3174, %v3175
    %v3177 = vrot.slane %v3176, 1
    %v3178 = vadd.f32 %v3176, %v3177
    %v3179 = vsel %vm440, %v2947, 0.0
    %v3180 = vrot.slane %v3179, 4
    %v3181 = vadd.f32 %v3179, %v3180
    %v3182 = vrot.slane %v3181, 2
    %v3183 = vadd.f32 %v3181, %v3182
    %v3184 = vrot.slane %v3183, 1
    %v3185 = vadd.f32 %v3183, %v3184
    %v3186 = vsel %vm440, %v2999, 0.0
    %v3187 = vrot.slane %v3186, 4
    %v3188 = vadd.f32 %v3186, %v3187
    %v3189 = vrot.slane %v3188, 2
    %v3190 = vadd.f32 %v3188, %v3189
    %v3191 = vrot.slane %v3190, 1
    %v3192 = vadd.f32 %v3190, %v3191
    %v3193 = vsel %vm440, %v3051, 0.0
    %v3194 = vrot.slane %v3193, 4
    %v3195 = vadd.f32 %v3193, %v3194
    %v3196 = vrot.slane %v3195, 2
    %v3197 = vadd.f32 %v3195, %v3196
    %v3198 = vrot.slane %v3197, 1
    %v3199 = vadd.f32 %v3197, %v3198
    %v3200 = vsel %vm440, %v3103, 0.0
    %v3201 = vrot.slane %v3200, 4
    %v3202 = vadd.f32 %v3200, %v3201
    %v3203 = vrot.slane %v3202, 2
    %v3204 = vadd.f32 %v3202, %v3203
    %v3205 = vrot.slane %v3204, 1
    %v3206 = vadd.f32 %v3204, %v3205
    %v3207 = vsel %vm440, %v3155, 0.0
    %v3208 = vrot.slane %v3207, 4
    %v3209 = vadd.f32 %v3207, %v3208
    %v3210 = vrot.slane %v3209, 2
    %v3211 = vadd.f32 %v3209, %v3210
    %v3212 = vrot.slane %v3211, 1
    %v3213 = vadd.f32 %v3211, %v3212
    %v3214 = vmul.f32 %v3164, %v461
    %v3215 = vmul.f32 %v3171, %v461
    %v3216 = vmul.f32 %v3178, %v461
    %v3217 = vmul.f32 %v3185, %v461
    %v3218 = vmul.f32 %v3192, %v461
    %v3219 = vmul.f32 %v3199, %v461
    %v3220 = vmul.f32 %v3206, %v461
    %v3221 = vmul.f32 %v3213, %v461
    %v3222 = vsub.f32 %v2791, %v3214
    %v3223 = vsub.f32 %v2843, %v3215
    %v3224 = vsub.f32 %v2895, %v3216
    %v3225 = vsub.f32 %v2947, %v3217
    %v3226 = vsub.f32 %v2999, %v3218
    %v3227 = vsub.f32 %v3051, %v3219
    %v3228 = vsub.f32 %v3103, %v3220
    %v3229 = vsub.f32 %v3155, %v3221
    %v3230 = vmul.f32 %v3222, %v3222
    %v3231 = vmul.f32 %v3223, %v3223
    %v3232 = vmul.f32 %v3224, %v3224
    %v3233 = vmul.f32 %v3225, %v3225
    %v3234 = vmul.f32 %v3226, %v3226
    %v3235 = vmul.f32 %v3227, %v3227
    %v3236 = vmul.f32 %v3228, %v3228
    %v3237 = vmul.f32 %v3229, %v3229
    %v3238 = vsel %vm440, %v3230, 0.0
    %v3239 = vrot.slane %v3238, 4
    %v3240 = vadd.f32 %v3238, %v3239
    %v3241 = vrot.slane %v3240, 2
    %v3242 = vadd.f32 %v3240, %v3241
    %v3243 = vrot.slane %v3242, 1
    %v3244 = vadd.f32 %v3242, %v3243
    %v3245 = vsel %vm440, %v3231, 0.0
    %v3246 = vrot.slane %v3245, 4
    %v3247 = vadd.f32 %v3245, %v3246
    %v3248 = vrot.slane %v3247, 2
    %v3249 = vadd.f32 %v3247, %v3248
    %v3250 = vrot.slane %v3249, 1
    %v3251 = vadd.f32 %v3249, %v3250
    %v3252 = vsel %vm440, %v3232, 0.0
    %v3253 = vrot.slane %v3252, 4
    %v3254 = vadd.f32 %v3252, %v3253
    %v3255 = vrot.slane %v3254, 2
    %v3256 = vadd.f32 %v3254, %v3255
    %v3257 = vrot.slane %v3256, 1
    %v3258 = vadd.f32 %v3256, %v3257
    %v3259 = vsel %vm440, %v3233, 0.0
    %v3260 = vrot.slane %v3259, 4
    %v3261 = vadd.f32 %v3259, %v3260
    %v3262 = vrot.slane %v3261, 2
    %v3263 = vadd.f32 %v3261, %v3262
    %v3264 = vrot.slane %v3263, 1
    %v3265 = vadd.f32 %v3263, %v3264
    %v3266 = vsel %vm440, %v3234, 0.0
    %v3267 = vrot.slane %v3266, 4
    %v3268 = vadd.f32 %v3266, %v3267
    %v3269 = vrot.slane %v3268, 2
    %v3270 = vadd.f32 %v3268, %v3269
    %v3271 = vrot.slane %v3270, 1
    %v3272 = vadd.f32 %v3270, %v3271
    %v3273 = vsel %vm440, %v3235, 0.0
    %v3274 = vrot.slane %v3273, 4
    %v3275 = vadd.f32 %v3273, %v3274
    %v3276 = vrot.slane %v3275, 2
    %v3277 = vadd.f32 %v3275, %v3276
    %v3278 = vrot.slane %v3277, 1
    %v3279 = vadd.f32 %v3277, %v3278
    %v3280 = vsel %vm440, %v3236, 0.0
    %v3281 = vrot.slane %v3280, 4
    %v3282 = vadd.f32 %v3280, %v3281
    %v3283 = vrot.slane %v3282, 2
    %v3284 = vadd.f32 %v3282, %v3283
    %v3285 = vrot.slane %v3284, 1
    %v3286 = vadd.f32 %v3284, %v3285
    %v3287 = vsel %vm440, %v3237, 0.0
    %v3288 = vrot.slane %v3287, 4
    %v3289 = vadd.f32 %v3287, %v3288
    %v3290 = vrot.slane %v3289, 2
    %v3291 = vadd.f32 %v3289, %v3290
    %v3292 = vrot.slane %v3291, 1
    %v3293 = vadd.f32 %v3291, %v3292
    %v3294 = vmul.f32 %v3244, %v461
    %v3295 = vmul.f32 %v3251, %v461
    %v3296 = vmul.f32 %v3258, %v461
    %v3297 = vmul.f32 %v3265, %v461
    %v3298 = vmul.f32 %v3272, %v461
    %v3299 = vmul.f32 %v3279, %v461
    %v3300 = vmul.f32 %v3286, %v461
    %v3301 = vmul.f32 %v3293, %v461
    %v3302 = vadd.f32 %v3294, 0.8
    %v3303 = vadd.f32 %v3295, 0.8
    %v3304 = vadd.f32 %v3296, 0.8
    %v3305 = vadd.f32 %v3297, 0.8
    %v3306 = vadd.f32 %v3298, 0.8
    %v3307 = vadd.f32 %v3299, 0.8
    %v3308 = vadd.f32 %v3300, 0.8
    %v3309 = vadd.f32 %v3301, 0.8
    %v3310 = vrsqrt.pop %v3302
    %v3311 = vmul.f32 %v3310, %v3302
    %v3312 = vmul.f32 %v3311, %v3310
    %v3313 = vmul.f32 0.5, %v3312
    %v3314 = vsub.f32 1.5, %v3313
    %v3315 = vmul.f32 %v3310, %v3314
    %vm3316 = vweird.f32 %v3302
    %vm3317 = vweird.f32 %v3310
    %vm3318 = vmor %vm3316, %vm3317
    %v3319 = vsel %vm3318, %v3310, %v3315
    %v3320 = vrsqrt.pop %v3303
    %v3321 = vmul.f32 %v3320, %v3303
    %v3322 = vmul.f32 %v3321, %v3320
    %v3323 = vmul.f32 0.5, %v3322
    %v3324 = vsub.f32 1.5, %v3323
    %v3325 = vmul.f32 %v3320, %v3324
    %vm3326 = vweird.f32 %v3303
    %vm3327 = vweird.f32 %v3320
    %vm3328 = vmor %vm3326, %vm3327
    %v3329 = vsel %vm3328, %v3320, %v3325
    %v3330 = vrsqrt.pop %v3304
    %v3331 = vmul.f32 %v3330, %v3304
    %v3332 = vmul.f32 %v3331, %v3330
    %v3333 = vmul.f32 0.5, %v3332
    %v3334 = vsub.f32 1.5, %v3333
    %v3335 = vmul.f32 %v3330, %v3334
    %vm3336 = vweird.f32 %v3304
    %vm3337 = vweird.f32 %v3330
    %vm3338 = vmor %vm3336, %vm3337
    %v3339 = vsel %vm3338, %v3330, %v3335
    %v3340 = vrsqrt.pop %v3305
    %v3341 = vmul.f32 %v3340, %v3305
    %v3342 = vmul.f32 %v3341, %v3340
    %v3343 = vmul.f32 0.5, %v3342
    %v3344 = vsub.f32 1.5, %v3343
    %v3345 = vmul.f32 %v3340, %v3344
    %vm3346 = vweird.f32 %v3305
    %vm3347 = vweird.f32 %v3340
    %vm3348 = vmor %vm3346, %vm3347
    %v3349 = vsel %vm3348, %v3340, %v3345
    %v3350 = vrsqrt.pop %v3306
    %v3351 = vmul.f32 %v3350, %v3306
    %v3352 = vmul.f32 %v3351, %v3350
    %v3353 = vmul.f32 0.5, %v3352
    %v3354 = vsub.f32 1.5, %v3353
    %v3355 = vmul.f32 %v3350, %v3354
    %vm3356 = vweird.f32 %v3306
    %vm3357 = vweird.f32 %v3350
    %vm3358 = vmor %vm3356, %vm3357
    %v3359 = vsel %vm3358, %v3350, %v3355
    %v3360 = vrsqrt.pop %v3307
    %v3361 = vmul.f32 %v3360, %v3307
    %v3362 = vmul.f32 %v3361, %v3360
    %v3363 = vmul.f32 0.5, %v3362
    %v3364 = vsub.f32 1.5, %v3363
    %v3365 = vmul.f32 %v3360, %v3364
    %vm3366 = vweird.f32 %v3307
    %vm3367 = vweird.f32 %v3360
    %vm3368 = vmor %vm3366, %vm3367
    %v3369 = vsel %vm3368, %v3360, %v3365
    %v3370 = vrsqrt.pop %v3308
    %v3371 = vmul.f32 %v3370, %v3308
    %v3372 = vmul.f32 %v3371, %v3370
    %v3373 = vmul.f32 0.5, %v3372
    %v3374 = vsub.f32 1.5, %v3373
    %v3375 = vmul.f32 %v3370, %v3374
    %vm3376 = vweird.f32 %v3308
    %vm3377 = vweird.f32 %v3370
    %vm3378 = vmor %vm3376, %vm3377
    %v3379 = vsel %vm3378, %v3370, %v3375
    %v3380 = vrsqrt.pop %v3309
    %v3381 = vmul.f32 %v3380, %v3309
    %v3382 = vmul.f32 %v3381, %v3380
    %v3383 = vmul.f32 0.5, %v3382
    %v3384 = vsub.f32 1.5, %v3383
    %v3385 = vmul.f32 %v3380, %v3384
    %vm3386 = vweird.f32 %v3309
    %vm3387 = vweird.f32 %v3380
    %vm3388 = vmor %vm3386, %vm3387
    %v3389 = vsel %vm3388, %v3380, %v3385
    %v3390 = vmul.f32 %v3222, %v3319
    %v3391 = vmul.f32 %v3223, %v3329
    %v3392 = vmul.f32 %v3224, %v3339
    %v3393 = vmul.f32 %v3225, %v3349
    %v3394 = vmul.f32 %v3226, %v3359
    %v3395 = vmul.f32 %v3227, %v3369
    %v3396 = vmul.f32 %v3228, %v3379
    %v3397 = vmul.f32 %v3229, %v3389
    %v3398 = vld [vmem:[%s13] sm:$0xff]
    %v3400 = vperm.slane %v3398, 0
    %v3401 = vperm.slane %v3398, 1
    %v3402 = vperm.slane %v3398, 2
    %v3403 = vperm.slane %v3398, 3
    %v3404 = vperm.slane %v3398, 4
    %v3405 = vperm.slane %v3398, 5
    %v3406 = vperm.slane %v3398, 6
    %v3407 = vperm.slane %v3398, 7
    %v3416 = vmul.f32 %v3390, %v3400
    %v3417 = vmul.f32 %v3391, %v3401
    %v3418 = vmul.f32 %v3392, %v3402
    %v3419 = vmul.f32 %v3393, %v3403
    %v3420 = vmul.f32 %v3394, %v3404
    %v3421 = vmul.f32 %v3395, %v3405
    %v3422 = vmul.f32 %v3396, %v3406
    %v3423 = vmul.f32 %v3397, %v3407
    %v3424 = vld [vmem:[#allocation21] sm:$0xff]
    %v3426 = vperm.slane %v3424, 0
    %v3427 = vperm.slane %v3424, 1
    %v3428 = vperm.slane %v3424, 2
    %v3429 = vperm.slane %v3424, 3
    %v3430 = vperm.slane %v3424, 4
    %v3431 = vperm.slane %v3424, 5
    %v3432 = vperm.slane %v3424, 6
    %v3433 = vperm.slane %v3424, 7
    %v3442 = vadd.f32 %v3416, %v3426
    %v3443 = vadd.f32 %v3417, %v3427
    %v3444 = vadd.f32 %v3418, %v3428
    %v3445 = vadd.f32 %v3419, %v3429
    %v3446 = vadd.f32 %v3420, %v3430
    %v3447 = vadd.f32 %v3421, %v3431
    %v3448 = vadd.f32 %v3422, %v3432
    %v3449 = vadd.f32 %v3423, %v3433
    %v3450 = vmul.f32 %v3442, 0.2
    %v3451 = vmul.f32 %v3443, 0.2
    %v3452 = vmul.f32 %v3444, 0.2
    %v3453 = vmul.f32 %v3445, 0.2
    %v3454 = vmul.f32 %v3446, 0.2
    %v3455 = vmul.f32 %v3447, 0.2
    %v3456 = vmul.f32 %v3448, 0.2
    %v3457 = vmul.f32 %v3449, 0.2
    %v3458 = vmax.f32 %v3442, %v3450
    %v3459 = vmax.f32 %v3443, %v3451
    %v3460 = vmax.f32 %v3444, %v3452
    %v3461 = vmax.f32 %v3445, %v3453
    %v3462 = vmax.f32 %v3446, %v3454
    %v3463 = vmax.f32 %v3447, %v3455
    %v3464 = vmax.f32 %v3448, %v3456
    %v3465 = vmax.f32 %v3449, %v3457
    %v3466 = vpack.c.bf16 %v3458, %v3458
    %v3467 = vpack.c.bf16 %v3459, %v3459
    %v3468 = vpack.c.bf16 %v3460, %v3460
    %v3469 = vpack.c.bf16 %v3461, %v3461
    %v3470 = vpack.c.bf16 %v3462, %v3462
    %v3471 = vpack.c.bf16 %v3463, %v3463
    %v3472 = vpack.c.bf16 %v3464, %v3464
    %v3473 = vpack.c.bf16 %v3465, %v3465
    %v3474 = vld [vmem:[#allocation22] sm:$0xf]
    %v3475 = vld [vmem:[#allocation22 + $0x4] sm:$0xf]
    %v3476 = vld [vmem:[#allocation22 + $0x8] sm:$0xf]
    %v3477 = vld [vmem:[#allocation22 + $0xc] sm:$0xf]
    %v3478 = vld [vmem:[#allocation22 + $0x10] sm:$0xf]
    %v3479 = vld [vmem:[#allocation22 + $0x14] sm:$0xf]
    %v3480 = vld [vmem:[#allocation22 + $0x18] sm:$0xf]
    %v3481 = vld [vmem:[#allocation22 + $0x1c] sm:$0xf]
    %v3482 = vld [vmem:[#allocation22 + $0x20] sm:$0xf]
    %v3483 = vld [vmem:[#allocation22 + $0x24] sm:$0xf]
    %v3484 = vld [vmem:[#allocation22 + $0x28] sm:$0xf]
    %v3485 = vld [vmem:[#allocation22 + $0x2c] sm:$0xf]
    %v3486 = vld [vmem:[#allocation22 + $0x30] sm:$0xf]
    %v3487 = vld [vmem:[#allocation22 + $0x34] sm:$0xf]
    %v3488 = vld [vmem:[#allocation22 + $0x38] sm:$0xf]
    %v3489 = vld [vmem:[#allocation22 + $0x3c] sm:$0xf]
    %v3490 = vld [vmem:[#allocation22 + $0x40] sm:$0xf]
    %v3491 = vld [vmem:[#allocation22 + $0x44] sm:$0xf]
    %v3492 = vld [vmem:[#allocation22 + $0x48] sm:$0xf]
    %v3493 = vld [vmem:[#allocation22 + $0x4c] sm:$0xf]
    %v3494 = vld [vmem:[#allocation22 + $0x50] sm:$0xf]
    %v3495 = vld [vmem:[#allocation22 + $0x54] sm:$0xf]
    %v3496 = vld [vmem:[#allocation22 + $0x58] sm:$0xf]
    %v3497 = vld [vmem:[#allocation22 + $0x5c] sm:$0xf]
    %v3498 = vld [vmem:[#allocation22 + $0x60] sm:$0xf]
    %v3499 = vld [vmem:[#allocation22 + $0x64] sm:$0xf]
    %v3500 = vld [vmem:[#allocation22 + $0x68] sm:$0xf]
    %v3501 = vld [vmem:[#allocation22 + $0x6c] sm:$0xf]
    %v3502 = vld [vmem:[#allocation22 + $0x70] sm:$0xf]
    %v3503 = vld [vmem:[#allocation22 + $0x74] sm:$0xf]
    %v3504 = vld [vmem:[#allocation22 + $0x78] sm:$0xf]
    %v3505 = vld [vmem:[#allocation22 + $0x7c] sm:$0xf]
    %v3506 = vld [vmem:[#allocation22 + $0x80] sm:$0xf]
    %v3507 = vld [vmem:[#allocation22 + $0x84] sm:$0xf]
    %v3508 = vld [vmem:[#allocation22 + $0x88] sm:$0xf]
    %v3509 = vld [vmem:[#allocation22 + $0x8c] sm:$0xf]
    %v3510 = vld [vmem:[#allocation22 + $0x90] sm:$0xf]
    %v3511 = vld [vmem:[#allocation22 + $0x94] sm:$0xf]
    %v3512 = vld [vmem:[#allocation22 + $0x98] sm:$0xf]
    %v3513 = vld [vmem:[#allocation22 + $0x9c] sm:$0xf]
    %v3514 = vld [vmem:[#allocation22 + $0xa0] sm:$0xf]
    %v3515 = vld [vmem:[#allocation22 + $0xa4] sm:$0xf]
    %v3516 = vld [vmem:[#allocation22 + $0xa8] sm:$0xf]
    %v3517 = vld [vmem:[#allocation22 + $0xac] sm:$0xf]
    %v3518 = vld [vmem:[#allocation22 + $0xb0] sm:$0xf]
    %v3519 = vld [vmem:[#allocation22 + $0xb4] sm:$0xf]
    %v3520 = vld [vmem:[#allocation22 + $0xb8] sm:$0xf]
    %v3521 = vld [vmem:[#allocation22 + $0xbc] sm:$0xf]
    %v3522 = vld [vmem:[#allocation22 + $0xc0] sm:$0xf]
    %v3523 = vld [vmem:[#allocation22 + $0xc4] sm:$0xf]
    %v3524 = vld [vmem:[#allocation22 + $0xc8] sm:$0xf]
    %v3525 = vld [vmem:[#allocation22 + $0xcc] sm:$0xf]
    %v3526 = vld [vmem:[#allocation22 + $0xd0] sm:$0xf]
    %v3527 = vld [vmem:[#allocation22 + $0xd4] sm:$0xf]
    %v3528 = vld [vmem:[#allocation22 + $0xd8] sm:$0xf]
    %v3529 = vld [vmem:[#allocation22 + $0xdc] sm:$0xf]
    %v3530 = vld [vmem:[#allocation22 + $0xe0] sm:$0xf]
    %v3531 = vld [vmem:[#allocation22 + $0xe4] sm:$0xf]
    %v3532 = vld [vmem:[#allocation22 + $0xe8] sm:$0xf]
    %v3533 = vld [vmem:[#allocation22 + $0xec] sm:$0xf]
    %v3534 = vld [vmem:[#allocation22 + $0xf0] sm:$0xf]
    %v3535 = vld [vmem:[#allocation22 + $0xf4] sm:$0xf]
    %v3536 = vld [vmem:[#allocation22 + $0xf8] sm:$0xf]
    %v3537 = vld [vmem:[#allocation22 + $0xfc] sm:$0xf]
    %v3538 = vld [vmem:[#allocation22 + $0x100] sm:$0xf]
    %v3539 = vld [vmem:[#allocation22 + $0x104] sm:$0xf]
    %v3540 = vld [vmem:[#allocation22 + $0x108] sm:$0xf]
    %v3541 = vld [vmem:[#allocation22 + $0x10c] sm:$0xf]
    %v3542 = vld [vmem:[#allocation22 + $0x110] sm:$0xf]
    %v3543 = vld [vmem:[#allocation22 + $0x114] sm:$0xf]
    %v3544 = vld [vmem:[#allocation22 + $0x118] sm:$0xf]
    %v3545 = vld [vmem:[#allocation22 + $0x11c] sm:$0xf]
    %v3546 = vld [vmem:[#allocation22 + $0x120] sm:$0xf]
    %v3547 = vld [vmem:[#allocation22 + $0x124] sm:$0xf]
    %v3548 = vld [vmem:[#allocation22 + $0x128] sm:$0xf]
    %v3549 = vld [vmem:[#allocation22 + $0x12c] sm:$0xf]
    %v3550 = vld [vmem:[#allocation22 + $0x130] sm:$0xf]
    %v3551 = vld [vmem:[#allocation22 + $0x134] sm:$0xf]
    %v3552 = vld [vmem:[#allocation22 + $0x138] sm:$0xf]
    %v3553 = vld [vmem:[#allocation22 + $0x13c] sm:$0xf]
    %v3554 = vld [vmem:[#allocation22 + $0x140] sm:$0xf]
    %v3555 = vld [vmem:[#allocation22 + $0x144] sm:$0xf]
    %v3556 = vld [vmem:[#allocation22 + $0x148] sm:$0xf]
    %v3557 = vld [vmem:[#allocation22 + $0x14c] sm:$0xf]
    %v3558 = vld [vmem:[#allocation22 + $0x150] sm:$0xf]
    %v3559 = vld [vmem:[#allocation22 + $0x154] sm:$0xf]
    %v3560 = vld [vmem:[#allocation22 + $0x158] sm:$0xf]
    %v3561 = vld [vmem:[#allocation22 + $0x15c] sm:$0xf]
    %v3562 = vld [vmem:[#allocation22 + $0x160] sm:$0xf]
    %v3563 = vld [vmem:[#allocation22 + $0x164] sm:$0xf]
    %v3564 = vld [vmem:[#allocation22 + $0x168] sm:$0xf]
    %v3565 = vld [vmem:[#allocation22 + $0x16c] sm:$0xf]
    %v3566 = vld [vmem:[#allocation22 + $0x170] sm:$0xf]
    %v3567 = vld [vmem:[#allocation22 + $0x174] sm:$0xf]
    %v3568 = vld [vmem:[#allocation22 + $0x178] sm:$0xf]
    %v3569 = vld [vmem:[#allocation22 + $0x17c] sm:$0xf]
    %v3570 = vld [vmem:[#allocation22 + $0x180] sm:$0xf]
    %v3571 = vld [vmem:[#allocation22 + $0x184] sm:$0xf]
    %v3572 = vld [vmem:[#allocation22 + $0x188] sm:$0xf]
    %v3573 = vld [vmem:[#allocation22 + $0x18c] sm:$0xf]
    %v3574 = vld [vmem:[#allocation22 + $0x190] sm:$0xf]
    %v3575 = vld [vmem:[#allocation22 + $0x194] sm:$0xf]
    %v3576 = vld [vmem:[#allocation22 + $0x198] sm:$0xf]
    %v3577 = vld [vmem:[#allocation22 + $0x19c] sm:$0xf]
    %v3578 = vld [vmem:[#allocation22 + $0x1a0] sm:$0xf]
    %v3579 = vld [vmem:[#allocation22 + $0x1a4] sm:$0xf]
    %v3580 = vld [vmem:[#allocation22 + $0x1a8] sm:$0xf]
    %v3581 = vld [vmem:[#allocation22 + $0x1ac] sm:$0xf]
    %v3582 = vld [vmem:[#allocation22 + $0x1b0] sm:$0xf]
    %v3583 = vld [vmem:[#allocation22 + $0x1b4] sm:$0xf]
    %v3584 = vld [vmem:[#allocation22 + $0x1b8] sm:$0xf]
    %v3585 = vld [vmem:[#allocation22 + $0x1bc] sm:$0xf]
    %v3586 = vld [vmem:[#allocation22 + $0x1c0] sm:$0xf]
    %v3587 = vld [vmem:[#allocation22 + $0x1c4] sm:$0xf]
    %v3588 = vld [vmem:[#allocation22 + $0x1c8] sm:$0xf]
    %v3589 = vld [vmem:[#allocation22 + $0x1cc] sm:$0xf]
    %v3590 = vld [vmem:[#allocation22 + $0x1d0] sm:$0xf]
    %v3591 = vld [vmem:[#allocation22 + $0x1d4] sm:$0xf]
    %v3592 = vld [vmem:[#allocation22 + $0x1d8] sm:$0xf]
    %v3593 = vld [vmem:[#allocation22 + $0x1dc] sm:$0xf]
    %v3594 = vld [vmem:[#allocation22 + $0x1e0] sm:$0xf]
    %v3595 = vld [vmem:[#allocation22 + $0x1e4] sm:$0xf]
    %v3596 = vld [vmem:[#allocation22 + $0x1e8] sm:$0xf]
    %v3597 = vld [vmem:[#allocation22 + $0x1ec] sm:$0xf]
    %v3598 = vld [vmem:[#allocation22 + $0x1f0] sm:$0xf]
    %v3599 = vld [vmem:[#allocation22 + $0x1f4] sm:$0xf]
    %v3600 = vld [vmem:[#allocation22 + $0x1f8] sm:$0xf]
    %v3601 = vld [vmem:[#allocation22 + $0x1fc] sm:$0xf]
    %v3602 = vld [vmem:[#allocation24] sm:$0x1]
    %v3604 = vperm.slane %v3602, 0
    %v3734 = vunpack.c.l.b16 %v3474
    %v3735 = vunpack.c.l.b16 %v3475
    %v3736 = vunpack.c.l.b16 %v3476
    %v3737 = vunpack.c.l.b16 %v3477
    %v3738 = vunpack.c.l.b16 %v3478
    %v3739 = vunpack.c.l.b16 %v3479
    %v3740 = vunpack.c.l.b16 %v3480
    %v3741 = vunpack.c.l.b16 %v3481
    %v3742 = vunpack.c.l.b16 %v3482
    %v3743 = vunpack.c.l.b16 %v3483
    %v3744 = vunpack.c.l.b16 %v3484
    %v3745 = vunpack.c.l.b16 %v3485
    %v3746 = vunpack.c.l.b16 %v3486
    %v3747 = vunpack.c.l.b16 %v3487
    %v3748 = vunpack.c.l.b16 %v3488
    %v3749 = vunpack.c.l.b16 %v3489
    %v3750 = vunpack.c.l.b16 %v3490
    %v3751 = vunpack.c.l.b16 %v3491
    %v3752 = vunpack.c.l.b16 %v3492
    %v3753 = vunpack.c.l.b16 %v3493
    %v3754 = vunpack.c.l.b16 %v3494
    %v3755 = vunpack.c.l.b16 %v3495
    %v3756 = vunpack.c.l.b16 %v3496
    %v3757 = vunpack.c.l.b16 %v3497
    %v3758 = vunpack.c.l.b16 %v3498
    %v3759 = vunpack.c.l.b16 %v3499
    %v3760 = vunpack.c.l.b16 %v3500
    %v3761 = vunpack.c.l.b16 %v3501
    %v3762 = vunpack.c.l.b16 %v3502
    %v3763 = vunpack.c.l.b16 %v3503
    %v3764 = vunpack.c.l.b16 %v3504
    %v3765 = vunpack.c.l.b16 %v3505
    %v3766 = vunpack.c.l.b16 %v3506
    %v3767 = vunpack.c.l.b16 %v3507
    %v3768 = vunpack.c.l.b16 %v3508
    %v3769 = vunpack.c.l.b16 %v3509
    %v3770 = vunpack.c.l.b16 %v3510
    %v3771 = vunpack.c.l.b16 %v3511
    %v3772 = vunpack.c.l.b16 %v3512
    %v3773 = vunpack.c.l.b16 %v3513
    %v3774 = vunpack.c.l.b16 %v3514
    %v3775 = vunpack.c.l.b16 %v3515
    %v3776 = vunpack.c.l.b16 %v3516
    %v3777 = vunpack.c.l.b16 %v3517
    %v3778 = vunpack.c.l.b16 %v3518
    %v3779 = vunpack.c.l.b16 %v3519
    %v3780 = vunpack.c.l.b16 %v3520
    %v3781 = vunpack.c.l.b16 %v3521
    %v3782 = vunpack.c.l.b16 %v3522
    %v3783 = vunpack.c.l.b16 %v3523
    %v3784 = vunpack.c.l.b16 %v3524
    %v3785 = vunpack.c.l.b16 %v3525
    %v3786 = vunpack.c.l.b16 %v3526
    %v3787 = vunpack.c.l.b16 %v3527
    %v3788 = vunpack.c.l.b16 %v3528
    %v3789 = vunpack.c.l.b16 %v3529
    %v3790 = vunpack.c.l.b16 %v3530
    %v3791 = vunpack.c.l.b16 %v3531
    %v3792 = vunpack.c.l.b16 %v3532
    %v3793 = vunpack.c.l.b16 %v3533
    %v3794 = vunpack.c.l.b16 %v3534
    %v3795 = vunpack.c.l.b16 %v3535
    %v3796 = vunpack.c.l.b16 %v3536
    %v3797 = vunpack.c.l.b16 %v3537
    %v3798 = vunpack.c.l.b16 %v3538
    %v3799 = vunpack.c.l.b16 %v3539
    %v3800 = vunpack.c.l.b16 %v3540
    %v3801 = vunpack.c.l.b16 %v3541
    %v3802 = vunpack.c.l.b16 %v3542
    %v3803 = vunpack.c.l.b16 %v3543
    %v3804 = vunpack.c.l.b16 %v3544
    %v3805 = vunpack.c.l.b16 %v3545
    %v3806 = vunpack.c.l.b16 %v3546
    %v3807 = vunpack.c.l.b16 %v3547
    %v3808 = vunpack.c.l.b16 %v3548
    %v3809 = vunpack.c.l.b16 %v3549
    %v3810 = vunpack.c.l.b16 %v3550
    %v3811 = vunpack.c.l.b16 %v3551
    %v3812 = vunpack.c.l.b16 %v3552
    %v3813 = vunpack.c.l.b16 %v3553
    %v3814 = vunpack.c.l.b16 %v3554
    %v3815 = vunpack.c.l.b16 %v3555
    %v3816 = vunpack.c.l.b16 %v3556
    %v3817 = vunpack.c.l.b16 %v3557
    %v3818 = vunpack.c.l.b16 %v3558
    %v3819 = vunpack.c.l.b16 %v3559
    %v3820 = vunpack.c.l.b16 %v3560
    %v3821 = vunpack.c.l.b16 %v3561
    %v3822 = vunpack.c.l.b16 %v3562
    %v3823 = vunpack.c.l.b16 %v3563
    %v3824 = vunpack.c.l.b16 %v3564
    %v3825 = vunpack.c.l.b16 %v3565
    %v3826 = vunpack.c.l.b16 %v3566
    %v3827 = vunpack.c.l.b16 %v3567
    %v3828 = vunpack.c.l.b16 %v3568
    %v3829 = vunpack.c.l.b16 %v3569
    %v3830 = vunpack.c.l.b16 %v3570
    %v3831 = vunpack.c.l.b16 %v3571
    %v3832 = vunpack.c.l.b16 %v3572
    %v3833 = vunpack.c.l.b16 %v3573
    %v3834 = vunpack.c.l.b16 %v3574
    %v3835 = vunpack.c.l.b16 %v3575
    %v3836 = vunpack.c.l.b16 %v3576
    %v3837 = vunpack.c.l.b16 %v3577
    %v3838 = vunpack.c.l.b16 %v3578
    %v3839 = vunpack.c.l.b16 %v3579
    %v3840 = vunpack.c.l.b16 %v3580
    %v3841 = vunpack.c.l.b16 %v3581
    %v3842 = vunpack.c.l.b16 %v3582
    %v3843 = vunpack.c.l.b16 %v3583
    %v3844 = vunpack.c.l.b16 %v3584
    %v3845 = vunpack.c.l.b16 %v3585
    %v3846 = vunpack.c.l.b16 %v3586
    %v3847 = vunpack.c.l.b16 %v3587
    %v3848 = vunpack.c.l.b16 %v3588
    %v3849 = vunpack.c.l.b16 %v3589
    %v3850 = vunpack.c.l.b16 %v3590
    %v3851 = vunpack.c.l.b16 %v3591
    %v3852 = vunpack.c.l.b16 %v3592
    %v3853 = vunpack.c.l.b16 %v3593
    %v3854 = vunpack.c.l.b16 %v3594
    %v3855 = vunpack.c.l.b16 %v3595
    %v3856 = vunpack.c.l.b16 %v3596
    %v3857 = vunpack.c.l.b16 %v3597
    %v3858 = vunpack.c.l.b16 %v3598
    %v3859 = vunpack.c.l.b16 %v3599
    %v3860 = vunpack.c.l.b16 %v3600
    %v3861 = vunpack.c.l.b16 %v3601
    %v3862 = vpack.c.b16 %v3735, %v3734
    %v3863 = vpack.c.b16 %v3737, %v3736
    %v3864 = vpack.c.b16 %v3739, %v3738
    %v3865 = vpack.c.b16 %v3741, %v3740
    %v3866 = vpack.c.b16 %v3743, %v3742
    %v3867 = vpack.c.b16 %v3745, %v3744
    %v3868 = vpack.c.b16 %v3747, %v3746
    %v3869 = vpack.c.b16 %v3749, %v3748
    %v3870 = vpack.c.b16 %v3751, %v3750
    %v3871 = vpack.c.b16 %v3753, %v3752
    %v3872 = vpack.c.b16 %v3755, %v3754
    %v3873 = vpack.c.b16 %v3757, %v3756
    %v3874 = vpack.c.b16 %v3759, %v3758
    %v3875 = vpack.c.b16 %v3761, %v3760
    %v3876 = vpack.c.b16 %v3763, %v3762
    %v3877 = vpack.c.b16 %v3765, %v3764
    %v3878 = vpack.c.b16 %v3767, %v3766
    %v3879 = vpack.c.b16 %v3769, %v3768
    %v3880 = vpack.c.b16 %v3771, %v3770
    %v3881 = vpack.c.b16 %v3773, %v3772
    %v3882 = vpack.c.b16 %v3775, %v3774
    %v3883 = vpack.c.b16 %v3777, %v3776
    %v3884 = vpack.c.b16 %v3779, %v3778
    %v3885 = vpack.c.b16 %v3781, %v3780
    %v3886 = vpack.c.b16 %v3783, %v3782
    %v3887 = vpack.c.b16 %v3785, %v3784
    %v3888 = vpack.c.b16 %v3787, %v3786
    %v3889 = vpack.c.b16 %v3789, %v3788
    %v3890 = vpack.c.b16 %v3791, %v3790
    %v3891 = vpack.c.b16 %v3793, %v3792
    %v3892 = vpack.c.b16 %v3795, %v3794
    %v3893 = vpack.c.b16 %v3797, %v3796
    %v3894 = vpack.c.b16 %v3799, %v3798
    %v3895 = vpack.c.b16 %v3801, %v3800
    %v3896 = vpack.c.b16 %v3803, %v3802
    %v3897 = vpack.c.b16 %v3805, %v3804
    %v3898 = vpack.c.b16 %v3807, %v3806
    %v3899 = vpack.c.b16 %v3809, %v3808
    %v3900 = vpack.c.b16 %v3811, %v3810
    %v3901 = vpack.c.b16 %v3813, %v3812
    %v3902 = vpack.c.b16 %v3815, %v3814
    %v3903 = vpack.c.b16 %v3817, %v3816
    %v3904 = vpack.c.b16 %v3819, %v3818
    %v3905 = vpack.c.b16 %v3821, %v3820
    %v3906 = vpack.c.b16 %v3823, %v3822
    %v3907 = vpack.c.b16 %v3825, %v3824
    %v3908 = vpack.c.b16 %v3827, %v3826
    %v3909 = vpack.c.b16 %v3829, %v3828
    %v3910 = vpack.c.b16 %v3831, %v3830
    %v3911 = vpack.c.b16 %v3833, %v3832
    %v3912 = vpack.c.b16 %v3835, %v3834
    %v3913 = vpack.c.b16 %v3837, %v3836
    %v3914 = vpack.c.b16 %v3839, %v3838
    %v3915 = vpack.c.b16 %v3841, %v3840
    %v3916 = vpack.c.b16 %v3843, %v3842
    %v3917 = vpack.c.b16 %v3845, %v3844
    %v3918 = vpack.c.b16 %v3847, %v3846
    %v3919 = vpack.c.b16 %v3849, %v3848
    %v3920 = vpack.c.b16 %v3851, %v3850
    %v3921 = vpack.c.b16 %v3853, %v3852
    %v3922 = vpack.c.b16 %v3855, %v3854
    %v3923 = vpack.c.b16 %v3857, %v3856
    %v3924 = vpack.c.b16 %v3859, %v3858
    %v3925 = vpack.c.b16 %v3861, %v3860
    %3990 = vmatpush.bf16.msra.mxu0 %v3869
    %3991 = vmatpush.bf16.msra.mxu0 %v3868
    %3992 = vmatpush.bf16.msra.mxu0 %v3867
    %3993 = vmatpush.bf16.msra.mxu0 %v3866
    %3994 = vmatpush.bf16.msra.mxu0 %v3865
    %3995 = vmatpush.bf16.msra.mxu0 %v3864
    %3996 = vmatpush.bf16.msra.mxu0 %v3863
    %3997 = vmatpush.bf16.msra.mxu0 %v3862
    %3998 = vmatmul.bf16.gmra.mxu0 %v3466
    %v3999 = vpop.f32.mrf.mxu0
    %v4000 = vadd.f32 %v3604, %v3999
    %v4001 = vpop.f32.mrf.mxu0
    %4002 = vdwg.mxu0
    %4003 = vmatpush.bf16.msra.mxu0 %v3877
    %4004 = vmatpush.bf16.msra.mxu0 %v3876
    %4005 = vmatpush.bf16.msra.mxu0 %v3875
    %4006 = vmatpush.bf16.msra.mxu0 %v3874
    %4007 = vmatpush.bf16.msra.mxu0 %v3873
    %4008 = vmatpush.bf16.msra.mxu0 %v3872
    %4009 = vmatpush.bf16.msra.mxu0 %v3871
    %4010 = vmatpush.bf16.msra.mxu0 %v3870
    %4011 = vmatmul.bf16.gmra.mxu0 %v3467
    %v4012 = vpop.f32.mrf.mxu0
    %v4013 = vadd.f32 %v4000, %v4012
    %v4014 = vpop.f32.mrf.mxu0
    %4015 = vdwg.mxu0
    %4016 = vmatpush.bf16.msra.mxu0 %v3885
    %4017 = vmatpush.bf16.msra.mxu0 %v3884
    %4018 = vmatpush.bf16.msra.mxu0 %v3883
    %4019 = vmatpush.bf16.msra.mxu0 %v3882
    %4020 = vmatpush.bf16.msra.mxu0 %v3881
    %4021 = vmatpush.bf16.msra.mxu0 %v3880
    %4022 = vmatpush.bf16.msra.mxu0 %v3879
    %4023 = vmatpush.bf16.msra.mxu0 %v3878
    %4024 = vmatmul.bf16.gmra.mxu0 %v3468
    %v4025 = vpop.f32.mrf.mxu0
    %v4026 = vadd.f32 %v4013, %v4025
    %v4027 = vpop.f32.mrf.mxu0
    %4028 = vdwg.mxu0
    %4029 = vmatpush.bf16.msra.mxu0 %v3893
    %4030 = vmatpush.bf16.msra.mxu0 %v3892
    %4031 = vmatpush.bf16.msra.mxu0 %v3891
    %4032 = vmatpush.bf16.msra.mxu0 %v3890
    %4033 = vmatpush.bf16.msra.mxu0 %v3889
    %4034 = vmatpush.bf16.msra.mxu0 %v3888
    %4035 = vmatpush.bf16.msra.mxu0 %v3887
    %4036 = vmatpush.bf16.msra.mxu0 %v3886
    %4037 = vmatmul.bf16.gmra.mxu0 %v3469
    %v4038 = vpop.f32.mrf.mxu0
    %v4039 = vadd.f32 %v4026, %v4038
    %v4040 = vpop.f32.mrf.mxu0
    %4041 = vdwg.mxu0
    %4042 = vmatpush.bf16.msra.mxu0 %v3901
    %4043 = vmatpush.bf16.msra.mxu0 %v3900
    %4044 = vmatpush.bf16.msra.mxu0 %v3899
    %4045 = vmatpush.bf16.msra.mxu0 %v3898
    %4046 = vmatpush.bf16.msra.mxu0 %v3897
    %4047 = vmatpush.bf16.msra.mxu0 %v3896
    %4048 = vmatpush.bf16.msra.mxu0 %v3895
    %4049 = vmatpush.bf16.msra.mxu0 %v3894
    %4050 = vmatmul.bf16.gmra.mxu0 %v3470
    %v4051 = vpop.f32.mrf.mxu0
    %v4052 = vadd.f32 %v4039, %v4051
    %v4053 = vpop.f32.mrf.mxu0
    %4054 = vdwg.mxu0
    %4055 = vmatpush.bf16.msra.mxu0 %v3909
    %4056 = vmatpush.bf16.msra.mxu0 %v3908
    %4057 = vmatpush.bf16.msra.mxu0 %v3907
    %4058 = vmatpush.bf16.msra.mxu0 %v3906
    %4059 = vmatpush.bf16.msra.mxu0 %v3905
    %4060 = vmatpush.bf16.msra.mxu0 %v3904
    %4061 = vmatpush.bf16.msra.mxu0 %v3903
    %4062 = vmatpush.bf16.msra.mxu0 %v3902
    %4063 = vmatmul.bf16.gmra.mxu0 %v3471
    %v4064 = vpop.f32.mrf.mxu0
    %v4065 = vadd.f32 %v4052, %v4064
    %v4066 = vpop.f32.mrf.mxu0
    %4067 = vdwg.mxu0
    %4068 = vmatpush.bf16.msra.mxu0 %v3917
    %4069 = vmatpush.bf16.msra.mxu0 %v3916
    %4070 = vmatpush.bf16.msra.mxu0 %v3915
    %4071 = vmatpush.bf16.msra.mxu0 %v3914
    %4072 = vmatpush.bf16.msra.mxu0 %v3913
    %4073 = vmatpush.bf16.msra.mxu0 %v3912
    %4074 = vmatpush.bf16.msra.mxu0 %v3911
    %4075 = vmatpush.bf16.msra.mxu0 %v3910
    %4076 = vmatmul.bf16.gmra.mxu0 %v3472
    %v4077 = vpop.f32.mrf.mxu0
    %v4078 = vadd.f32 %v4065, %v4077
    %v4079 = vpop.f32.mrf.mxu0
    %4080 = vdwg.mxu0
    %4081 = vmatpush.bf16.msra.mxu0 %v3925
    %4082 = vmatpush.bf16.msra.mxu0 %v3924
    %4083 = vmatpush.bf16.msra.mxu0 %v3923
    %4084 = vmatpush.bf16.msra.mxu0 %v3922
    %4085 = vmatpush.bf16.msra.mxu0 %v3921
    %4086 = vmatpush.bf16.msra.mxu0 %v3920
    %4087 = vmatpush.bf16.msra.mxu0 %v3919
    %4088 = vmatpush.bf16.msra.mxu0 %v3918
    %4089 = vmatmul.bf16.gmra.mxu0 %v3473
    %v4090 = vpop.f32.mrf.mxu0
    %v4091 = vadd.f32 %v4078, %v4090
    %v4092 = vpop.f32.mrf.mxu0
    %4093 = vdwg.mxu0
    %v4094 = vtanh.pop %v4091
    %4095 = vst [vmem:[%s17] sm:$0x3] %v4094
    // Predicated region
    $region130: #{generator_forward.1} parent=1 // pred_check
      _
    $region131: #{generator_forward.1} parent=1 // pred_check_branch
      %4097 = sbr.rel (0) target = $region133
    $region132: #{generator_forward.1} parent=1 // pred_region
      _
    $region133: #{generator_forward.1} parent=1 // pred_fallthru
      _
    // Predicated region
    $region134: #{generator_forward.1} parent=1 // pred_check
      _
    $region135: #{generator_forward.1} parent=1 // pred_check_branch
      %4099 = sbr.rel (0) target = $region137
    $region136: #{generator_forward.1} parent=1 // pred_region
      _
    $region137: #{generator_forward.1} parent=1 // pred_fallthru
      _
    %4100 = vsyncpa [#allocation3], 1
    %4101 = vsyncpa [#allocation5], 1
    %4102 = vsyncpa [#allocation8], 1
    %4103 = vsyncpa [#allocation11], 1
    %4104 = vsyncpa [#allocation14], 1
    %4105 = vsyncpa [#allocation17], 1
    %4106 = vsyncpa [#allocation20], 1
    %4107 = vsyncpa [#allocation23], 1

</llo_original>
